<compile_context>
chip_gen: v5e
topology: v5e:2x2
jax: 0.10.0
libtpu: 0.0.40
codegen_flags: <defaults>
</compile_context>

<pallas_src>
import functools

import jax
import jax.numpy as jnp
import numpy as np
from jax.experimental import pallas as pl
from jax.experimental.pallas import tpu as pltpu

_TILE_M = 512                      # row tile (pixels) for the matmul kernels
_VMEM_LIMIT = 48 * 1024 * 1024     # < v7x physical 64 MiB, > default scoped limit


# ----------------------------- Pallas kernels -----------------------------

def _linear_affine_relu_kernel(x_ref, w_ref, s_ref, b_ref, o_ref):
    # y = relu((x @ w) * scale + bias)  -- stem (patch-embed conv + folded BN + ReLU)
    acc = jnp.dot(x_ref[...], w_ref[...], preferred_element_type=jnp.float32)
    acc = acc * s_ref[...] + b_ref[...]
    o_ref[...] = jnp.maximum(acc, 0.0).astype(o_ref.dtype)


def _fused_head_kernel(x_ref, w1_ref, s1_ref, b1_ref, w2_ref, b2_ref, o_ref):
    # conv3x3 (im2col matmul) -> folded BN affine -> ReLU -> conv1x1 (matmul) + bias
    h = jnp.dot(x_ref[...], w1_ref[...], preferred_element_type=jnp.float32)
    h = jnp.maximum(h * s1_ref[...] + b1_ref[...], 0.0)
    out = jnp.dot(h.astype(w2_ref.dtype), w2_ref[...],
                  preferred_element_type=jnp.float32) + b2_ref[...]
    o_ref[...] = out.astype(o_ref.dtype)


def _upsample8_kernel(x_ref, uh_ref, uwt_ref, o_ref, *, apply_sigmoid):
    # x8 bilinear upsample of one (Hc, Wc) channel plane as two separable matmuls
    # against static interpolation matrices, optionally fused with sigmoid, written
    # straight into the full-resolution NCHW output (lane-dense W axis).
    x = x_ref[0, 0].astype(jnp.float32)                                # (Hc, Wc)
    t = jnp.dot(uh_ref[...], x, preferred_element_type=jnp.float32)    # (H, Wc)
    y = jnp.dot(t, uwt_ref[...], preferred_element_type=jnp.float32)   # (H, W)
    if apply_sigmoid:
        y = jax.nn.sigmoid(y)
    o_ref[0, 0] = y.astype(o_ref.dtype)


# ----------------------------- Pallas wrappers -----------------------------

def _row_tile(m):
    return m if m <= _TILE_M else _TILE_M


def linear_affine_relu(x, w, s, b, out_dtype=jnp.float32):
    M, K = x.shape
    C = w.shape[1]
    tm = _row_tile(M)
    return pl.pallas_call(
        _linear_affine_relu_kernel,
        out_shape=jax.ShapeDtypeStruct((M, C), out_dtype),
        grid_spec=pltpu.PrefetchScalarGridSpec(
            num_scalar_prefetch=0,
            grid=(pl.cdiv(M, tm),),
            in_specs=[
                pl.BlockSpec((tm, K), lambda i: (i, 0)),   # activations: tiled rows
                pl.BlockSpec((K, C), lambda i: (0, 0)),    # weights: resident
                pl.BlockSpec((1, C), lambda i: (0, 0)),
                pl.BlockSpec((1, C), lambda i: (0, 0)),
            ],
            out_specs=pl.BlockSpec((tm, C), lambda i: (i, 0)),
        ),
        compiler_params=pltpu.CompilerParams(
            dimension_semantics=("parallel",),
            vmem_limit_bytes=_VMEM_LIMIT),
    )(x.astype(jnp.bfloat16), w.astype(jnp.bfloat16),
      s.reshape(1, C).astype(jnp.float32), b.reshape(1, C).astype(jnp.float32))


def fused_head(x, w1, s1, b1, w2, b2, out_dtype=jnp.float32):
    M, K = x.shape
    Ch = w1.shape[1]
    Cout = w2.shape[1]
    tm = _row_tile(M)
    return pl.pallas_call(
        _fused_head_kernel,
        out_shape=jax.ShapeDtypeStruct((M, Cout), out_dtype),
        grid_spec=pltpu.PrefetchScalarGridSpec(
            num_scalar_prefetch=0,
            grid=(pl.cdiv(M, tm),),
            in_specs=[
                pl.BlockSpec((tm, K), lambda i: (i, 0)),   # im2col rows: tiled
                pl.BlockSpec((K, Ch), lambda i: (0, 0)),   # weights: resident
                pl.BlockSpec((1, Ch), lambda i: (0, 0)),
                pl.BlockSpec((1, Ch), lambda i: (0, 0)),
                pl.BlockSpec((Ch, Cout), lambda i: (0, 0)),
                pl.BlockSpec((1, Cout), lambda i: (0, 0)),
            ],
            out_specs=pl.BlockSpec((tm, Cout), lambda i: (i, 0)),
        ),
        compiler_params=pltpu.CompilerParams(
            dimension_semantics=("parallel",),
            vmem_limit_bytes=_VMEM_LIMIT),
    )(x.astype(jnp.bfloat16), w1.astype(jnp.bfloat16),
      s1.reshape(1, Ch).astype(jnp.float32), b1.reshape(1, Ch).astype(jnp.float32),
      w2.astype(jnp.bfloat16), b2.reshape(1, Cout).astype(jnp.float32))


def upsample8(x_small_nchw, uh, uwt, *, apply_sigmoid):
    N, C, Hc, Wc = x_small_nchw.shape
    H, W = uh.shape[0], uwt.shape[1]
    kernel = functools.partial(_upsample8_kernel, apply_sigmoid=apply_sigmoid)
    return pl.pallas_call(
        kernel,
        out_shape=jax.ShapeDtypeStruct((N, C, H, W), jnp.float32),
        grid_spec=pltpu.PrefetchScalarGridSpec(
            num_scalar_prefetch=0,
            grid=(N, C),
            in_specs=[
                pl.BlockSpec((1, 1, Hc, Wc), lambda n, c: (n, c, 0, 0)),
                pl.BlockSpec((H, Hc), lambda n, c: (0, 0)),   # resident interp matrices
                pl.BlockSpec((Wc, W), lambda n, c: (0, 0)),
            ],
            out_specs=pl.BlockSpec((1, 1, H, W), lambda n, c: (n, c, 0, 0)),
        ),
        compiler_params=pltpu.CompilerParams(
            dimension_semantics=("parallel", "arbitrary"),
            vmem_limit_bytes=_VMEM_LIMIT),
    )(x_small_nchw.astype(jnp.float32), uh.astype(jnp.float32), uwt.astype(jnp.float32))


# ----------------------------- JAX glue -----------------------------------

def space_to_depth(x_nchw, patch):
    # stride-8 patch embed == conv8x8/s8 re-expressed as (space-to-depth, matmul)
    N, C, H, W = x_nchw.shape
    x = jnp.transpose(x_nchw, (0, 2, 3, 1))                  # NHWC
    Hc, Wc = H // patch, W // patch
    x = x.reshape(N, Hc, patch, Wc, patch, C)
    x = jnp.transpose(x, (0, 1, 3, 2, 4, 5))                 # N,Hc,Wc,ph,pw,C
    return x.reshape(N, Hc, Wc, patch * patch * C)


def im2col3x3(x_nhwc):
    # 3x3 conv, padding=1, stride=1 -> (N*H*W, 9*C) patch matrix (bf16 to halve HBM)
    # TODO(synk): in-kernel accumulation over the 9 taps would avoid this 9x expansion
    #             entirely; kept XLA-side (in bf16) for simplicity.
    N, H, W, C = x_nhwc.shape
    xp = jnp.pad(x_nhwc, ((0, 0), (1, 1), (1, 1), (0, 0)))
    cols = [xp[:, dy:dy + H, dx:dx + W, :] for dy in range(3) for dx in range(3)]
    return jnp.concatenate(cols, axis=-1).reshape(N * H * W, 9 * C)


def _bilinear_matrix(out_size, in_size):
    # dense interpolation matrix: bilinear, align_corners=False (half-pixel centers)
    scale = in_size / out_size
    m = np.zeros((out_size, in_size), np.float32)
    for o in range(out_size):
        src = (o + 0.5) * scale - 0.5
        i0 = int(np.floor(src))
        frac = src - i0
        lo = min(max(i0, 0), in_size - 1)
        hi = min(max(i0 + 1, 0), in_size - 1)
        m[o, lo] += 1.0 - frac
        m[o, hi] += frac
    return m


def init_params(key, *, c_in, backbone_channels, classification_classes,
                head_channels, localization_classes, patch=8):
    ks = jax.random.split(key, 7)

    def conv_w(k, shape, fan_in):
        return jax.random.normal(k, shape, jnp.float32) / jnp.sqrt(jnp.float32(fan_in))

    def bn_fold(ch, eps=1e-5):
        gamma = jnp.ones((ch,), jnp.float32)
        beta = jnp.zeros((ch,), jnp.float32)
        mean = jnp.zeros((ch,), jnp.float32)
        var = jnp.ones((ch,), jnp.float32)
        s = gamma / jnp.sqrt(var + eps)
        return s, beta - mean * s

    stem_k = patch * patch * c_in
    stem_s, stem_b = bn_fold(backbone_channels)

    def head(k1, k2, cin, ch, cout):
        s1, b1 = bn_fold(ch)
        return dict(w1=conv_w(k1, (3, 3, cin, ch), 9 * cin), s1=s1, b1=b1,
                    w2=conv_w(k2, (ch, cout), ch), b2=jnp.zeros((cout,), jnp.float32))

    classifier = head(ks[1], ks[2], backbone_channels, head_channels,
                      classification_classes)
    cent = head(ks[3], ks[4], classification_classes, head_channels,
                localization_classes)
    reg = head(ks[5], ks[6], classification_classes, head_channels, 2)

    # Fuse the two localization heads (both consume the classifier output):
    # concatenated conv3x3 hidden channels + block-diagonal 1x1 projection.
    ch = head_channels
    kc = 9 * classification_classes
    loc_w1 = jnp.concatenate([cent["w1"].reshape(kc, ch),
                              reg["w1"].reshape(kc, ch)], axis=1)
    loc_s1 = jnp.concatenate([cent["s1"], reg["s1"]])
    loc_b1 = jnp.concatenate([cent["b1"], reg["b1"]])
    loc_w2 = jnp.zeros((2 * ch, localization_classes + 2), jnp.float32)
    loc_w2 = loc_w2.at[:ch, :localization_classes].set(cent["w2"])
    loc_w2 = loc_w2.at[ch:, localization_classes:].set(reg["w2"])
    loc_b2 = jnp.concatenate([cent["b2"], reg["b2"]])

    return dict(
        stem=dict(w=conv_w(ks[0], (stem_k, backbone_channels), stem_k),
                  s=stem_s, b=stem_b),
        classifier=dict(
            w1=classifier["w1"].reshape(9 * backbone_channels, head_channels),
            s1=classifier["s1"], b1=classifier["b1"],
            w2=classifier["w2"], b2=classifier["b2"]),
        locheads=dict(w1=loc_w1, s1=loc_s1, b1=loc_b1, w2=loc_w2, b2=loc_b2),
    )


def localization_forward(x_nchw, params):
    N, _, H, W = x_nchw.shape
    Hc, Wc = H // 8, W // 8

    # ---- backbone (PixelClassificationModel stand-in): stride-8 features ----
    feat = space_to_depth(x_nchw, 8).astype(jnp.bfloat16)         # (N, Hc, Wc, 64*Cin)
    K = feat.shape[-1]
    stem = linear_affine_relu(feat.reshape(N * Hc * Wc, K),
                              params["stem"]["w"], params["stem"]["s"],
                              params["stem"]["b"], out_dtype=jnp.bfloat16)
    Cb = stem.shape[-1]
    stem = stem.reshape(N, Hc, Wc, Cb)

    # ---- classifier head: conv3x3+BN+ReLU+conv1x1 (one tiled matmul chain) ----
    pc = params["classifier"]
    cls = fused_head(im2col3x3(stem), pc["w1"], pc["s1"], pc["b1"],
                     pc["w2"], pc["b2"], out_dtype=jnp.float32)
    num_cls = pc["w2"].shape[1]
    classifier_nhwc = cls.reshape(N, Hc, Wc, num_cls)

    # ---- centerness + regression heads fused into a single matmul chain ----
    ph = params["locheads"]
    loc_cls = ph["w2"].shape[1] - 2
    loc = fused_head(im2col3x3(classifier_nhwc.astype(jnp.bfloat16)),
                     ph["w1"], ph["s1"], ph["b1"], ph["w2"], ph["b2"],
                     out_dtype=jnp.float32)
    loc = jnp.transpose(loc.reshape(N, Hc, Wc, loc_cls + 2), (0, 3, 1, 2))  # small NCHW

    # ---- fused x8 bilinear upsample (+ sigmoid for centerness), NCHW output ----
    # TODO(synk): F.interpolate mode in CenternessHead/RegressionHead not shown;
    #             assuming bilinear, align_corners=False (weights baked into kernel).
    uh = jnp.asarray(_bilinear_matrix(H, Hc))
    uwt = jnp.asarray(_bilinear_matrix(W, Wc).T)
    centerness = upsample8(loc[:, :loc_cls], uh, uwt, apply_sigmoid=True)
    regression = upsample8(loc[:, loc_cls:], uh, uwt, apply_sigmoid=False)

    classifier = jnp.transpose(classifier_nhwc, (0, 3, 1, 2))
    return classifier, centerness, regression


# ----------------------------- driver --------------------------------------

if __name__ == "__main__":
    N, C_IN, H, W = 4, 3, 128, 128      # M = N*(H/8)*(W/8) = 1024 -> 2 row-tiles of 512
    CLASSIFICATION_CLASSES = 8
    LOCALIZATION_CLASSES = 4
    HEAD_CHANNELS = 16
    BACKBONE_CHANNELS = 32              # DDRNet(planes=32) highest-resolution channels

    key = jax.random.PRNGKey(0)
    k_params, k_x = jax.random.split(key)

    params = init_params(
        k_params,
        c_in=C_IN,
        backbone_channels=BACKBONE_CHANNELS,
        classification_classes=CLASSIFICATION_CLASSES,
        head_channels=HEAD_CHANNELS,
        localization_classes=LOCALIZATION_CLASSES,
        patch=8,
    )
    x = jax.random.normal(k_x, (N, C_IN, H, W), jnp.float32)

    fwd = jax.jit(localization_forward)
    classifier, centerness, regression = fwd(x, params)
    jax.block_until_ready((classifier, centerness, regression))

    assert classifier.shape == (N, CLASSIFICATION_CLASSES, H // 8, W // 8)
    assert centerness.shape == (N, LOCALIZATION_CLASSES, H, W)
    assert regression.shape == (N, 2, H, W)
    assert bool(jnp.all(jnp.isfinite(classifier)))
    assert bool(jnp.all((centerness >= 0.0) & (centerness <= 1.0)))
    assert bool(jnp.all(jnp.isfinite(regression)))

    print("KERNEL_OK")
</pallas_src>

<mosaic_0001>
module attributes {stable_mosaic.version = 11 : i64} {
  func.func @_linear_affine_relu_kernel(%arg0: i32, %arg1: memref<512x192xbf16, #tpu.memory_space<vmem>>, %arg2: memref<192x32xbf16, #tpu.memory_space<vmem>>, %arg3: memref<1x32xf32, #tpu.memory_space<vmem>>, %arg4: memref<1x32xf32, #tpu.memory_space<vmem>>, %arg5: memref<512x32xbf16, #tpu.memory_space<vmem>>) attributes {dimension_semantics = [#tpu.dimension_semantics<parallel>], iteration_bounds = array<i64: 2>, scalar_prefetch = 0 : i64, scratch_operands = 0 : i64, tpu.core_type = #tpu.core_type<tc>, window_params = [{transform_indices = @transform_0, window_bounds = array<i64: 512, 192>}, {pipeline_mode = #tpu.pipeline_mode<synchronous>, transform_indices = @transform_1, window_bounds = array<i64: 192, 32>}, {pipeline_mode = #tpu.pipeline_mode<synchronous>, transform_indices = @transform_2, window_bounds = array<i64: 1, 32>}, {pipeline_mode = #tpu.pipeline_mode<synchronous>, transform_indices = @transform_3, window_bounds = array<i64: 1, 32>}, {transform_indices = @transform_4, window_bounds = array<i64: 512, 32>}]} {
    %c0 = arith.constant 0 : index
    %c0_0 = arith.constant 0 : index
    %0 = vector.load %arg1[%c0, %c0_0] : memref<512x192xbf16, #tpu.memory_space<vmem>>, vector<512x192xbf16>
    %c0_1 = arith.constant 0 : index
    %c0_2 = arith.constant 0 : index
    %1 = vector.load %arg2[%c0_1, %c0_2] : memref<192x32xbf16, #tpu.memory_space<vmem>>, vector<192x32xbf16>
    %cst = arith.constant dense<0.000000e+00> : vector<512x32xf32>
    %2 = tpu.matmul %0, %1, %cst {dimension_numbers = #tpu.dot_dimension_numbers<[1], [0], [0], [1], [0, 0, 1, 1], [], []>} : vector<512x192xbf16>, vector<192x32xbf16>, vector<512x32xf32> -> vector<512x32xf32>
    %c0_3 = arith.constant 0 : index
    %c0_4 = arith.constant 0 : index
    %3 = vector.load %arg3[%c0_3, %c0_4] : memref<1x32xf32, #tpu.memory_space<vmem>>, vector<1x32xf32>
    %4 = vector.broadcast %3 : vector<1x32xf32> to vector<512x32xf32>
    %5 = arith.mulf %2, %4 : vector<512x32xf32>
    %c0_5 = arith.constant 0 : index
    %c0_6 = arith.constant 0 : index
    %6 = vector.load %arg4[%c0_5, %c0_6] : memref<1x32xf32, #tpu.memory_space<vmem>>, vector<1x32xf32>
    %7 = vector.broadcast %6 : vector<1x32xf32> to vector<512x32xf32>
    %8 = arith.addf %5, %7 : vector<512x32xf32>
    %cst_7 = arith.constant 0.000000e+00 : f32
    %9 = vector.broadcast %cst_7 : f32 to vector<512x32xf32>
    %10 = arith.maximumf %8, %9 : vector<512x32xf32>
    %11 = arith.truncf %10 : vector<512x32xf32> to vector<512x32xbf16>
    %c0_8 = arith.constant 0 : index
    %c0_9 = arith.constant 0 : index
    %12 = vector.load %arg5[%c0_8, %c0_9] : memref<512x32xbf16, #tpu.memory_space<vmem>>, vector<512x32xbf16>
    tpu.vector_store %arg5[%c0_8, %c0_9], %11 {strides = array<i32>} : memref<512x32xbf16, #tpu.memory_space<vmem>>, vector<512x32xbf16>,
    return
  }
  func.func @transform_0(%arg0: i32) -> (i32, i32) {
    %c0_i32 = arith.constant 0 : i32
    %c0_i32_0 = arith.constant 0 : i32
    return %arg0, %c0_i32 : i32, i32
  }
  func.func @transform_1(%arg0: i32) -> (i32, i32) {
    %c0_i32 = arith.constant 0 : i32
    %c0_i32_0 = arith.constant 0 : i32
    %c0_i32_1 = arith.constant 0 : i32
    return %c0_i32, %c0_i32_0 : i32, i32
  }
  func.func @transform_2(%arg0: i32) -> (i32, i32) {
    %c0_i32 = arith.constant 0 : i32
    %c0_i32_0 = arith.constant 0 : i32
    %c0_i32_1 = arith.constant 0 : i32
    return %c0_i32, %c0_i32_0 : i32, i32
  }
  func.func @transform_3(%arg0: i32) -> (i32, i32) {
    %c0_i32 = arith.constant 0 : i32
    %c0_i32_0 = arith.constant 0 : i32
    %c0_i32_1 = arith.constant 0 : i32
    return %c0_i32, %c0_i32_0 : i32, i32
  }
  func.func @transform_4(%arg0: i32) -> (i32, i32) {
    %c0_i32 = arith.constant 0 : i32
    %c0_i32_0 = arith.constant 0 : i32
    return %arg0, %c0_i32 : i32, i32
  }
}

module attributes {stable_mosaic.version = 11 : i64} {
  func.func @_fused_head_kernel(%arg0: i32, %arg1: memref<512x288xbf16, #tpu.memory_space<vmem>>, %arg2: memref<288x16xbf16, #tpu.memory_space<vmem>>, %arg3: memref<1x16xf32, #tpu.memory_space<vmem>>, %arg4: memref<1x16xf32, #tpu.memory_space<vmem>>, %arg5: memref<16x8xbf16, #tpu.memory_space<vmem>>, %arg6: memref<1x8xf32, #tpu.memory_space<vmem>>, %arg7: memref<512x8xf32, #tpu.memory_space<vmem>>) attributes {dimension_semantics = [#tpu.dimension_semantics<parallel>], iteration_bounds = array<i64: 2>, scalar_prefetch = 0 : i64, scratch_operands = 0 : i64, tpu.core_type = #tpu.core_type<tc>, window_params = [{transform_indices = @transform_0, window_bounds = array<i64: 512, 288>}, {pipeline_mode = #tpu.pipeline_mode<synchronous>, transform_indices = @transform_1, window_bounds = array<i64: 288, 16>}, {pipeline_mode = #tpu.pipeline_mode<synchronous>, transform_indices = @transform_2, window_bounds = array<i64: 1, 16>}, {pipeline_mode = #tpu.pipeline_mode<synchronous>, transform_indices = @transform_3, window_bounds = array<i64: 1, 16>}, {pipeline_mode = #tpu.pipeline_mode<synchronous>, transform_indices = @transform_4, window_bounds = array<i64: 16, 8>}, {pipeline_mode = #tpu.pipeline_mode<synchronous>, transform_indices = @transform_5, window_bounds = array<i64: 1, 8>}, {transform_indices = @transform_6, window_bounds = array<i64: 512, 8>}]} {
    %c0 = arith.constant 0 : index
    %c0_0 = arith.constant 0 : index
    %0 = vector.load %arg1[%c0, %c0_0] : memref<512x288xbf16, #tpu.memory_space<vmem>>, vector<512x288xbf16>
    %c0_1 = arith.constant 0 : index
    %c0_2 = arith.constant 0 : index
    %1 = vector.load %arg2[%c0_1, %c0_2] : memref<288x16xbf16, #tpu.memory_space<vmem>>, vector<288x16xbf16>
    %cst = arith.constant dense<0.000000e+00> : vector<512x16xf32>
    %2 = tpu.matmul %0, %1, %cst {dimension_numbers = #tpu.dot_dimension_numbers<[1], [0], [0], [1], [0, 0, 1, 1], [], []>} : vector<512x288xbf16>, vector<288x16xbf16>, vector<512x16xf32> -> vector<512x16xf32>
    %c0_3 = arith.constant 0 : index
    %c0_4 = arith.constant 0 : index
    %3 = vector.load %arg3[%c0_3, %c0_4] : memref<1x16xf32, #tpu.memory_space<vmem>>, vector<1x16xf32>
    %4 = vector.broadcast %3 : vector<1x16xf32> to vector<512x16xf32>
    %5 = arith.mulf %2, %4 : vector<512x16xf32>
    %c0_5 = arith.constant 0 : index
    %c0_6 = arith.constant 0 : index
    %6 = vector.load %arg4[%c0_5, %c0_6] : memref<1x16xf32, #tpu.memory_space<vmem>>, vector<1x16xf32>
    %7 = vector.broadcast %6 : vector<1x16xf32> to vector<512x16xf32>
    %8 = arith.addf %5, %7 : vector<512x16xf32>
    %cst_7 = arith.constant 0.000000e+00 : f32
    %9 = vector.broadcast %cst_7 : f32 to vector<512x16xf32>
    %10 = arith.maximumf %8, %9 : vector<512x16xf32>
    %11 = arith.truncf %10 : vector<512x16xf32> to vector<512x16xbf16>
    %c0_8 = arith.constant 0 : index
    %c0_9 = arith.constant 0 : index
    %12 = vector.load %arg5[%c0_8, %c0_9] : memref<16x8xbf16, #tpu.memory_space<vmem>>, vector<16x8xbf16>
    %cst_10 = arith.constant dense<0.000000e+00> : vector<512x8xf32>
    %13 = tpu.matmul %11, %12, %cst_10 {dimension_numbers = #tpu.dot_dimension_numbers<[1], [0], [0], [1], [0, 0, 1, 1], [], []>} : vector<512x16xbf16>, vector<16x8xbf16>, vector<512x8xf32> -> vector<512x8xf32>
    %c0_11 = arith.constant 0 : index
    %c0_12 = arith.constant 0 : index
    %14 = vector.load %arg6[%c0_11, %c0_12] : memref<1x8xf32, #tpu.memory_space<vmem>>, vector<1x8xf32>
    %15 = vector.broadcast %14 : vector<1x8xf32> to vector<512x8xf32>
    %16 = arith.addf %13, %15 : vector<512x8xf32>
    %c0_13 = arith.constant 0 : index
    %c0_14 = arith.constant 0 : index
    %17 = vector.load %arg7[%c0_13, %c0_14] : memref<512x8xf32, #tpu.memory_space<vmem>>, vector<512x8xf32>
    tpu.vector_store %arg7[%c0_13, %c0_14], %16 {strides = array<i32>} : memref<512x8xf32, #tpu.memory_space<vmem>>, vector<512x8xf32>,
    return
  }
  func.func @transform_0(%arg0: i32) -> (i32, i32) {
    %c0_i32 = arith.constant 0 : i32
    %c0_i32_0 = arith.constant 0 : i32
    return %arg0, %c0_i32 : i32, i32
  }
  func.func @transform_1(%arg0: i32) -> (i32, i32) {
    %c0_i32 = arith.constant 0 : i32
    %c0_i32_0 = arith.constant 0 : i32
    %c0_i32_1 = arith.constant 0 : i32
    return %c0_i32, %c0_i32_0 : i32, i32
  }
  func.func @transform_2(%arg0: i32) -> (i32, i32) {
    %c0_i32 = arith.constant 0 : i32
    %c0_i32_0 = arith.constant 0 : i32
    %c0_i32_1 = arith.constant 0 : i32
    return %c0_i32, %c0_i32_0 : i32, i32
  }
  func.func @transform_3(%arg0: i32) -> (i32, i32) {
    %c0_i32 = arith.constant 0 : i32
    %c0_i32_0 = arith.constant 0 : i32
    %c0_i32_1 = arith.constant 0 : i32
    return %c0_i32, %c0_i32_0 : i32, i32
  }
  func.func @transform_4(%arg0: i32) -> (i32, i32) {
    %c0_i32 = arith.constant 0 : i32
    %c0_i32_0 = arith.constant 0 : i32
    %c0_i32_1 = arith.constant 0 : i32
    return %c0_i32, %c0_i32_0 : i32, i32
  }
  func.func @transform_5(%arg0: i32) -> (i32, i32) {
    %c0_i32 = arith.constant 0 : i32
    %c0_i32_0 = arith.constant 0 : i32
    %c0_i32_1 = arith.constant 0 : i32
    return %c0_i32, %c0_i32_0 : i32, i32
  }
  func.func @transform_6(%arg0: i32) -> (i32, i32) {
    %c0_i32 = arith.constant 0 : i32
    %c0_i32_0 = arith.constant 0 : i32
    return %arg0, %c0_i32 : i32, i32
  }
}

module attributes {stable_mosaic.version = 11 : i64} {
  func.func @_fused_head_kernel(%arg0: i32, %arg1: memref<512x72xbf16, #tpu.memory_space<vmem>>, %arg2: memref<72x32xbf16, #tpu.memory_space<vmem>>, %arg3: memref<1x32xf32, #tpu.memory_space<vmem>>, %arg4: memref<1x32xf32, #tpu.memory_space<vmem>>, %arg5: memref<32x6xbf16, #tpu.memory_space<vmem>>, %arg6: memref<1x6xf32, #tpu.memory_space<vmem>>, %arg7: memref<512x6xf32, #tpu.memory_space<vmem>>) attributes {dimension_semantics = [#tpu.dimension_semantics<parallel>], iteration_bounds = array<i64: 2>, scalar_prefetch = 0 : i64, scratch_operands = 0 : i64, tpu.core_type = #tpu.core_type<tc>, window_params = [{transform_indices = @transform_0, window_bounds = array<i64: 512, 72>}, {pipeline_mode = #tpu.pipeline_mode<synchronous>, transform_indices = @transform_1, window_bounds = array<i64: 72, 32>}, {pipeline_mode = #tpu.pipeline_mode<synchronous>, transform_indices = @transform_2, window_bounds = array<i64: 1, 32>}, {pipeline_mode = #tpu.pipeline_mode<synchronous>, transform_indices = @transform_3, window_bounds = array<i64: 1, 32>}, {pipeline_mode = #tpu.pipeline_mode<synchronous>, transform_indices = @transform_4, window_bounds = array<i64: 32, 6>}, {pipeline_mode = #tpu.pipeline_mode<synchronous>, transform_indices = @transform_5, window_bounds = array<i64: 1, 6>}, {transform_indices = @transform_6, window_bounds = array<i64: 512, 6>}]} {
    %c0 = arith.constant 0 : index
    %c0_0 = arith.constant 0 : index
    %0 = vector.load %arg1[%c0, %c0_0] : memref<512x72xbf16, #tpu.memory_space<vmem>>, vector<512x72xbf16>
    %c0_1 = arith.constant 0 : index
    %c0_2 = arith.constant 0 : index
    %1 = vector.load %arg2[%c0_1, %c0_2] : memref<72x32xbf16, #tpu.memory_space<vmem>>, vector<72x32xbf16>
    %cst = arith.constant dense<0.000000e+00> : vector<512x32xf32>
    %2 = tpu.matmul %0, %1, %cst {dimension_numbers = #tpu.dot_dimension_numbers<[1], [0], [0], [1], [0, 0, 1, 1], [], []>} : vector<512x72xbf16>, vector<72x32xbf16>, vector<512x32xf32> -> vector<512x32xf32>
    %c0_3 = arith.constant 0 : index
    %c0_4 = arith.constant 0 : index
    %3 = vector.load %arg3[%c0_3, %c0_4] : memref<1x32xf32, #tpu.memory_space<vmem>>, vector<1x32xf32>
    %4 = vector.broadcast %3 : vector<1x32xf32> to vector<512x32xf32>
    %5 = arith.mulf %2, %4 : vector<512x32xf32>
    %c0_5 = arith.constant 0 : index
    %c0_6 = arith.constant 0 : index
    %6 = vector.load %arg4[%c0_5, %c0_6] : memref<1x32xf32, #tpu.memory_space<vmem>>, vector<1x32xf32>
    %7 = vector.broadcast %6 : vector<1x32xf32> to vector<512x32xf32>
    %8 = arith.addf %5, %7 : vector<512x32xf32>
    %cst_7 = arith.constant 0.000000e+00 : f32
    %9 = vector.broadcast %cst_7 : f32 to vector<512x32xf32>
    %10 = arith.maximumf %8, %9 : vector<512x32xf32>
    %11 = arith.truncf %10 : vector<512x32xf32> to vector<512x32xbf16>
    %c0_8 = arith.constant 0 : index
    %c0_9 = arith.constant 0 : index
    %12 = vector.load %arg5[%c0_8, %c0_9] : memref<32x6xbf16, #tpu.memory_space<vmem>>, vector<32x6xbf16>
    %cst_10 = arith.constant dense<0.000000e+00> : vector<512x6xf32>
    %13 = tpu.matmul %11, %12, %cst_10 {dimension_numbers = #tpu.dot_dimension_numbers<[1], [0], [0], [1], [0, 0, 1, 1], [], []>} : vector<512x32xbf16>, vector<32x6xbf16>, vector<512x6xf32> -> vector<512x6xf32>
    %c0_11 = arith.constant 0 : index
    %c0_12 = arith.constant 0 : index
    %14 = vector.load %arg6[%c0_11, %c0_12] : memref<1x6xf32, #tpu.memory_space<vmem>>, vector<1x6xf32>
    %15 = vector.broadcast %14 : vector<1x6xf32> to vector<512x6xf32>
    %16 = arith.addf %13, %15 : vector<512x6xf32>
    %c0_13 = arith.constant 0 : index
    %c0_14 = arith.constant 0 : index
    %17 = vector.load %arg7[%c0_13, %c0_14] : memref<512x6xf32, #tpu.memory_space<vmem>>, vector<512x6xf32>
    tpu.vector_store %arg7[%c0_13, %c0_14], %16 {strides = array<i32>} : memref<512x6xf32, #tpu.memory_space<vmem>>, vector<512x6xf32>,
    return
  }
  func.func @transform_0(%arg0: i32) -> (i32, i32) {
    %c0_i32 = arith.constant 0 : i32
    %c0_i32_0 = arith.constant 0 : i32
    return %arg0, %c0_i32 : i32, i32
  }
  func.func @transform_1(%arg0: i32) -> (i32, i32) {
    %c0_i32 = arith.constant 0 : i32
    %c0_i32_0 = arith.constant 0 : i32
    %c0_i32_1 = arith.constant 0 : i32
    return %c0_i32, %c0_i32_0 : i32, i32
  }
  func.func @transform_2(%arg0: i32) -> (i32, i32) {
    %c0_i32 = arith.constant 0 : i32
    %c0_i32_0 = arith.constant 0 : i32
    %c0_i32_1 = arith.constant 0 : i32
    return %c0_i32, %c0_i32_0 : i32, i32
  }
  func.func @transform_3(%arg0: i32) -> (i32, i32) {
    %c0_i32 = arith.constant 0 : i32
    %c0_i32_0 = arith.constant 0 : i32
    %c0_i32_1 = arith.constant 0 : i32
    return %c0_i32, %c0_i32_0 : i32, i32
  }
  func.func @transform_4(%arg0: i32) -> (i32, i32) {
    %c0_i32 = arith.constant 0 : i32
    %c0_i32_0 = arith.constant 0 : i32
    %c0_i32_1 = arith.constant 0 : i32
    return %c0_i32, %c0_i32_0 : i32, i32
  }
  func.func @transform_5(%arg0: i32) -> (i32, i32) {
    %c0_i32 = arith.constant 0 : i32
    %c0_i32_0 = arith.constant 0 : i32
    %c0_i32_1 = arith.constant 0 : i32
    return %c0_i32, %c0_i32_0 : i32, i32
  }
  func.func @transform_6(%arg0: i32) -> (i32, i32) {
    %c0_i32 = arith.constant 0 : i32
    %c0_i32_0 = arith.constant 0 : i32
    return %arg0, %c0_i32 : i32, i32
  }
}

module attributes {stable_mosaic.version = 11 : i64} {
  func.func @_upsample8_kernel(%arg0: i32, %arg1: i32, %arg2: memref<1x1x16x16xf32, #tpu.memory_space<vmem>>, %arg3: memref<128x16xf32, #tpu.memory_space<vmem>>, %arg4: memref<16x128xf32, #tpu.memory_space<vmem>>, %arg5: memref<1x1x128x128xf32, #tpu.memory_space<vmem>>) attributes {dimension_semantics = [#tpu.dimension_semantics<parallel>, #tpu.dimension_semantics<arbitrary>], iteration_bounds = array<i64: 4, 4>, scalar_prefetch = 0 : i64, scratch_operands = 0 : i64, tpu.core_type = #tpu.core_type<tc>, window_params = [{transform_indices = @transform_0, window_bounds = array<i64: 1, 1, 16, 16>}, {pipeline_mode = #tpu.pipeline_mode<synchronous>, transform_indices = @transform_1, window_bounds = array<i64: 128, 16>}, {pipeline_mode = #tpu.pipeline_mode<synchronous>, transform_indices = @transform_2, window_bounds = array<i64: 16, 128>}, {transform_indices = @transform_3, window_bounds = array<i64: 1, 1, 128, 128>}]} {
    %c0 = arith.constant 0 : index
    %c0_0 = arith.constant 0 : index
    %c0_1 = arith.constant 0 : index
    %c0_2 = arith.constant 0 : index
    %0 = vector.load %arg2[%c0, %c0_0, %c0_1, %c0_2] : memref<1x1x16x16xf32, #tpu.memory_space<vmem>>, vector<1x1x16x16xf32>
    %1 = vector.shape_cast %0 : vector<1x1x16x16xf32> to vector<16x16xf32>
    %c0_3 = arith.constant 0 : index
    %c0_4 = arith.constant 0 : index
    %2 = vector.load %arg3[%c0_3, %c0_4] : memref<128x16xf32, #tpu.memory_space<vmem>>, vector<128x16xf32>
    %cst = arith.constant dense<0.000000e+00> : vector<128x16xf32>
    %3 = tpu.matmul %2, %1, %cst {dimension_numbers = #tpu.dot_dimension_numbers<[1], [0], [0], [1], [0, 0, 1, 1], [], []>} : vector<128x16xf32>, vector<16x16xf32>, vector<128x16xf32> -> vector<128x16xf32>
    %c0_5 = arith.constant 0 : index
    %c0_6 = arith.constant 0 : index
    %4 = vector.load %arg4[%c0_5, %c0_6] : memref<16x128xf32, #tpu.memory_space<vmem>>, vector<16x128xf32>
    %cst_7 = arith.constant dense<0.000000e+00> : vector<128x128xf32>
    %5 = tpu.matmul %3, %4, %cst_7 {dimension_numbers = #tpu.dot_dimension_numbers<[1], [0], [0], [1], [0, 0, 1, 1], [], []>} : vector<128x16xf32>, vector<16x128xf32>, vector<128x128xf32> -> vector<128x128xf32>
    %6 = arith.negf %5 : vector<128x128xf32>
    %7 = math.exp %6 : vector<128x128xf32>
    %cst_8 = arith.constant 1.000000e+00 : f32
    %8 = vector.broadcast %cst_8 : f32 to vector<128x128xf32>
    %9 = arith.addf %8, %7 : vector<128x128xf32>
    %10 = arith.divf %8, %9 : vector<128x128xf32>
    %c0_9 = arith.constant 0 : index
    %c0_10 = arith.constant 0 : index
    %c0_11 = arith.constant 0 : index
    %c0_12 = arith.constant 0 : index
    %11 = vector.load %arg5[%c0_9, %c0_10, %c0_11, %c0_12] : memref<1x1x128x128xf32, #tpu.memory_space<vmem>>, vector<1x1x128x128xf32>
    %12 = vector.shape_cast %11 : vector<1x1x128x128xf32> to vector<128x128xf32>
    %13 = vector.shape_cast %10 : vector<128x128xf32> to vector<1x1x128x128xf32>
    tpu.vector_store %arg5[%c0_9, %c0_10, %c0_11, %c0_12], %13 {strides = array<i32>} : memref<1x1x128x128xf32, #tpu.memory_space<vmem>>, vector<1x1x128x128xf32>,
    return
  }
  func.func @transform_0(%arg0: i32, %arg1: i32) -> (i32, i32, i32, i32) {
    %c0_i32 = arith.constant 0 : i32
    %c0_i32_0 = arith.constant 0 : i32
    %c0_i32_1 = arith.constant 0 : i32
    return %arg0, %arg1, %c0_i32, %c0_i32_0 : i32, i32, i32, i32
  }
  func.func @transform_1(%arg0: i32, %arg1: i32) -> (i32, i32) {
    %c0_i32 = arith.constant 0 : i32
    %c0_i32_0 = arith.constant 0 : i32
    %c0_i32_1 = arith.constant 0 : i32
    return %c0_i32, %c0_i32_0 : i32, i32
  }
  func.func @transform_2(%arg0: i32, %arg1: i32) -> (i32, i32) {
    %c0_i32 = arith.constant 0 : i32
    %c0_i32_0 = arith.constant 0 : i32
    %c0_i32_1 = arith.constant 0 : i32
    return %c0_i32, %c0_i32_0 : i32, i32
  }
  func.func @transform_3(%arg0: i32, %arg1: i32) -> (i32, i32, i32, i32) {
    %c0_i32 = arith.constant 0 : i32
    %c0_i32_0 = arith.constant 0 : i32
    %c0_i32_1 = arith.constant 0 : i32
    return %arg0, %arg1, %c0_i32, %c0_i32_0 : i32, i32, i32, i32
  }
}

module attributes {stable_mosaic.version = 11 : i64} {
  func.func @_upsample8_kernel(%arg0: i32, %arg1: i32, %arg2: memref<1x1x16x16xf32, #tpu.memory_space<vmem>>, %arg3: memref<128x16xf32, #tpu.memory_space<vmem>>, %arg4: memref<16x128xf32, #tpu.memory_space<vmem>>, %arg5: memref<1x1x128x128xf32, #tpu.memory_space<vmem>>) attributes {dimension_semantics = [#tpu.dimension_semantics<parallel>, #tpu.dimension_semantics<arbitrary>], iteration_bounds = array<i64: 4, 2>, scalar_prefetch = 0 : i64, scratch_operands = 0 : i64, tpu.core_type = #tpu.core_type<tc>, window_params = [{transform_indices = @transform_0, window_bounds = array<i64: 1, 1, 16, 16>}, {pipeline_mode = #tpu.pipeline_mode<synchronous>, transform_indices = @transform_1, window_bounds = array<i64: 128, 16>}, {pipeline_mode = #tpu.pipeline_mode<synchronous>, transform_indices = @transform_2, window_bounds = array<i64: 16, 128>}, {transform_indices = @transform_3, window_bounds = array<i64: 1, 1, 128, 128>}]} {
    %c0 = arith.constant 0 : index
    %c0_0 = arith.constant 0 : index
    %c0_1 = arith.constant 0 : index
    %c0_2 = arith.constant 0 : index
    %0 = vector.load %arg2[%c0, %c0_0, %c0_1, %c0_2] : memref<1x1x16x16xf32, #tpu.memory_space<vmem>>, vector<1x1x16x16xf32>
    %1 = vector.shape_cast %0 : vector<1x1x16x16xf32> to vector<16x16xf32>
    %c0_3 = arith.constant 0 : index
    %c0_4 = arith.constant 0 : index
    %2 = vector.load %arg3[%c0_3, %c0_4] : memref<128x16xf32, #tpu.memory_space<vmem>>, vector<128x16xf32>
    %cst = arith.constant dense<0.000000e+00> : vector<128x16xf32>
    %3 = tpu.matmul %2, %1, %cst {dimension_numbers = #tpu.dot_dimension_numbers<[1], [0], [0], [1], [0, 0, 1, 1], [], []>} : vector<128x16xf32>, vector<16x16xf32>, vector<128x16xf32> -> vector<128x16xf32>
    %c0_5 = arith.constant 0 : index
    %c0_6 = arith.constant 0 : index
    %4 = vector.load %arg4[%c0_5, %c0_6] : memref<16x128xf32, #tpu.memory_space<vmem>>, vector<16x128xf32>
    %cst_7 = arith.constant dense<0.000000e+00> : vector<128x128xf32>
    %5 = tpu.matmul %3, %4, %cst_7 {dimension_numbers = #tpu.dot_dimension_numbers<[1], [0], [0], [1], [0, 0, 1, 1], [], []>} : vector<128x16xf32>, vector<16x128xf32>, vector<128x128xf32> -> vector<128x128xf32>
    %c0_8 = arith.constant 0 : index
    %c0_9 = arith.constant 0 : index
    %c0_10 = arith.constant 0 : index
    %c0_11 = arith.constant 0 : index
    %6 = vector.load %arg5[%c0_8, %c0_9, %c0_10, %c0_11] : memref<1x1x128x128xf32, #tpu.memory_space<vmem>>, vector<1x1x128x128xf32>
    %7 = vector.shape_cast %6 : vector<1x1x128x128xf32> to vector<128x128xf32>
    %8 = vector.shape_cast %5 : vector<128x128xf32> to vector<1x1x128x128xf32>
    tpu.vector_store %arg5[%c0_8, %c0_9, %c0_10, %c0_11], %8 {strides = array<i32>} : memref<1x1x128x128xf32, #tpu.memory_space<vmem>>, vector<1x1x128x128xf32>,
    return
  }
  func.func @transform_0(%arg0: i32, %arg1: i32) -> (i32, i32, i32, i32) {
    %c0_i32 = arith.constant 0 : i32
    %c0_i32_0 = arith.constant 0 : i32
    %c0_i32_1 = arith.constant 0 : i32
    return %arg0, %arg1, %c0_i32, %c0_i32_0 : i32, i32, i32, i32
  }
  func.func @transform_1(%arg0: i32, %arg1: i32) -> (i32, i32) {
    %c0_i32 = arith.constant 0 : i32
    %c0_i32_0 = arith.constant 0 : i32
    %c0_i32_1 = arith.constant 0 : i32
    return %c0_i32, %c0_i32_0 : i32, i32
  }
  func.func @transform_2(%arg0: i32, %arg1: i32) -> (i32, i32) {
    %c0_i32 = arith.constant 0 : i32
    %c0_i32_0 = arith.constant 0 : i32
    %c0_i32_1 = arith.constant 0 : i32
    return %c0_i32, %c0_i32_0 : i32, i32
  }
  func.func @transform_3(%arg0: i32, %arg1: i32) -> (i32, i32, i32, i32) {
    %c0_i32 = arith.constant 0 : i32
    %c0_i32_0 = arith.constant 0 : i32
    %c0_i32_1 = arith.constant 0 : i32
    return %arg0, %arg1, %c0_i32, %c0_i32_0 : i32, i32, i32, i32
  }
}

</mosaic_0001>

<llo_original>
// kernel: localization_forward.5
$region0: #{localization_forward.5}
  #allocation0 [shape = 'u32[]', space=smem, size = 0x4, offset = 0x4, fixed_abs, tag = 'smem constant byte address 0x4 - core index']
  #allocation1 [shape = 'u32[72,128]{1,0:T(1,128)}', space=vmem, size = 0x9000, scoped, tag = 'internal scratch']
  %s0 = inlined_call_operand.vmem [shape: bf16[1024,192], index: 0, kind: input, shape index: {}]
  %s1 = inlined_call_operand.vmem [shape: bf16[192,32], index: 1, kind: input, shape index: {}]
  %s2 = inlined_call_operand.vmem [shape: f32[1,32], index: 2, kind: input, shape index: {}]
  %s3 = inlined_call_operand.vmem [shape: f32[1,32], index: 3, kind: input, shape index: {}]
  %s4 = inlined_call_operand.vmem [shape: bf16[1024,32], index: 4, kind: output, shape index: {}]
  %s5 = sld [smem:[#allocation0]]
  $region49: #{localization_forward.5} parent=0
    _
  %s7 = ssub.s32 1, %s5
  %s8 = scalar_select 0, %s7, %s5
  loop: start=0, step=1, limit=4
  $region2: #{localization_forward.5} parent=0 // loop_pre_header
    _
  $region3: #{localization_forward.5} parent=0 // loop_header
    %s10 = sphi 0, %s14
    %p11 = scmp.ge.s32.totalorder %s10, 4
    %s20 = sphi 0, %s22
    %s23 = sphi 0, %s20
    %s24 = sphi 0, %s23
    %s40 = sphi 0, %s24
    %s44 = sphi 0, %s44
    %s46 = sphi 0, %s44
    %s47 = sphi 0, %s46
    %s61 = sphi 0, %s47
    %s65 = sphi 0, %s65
    %s67 = sphi 0, %s65
    %s68 = sphi 0, %s67
    %s82 = sphi 0, %s68
    %s86 = sphi 0, %s86
    %s88 = sphi 0, %s86
    %s89 = sphi 0, %s88
    %s103 = sphi 0, %s89
    %s109 = sphi 0, %s111
    %s112 = sphi 0, %s109
    %s113 = sphi 0, %s112
    %s129 = sphi 0, %s113
  $region4: #{localization_forward.5} parent=0 // loop_header_branch
    %13 = sbr.rel (%p11) target = $region8
  $region5: #{localization_forward.5} parent=0 // loop_body
    %s15 = ssub.s32 %s10, 1
    %s16 = ssub.s32 %s10, 2
    %s17 = sadd.s32 %s10, 1
    %s18 = ssub.s32 %s10, %s17
    %p19 = scmp.eq.s32.totalorder %s18, 0
    %s21 = sadd.s32 %s20, 1
    %s22 = scalar_select %p19, %s20, %s21
    %p25 = pneg %p19
    %p26 = scmp.eq.s32.totalorder %s10, 1
    %p27 = por %p25, %p26
    %p28 = scmp.ne.s32.totalorder %s20, %s23
    %p29 = scmp.eq.s32.totalorder %s10, 0
    %p30 = por %p28, %p29
    %p31 = scmp.ne.s32.totalorder %s20, %s23
    %p32 = scmp.eq.s32.totalorder %s15, 1
    %p33 = por %p31, %p32
    %p34 = scmp.ne.s32.totalorder %s23, %s24
    %p35 = scmp.eq.s32.totalorder %s15, 0
    %p36 = por %p34, %p35
    %p37 = scmp.ne.s32.totalorder %s23, %s24
    %p38 = scmp.eq.s32.totalorder %s16, 1
    %p39 = por %p37, %p38
    %p41 = scmp.ne.s32.totalorder %s24, %s40
    %p42 = scmp.eq.s32.totalorder %s16, 0
    %p43 = por %p41, %p42
    %s45 = sadd.s32 %s44, 1
    %p48 = scmp.eq.s32.totalorder %s10, 1
    %p49 = scmp.ne.s32.totalorder %s44, %s46
    %p50 = scmp.eq.s32.totalorder %s10, 0
    %p51 = por %p49, %p50
    %p52 = scmp.ne.s32.totalorder %s44, %s46
    %p53 = scmp.eq.s32.totalorder %s15, 1
    %p54 = por %p52, %p53
    %p55 = scmp.ne.s32.totalorder %s46, %s47
    %p56 = scmp.eq.s32.totalorder %s15, 0
    %p57 = por %p55, %p56
    %p58 = scmp.ne.s32.totalorder %s46, %s47
    %p59 = scmp.eq.s32.totalorder %s16, 1
    %p60 = por %p58, %p59
    %p62 = scmp.ne.s32.totalorder %s47, %s61
    %p63 = scmp.eq.s32.totalorder %s16, 0
    %p64 = por %p62, %p63
    %s66 = sadd.s32 %s65, 1
    %p69 = scmp.eq.s32.totalorder %s10, 1
    %p70 = scmp.ne.s32.totalorder %s65, %s67
    %p71 = scmp.eq.s32.totalorder %s10, 0
    %p72 = por %p70, %p71
    %p73 = scmp.ne.s32.totalorder %s65, %s67
    %p74 = scmp.eq.s32.totalorder %s15, 1
    %p75 = por %p73, %p74
    %p76 = scmp.ne.s32.totalorder %s67, %s68
    %p77 = scmp.eq.s32.totalorder %s15, 0
    %p78 = por %p76, %p77
    %p79 = scmp.ne.s32.totalorder %s67, %s68
    %p80 = scmp.eq.s32.totalorder %s16, 1
    %p81 = por %p79, %p80
    %p83 = scmp.ne.s32.totalorder %s68, %s82
    %p84 = scmp.eq.s32.totalorder %s16, 0
    %p85 = por %p83, %p84
    %s87 = sadd.s32 %s86, 1
    %p90 = scmp.eq.s32.totalorder %s10, 1
    %p91 = scmp.ne.s32.totalorder %s86, %s88
    %p92 = scmp.eq.s32.totalorder %s10, 0
    %p93 = por %p91, %p92
    %p94 = scmp.ne.s32.totalorder %s86, %s88
    %p95 = scmp.eq.s32.totalorder %s15, 1
    %p96 = por %p94, %p95
    %p97 = scmp.ne.s32.totalorder %s88, %s89
    %p98 = scmp.eq.s32.totalorder %s15, 0
    %p99 = por %p97, %p98
    %p100 = scmp.ne.s32.totalorder %s88, %s89
    %p101 = scmp.eq.s32.totalorder %s16, 1
    %p102 = por %p100, %p101
    %p104 = scmp.ne.s32.totalorder %s89, %s103
    %p105 = scmp.eq.s32.totalorder %s16, 0
    %p106 = por %p104, %p105
    %s107 = ssub.s32 %s10, %s17
    %p108 = scmp.eq.s32.totalorder %s107, 0
    %s110 = sadd.s32 %s109, 1
    %s111 = scalar_select %p108, %s109, %s110
    %p114 = pneg %p108
    %p115 = scmp.eq.s32.totalorder %s10, 1
    %p116 = por %p114, %p115
    %p117 = scmp.ne.s32.totalorder %s109, %s112
    %p118 = scmp.eq.s32.totalorder %s10, 0
    %p119 = por %p117, %p118
    %p120 = scmp.ne.s32.totalorder %s109, %s112
    %p121 = scmp.eq.s32.totalorder %s15, 1
    %p122 = por %p120, %p121
    %p123 = scmp.ne.s32.totalorder %s112, %s113
    %p124 = scmp.eq.s32.totalorder %s15, 0
    %p125 = por %p123, %p124
    %p126 = scmp.ne.s32.totalorder %s112, %s113
    %p127 = scmp.eq.s32.totalorder %s16, 1
    %p128 = por %p126, %p127
    %p130 = scmp.ne.s32.totalorder %s113, %s129
    %p131 = scmp.eq.s32.totalorder %s16, 0
    %p132 = por %p130, %p131
    %p133 = scmp.le.s32.totalorder 1, %s10
    %p134 = scmp.lt.s32.totalorder %s10, 3
    %p135 = pnand %p133, %p134
    %p136 = pneg %p135
    // Predicated region
    $region9: #{localization_forward.5} parent=5 // pred_check
      _
    $region10: #{localization_forward.5} parent=5 // pred_check_branch
      %138 = sbr.rel (%p135) target = $region12
    $region11: #{localization_forward.5} parent=5 // pred_region
      %s139 = ssub.s32 %s10, 1
      // Predicated region
      $region13: #{localization_forward.5} parent=11 // pred_check
        %p140 = pneg %p57
      $region14: #{localization_forward.5} parent=11 // pred_check_branch
        %142 = sbr.rel (%p140) target = $region16
      $region15: #{localization_forward.5} parent=11 // pred_region
        _
      $region16: #{localization_forward.5} parent=11 // pred_fallthru
        _
      // Predicated region
      $region17: #{localization_forward.5} parent=11 // pred_check
        %p143 = pneg %p78
      $region18: #{localization_forward.5} parent=11 // pred_check_branch
        %145 = sbr.rel (%p143) target = $region20
      $region19: #{localization_forward.5} parent=11 // pred_region
        _
      $region20: #{localization_forward.5} parent=11 // pred_fallthru
        _
      // Predicated region
      $region21: #{localization_forward.5} parent=11 // pred_check
        %p146 = pneg %p99
      $region22: #{localization_forward.5} parent=11 // pred_check_branch
        %148 = sbr.rel (%p146) target = $region24
      $region23: #{localization_forward.5} parent=11 // pred_region
        _
      $region24: #{localization_forward.5} parent=11 // pred_fallthru
        _
    $region12: #{localization_forward.5} parent=5 // pred_fallthru
      _
    %p149 = scmp.lt.s32.totalorder %s10, 2
    // Predicated region
    $region25: #{localization_forward.5} parent=5 // pred_check
      %p150 = pneg %p149
    $region26: #{localization_forward.5} parent=5 // pred_check_branch
      %152 = sbr.rel (%p150) target = $region28
    $region27: #{localization_forward.5} parent=5 // pred_region
      // Predicated region
      $region29: #{localization_forward.5} parent=27 // pred_check
        %p153 = pneg %p30
      $region30: #{localization_forward.5} parent=27 // pred_check_branch
        %155 = sbr.rel (%p153) target = $region32
      $region31: #{localization_forward.5} parent=27 // pred_region
        %s156 = smul.u32 64, %s10
        %p157 = scmp.lt.s32.totalorder %s156, 127
        %s158 = scalar_select %p157, %s156, 127
        %s159 = smul.addr %s158, 2
        %s160 = smul.addr %s159, 4
        %s161 = scalar_lea.vmem %s0, %s160
        %s162 = smul.u32 64, %s10
      $region32: #{localization_forward.5} parent=27 // pred_fallthru
        _
    $region28: #{localization_forward.5} parent=5 // pred_fallthru
      _
    %p163 = scmp.le.s32.totalorder 1, %s10
    %p164 = scmp.lt.s32.totalorder %s10, 3
    %p165 = pnand %p163, %p164
    %p166 = pneg %p165
    // Predicated region
    $region33: #{localization_forward.5} parent=5 // pred_check
      _
    $region34: #{localization_forward.5} parent=5 // pred_check_branch
      %168 = sbr.rel (%p165) target = $region36
    $region35: #{localization_forward.5} parent=5 // pred_region
      %s169 = ssub.s32 %s10, 1
      %s170 = smul.u32 64, %s15
      %p171 = scmp.lt.s32.totalorder %s170, 127
      %s172 = scalar_select %p171, %s170, 127
      %s173 = smul.addr %s172, 2
      %s174 = smul.addr %s173, 4
      %s175 = scalar_lea.vmem %s0, %s174
      %p176 = pneg %p36
      %p177 = pneg %p33
      %p178 = pneg %p57
      %p179 = pneg %p54
      %p180 = pneg %p78
      %p181 = pneg %p75
      %p182 = pneg %p99
      %p183 = pneg %p96
      %p184 = pneg %p125
      %p185 = pneg %p122
      %s186 = smul.u32 64, %s15
      %p187 = scmp.lt.s32.totalorder %s186, 127
      %s188 = scalar_select %p187, %s186, 127
      %s189 = smul.addr %s188, 4
      %s190 = scalar_lea.vmem %s4, %s189
      %s191 = smul.u32 64, %s15
      %p192 = scmp.lt.s32.totalorder %s191, 127
      %s193 = scalar_select %p192, %s191, 127
      %s194 = smul.addr %s193, 2
      %s195 = smul.addr %s194, 4
      %s196 = scalar_lea.vmem %s0, %s195
      %s197 = smul.u32 64, %s15
      %s198 = smul.u32 64, %s15
      %p199 = scmp.lt.s32.totalorder %s198, 127
      %s200 = scalar_select %p199, %s198, 127
      %s201 = smul.addr %s200, 4
      %s202 = scalar_lea.vmem %s4, %s201
      %s203 = smul.u32 64, %s15
      %v205 = vld [vmem:[%s196] sm:$0xff]
      %v206 = vld [vmem:[%s196 + $0x8] sm:$0xff]
      %v207 = vld [vmem:[%s196 + $0x10] sm:$0xff]
      %v208 = vld [vmem:[%s196 + $0x18] sm:$0xff]
      %v209 = vld [vmem:[%s196 + $0x20] sm:$0xff]
      %v210 = vld [vmem:[%s196 + $0x28] sm:$0xff]
      %v211 = vld [vmem:[%s196 + $0x30] sm:$0xff]
      %v212 = vld [vmem:[%s196 + $0x38] sm:$0xff]
      %v213 = vld [vmem:[%s196 + $0x40] sm:$0xff]
      %v214 = vld [vmem:[%s196 + $0x48] sm:$0xff]
      %v215 = vld [vmem:[%s196 + $0x50] sm:$0xff]
      %v216 = vld [vmem:[%s196 + $0x58] sm:$0xff]
      %v217 = vld [vmem:[%s196 + $0x60] sm:$0xff]
      %v218 = vld [vmem:[%s196 + $0x68] sm:$0xff]
      %v219 = vld [vmem:[%s196 + $0x70] sm:$0xff]
      %v220 = vld [vmem:[%s196 + $0x78] sm:$0xff]
      %v221 = vld [vmem:[%s196 + $0x80] sm:$0xff]
      %v222 = vld [vmem:[%s196 + $0x88] sm:$0xff]
      %v223 = vld [vmem:[%s196 + $0x90] sm:$0xff]
      %v224 = vld [vmem:[%s196 + $0x98] sm:$0xff]
      %v225 = vld [vmem:[%s196 + $0xa0] sm:$0xff]
      %v226 = vld [vmem:[%s196 + $0xa8] sm:$0xff]
      %v227 = vld [vmem:[%s196 + $0xb0] sm:$0xff]
      %v228 = vld [vmem:[%s196 + $0xb8] sm:$0xff]
      %v229 = vld [vmem:[%s196 + $0xc0] sm:$0xff]
      %v230 = vld [vmem:[%s196 + $0xc8] sm:$0xff]
      %v231 = vld [vmem:[%s196 + $0xd0] sm:$0xff]
      %v232 = vld [vmem:[%s196 + $0xd8] sm:$0xff]
      %v233 = vld [vmem:[%s196 + $0xe0] sm:$0xff]
      %v234 = vld [vmem:[%s196 + $0xe8] sm:$0xff]
      %v235 = vld [vmem:[%s196 + $0xf0] sm:$0xff]
      %v236 = vld [vmem:[%s196 + $0xf8] sm:$0xff]
      %v237 = vld [vmem:[%s196 + $0x100] sm:$0xff]
      %v238 = vld [vmem:[%s196 + $0x108] sm:$0xff]
      %v239 = vld [vmem:[%s196 + $0x110] sm:$0xff]
      %v240 = vld [vmem:[%s196 + $0x118] sm:$0xff]
      %v241 = vld [vmem:[%s196 + $0x120] sm:$0xff]
      %v242 = vld [vmem:[%s196 + $0x128] sm:$0xff]
      %v243 = vld [vmem:[%s196 + $0x130] sm:$0xff]
      %v244 = vld [vmem:[%s196 + $0x138] sm:$0xff]
      %v245 = vld [vmem:[%s196 + $0x140] sm:$0xff]
      %v246 = vld [vmem:[%s196 + $0x148] sm:$0xff]
      %v247 = vld [vmem:[%s196 + $0x150] sm:$0xff]
      %v248 = vld [vmem:[%s196 + $0x158] sm:$0xff]
      %v249 = vld [vmem:[%s196 + $0x160] sm:$0xff]
      %v250 = vld [vmem:[%s196 + $0x168] sm:$0xff]
      %v251 = vld [vmem:[%s196 + $0x170] sm:$0xff]
      %v252 = vld [vmem:[%s196 + $0x178] sm:$0xff]
      %v253 = vld [vmem:[%s196 + $0x180] sm:$0xff]
      %v254 = vld [vmem:[%s196 + $0x188] sm:$0xff]
      %v255 = vld [vmem:[%s196 + $0x190] sm:$0xff]
      %v256 = vld [vmem:[%s196 + $0x198] sm:$0xff]
      %v257 = vld [vmem:[%s196 + $0x1a0] sm:$0xff]
      %v258 = vld [vmem:[%s196 + $0x1a8] sm:$0xff]
      %v259 = vld [vmem:[%s196 + $0x1b0] sm:$0xff]
      %v260 = vld [vmem:[%s196 + $0x1b8] sm:$0xff]
      %v261 = vld [vmem:[%s196 + $0x1c0] sm:$0xff]
      %v262 = vld [vmem:[%s196 + $0x1c8] sm:$0xff]
      %v263 = vld [vmem:[%s196 + $0x1d0] sm:$0xff]
      %v264 = vld [vmem:[%s196 + $0x1d8] sm:$0xff]
      %v265 = vld [vmem:[%s196 + $0x1e0] sm:$0xff]
      %v266 = vld [vmem:[%s196 + $0x1e8] sm:$0xff]
      %v267 = vld [vmem:[%s196 + $0x1f0] sm:$0xff]
      %v268 = vld [vmem:[%s196 + $0x1f8] sm:$0xff]
      %v269 = vld [vmem:[%s1] sm:$0xf]
      %v270 = vld [vmem:[%s1 + $0x4] sm:$0xf]
      %v271 = vld [vmem:[%s1 + $0x8] sm:$0xf]
      %v272 = vld [vmem:[%s1 + $0xc] sm:$0xf]
      %v273 = vld [vmem:[%s1 + $0x10] sm:$0xf]
      %v274 = vld [vmem:[%s1 + $0x14] sm:$0xf]
      %v275 = vld [vmem:[%s1 + $0x18] sm:$0xf]
      %v276 = vld [vmem:[%s1 + $0x1c] sm:$0xf]
      %v277 = vld [vmem:[%s1 + $0x20] sm:$0xf]
      %v278 = vld [vmem:[%s1 + $0x24] sm:$0xf]
      %v279 = vld [vmem:[%s1 + $0x28] sm:$0xf]
      %v280 = vld [vmem:[%s1 + $0x2c] sm:$0xf]
      %v281 = vld [vmem:[%s1 + $0x30] sm:$0xf]
      %v282 = vld [vmem:[%s1 + $0x34] sm:$0xf]
      %v283 = vld [vmem:[%s1 + $0x38] sm:$0xf]
      %v284 = vld [vmem:[%s1 + $0x3c] sm:$0xf]
      %v285 = vld [vmem:[%s1 + $0x40] sm:$0xf]
      %v286 = vld [vmem:[%s1 + $0x44] sm:$0xf]
      %v287 = vld [vmem:[%s1 + $0x48] sm:$0xf]
      %v288 = vld [vmem:[%s1 + $0x4c] sm:$0xf]
      %v289 = vld [vmem:[%s1 + $0x50] sm:$0xf]
      %v290 = vld [vmem:[%s1 + $0x54] sm:$0xf]
      %v291 = vld [vmem:[%s1 + $0x58] sm:$0xf]
      %v292 = vld [vmem:[%s1 + $0x5c] sm:$0xf]
      %v357 = vunpack.c.l.b16 %v205
      %v358 = vunpack.c.h.b16 %v205
      %v359 = vunpack.c.l.b16 %v206
      %v360 = vunpack.c.h.b16 %v206
      %v361 = vunpack.c.l.b16 %v207
      %v362 = vunpack.c.h.b16 %v207
      %v363 = vunpack.c.l.b16 %v208
      %v364 = vunpack.c.h.b16 %v208
      %v365 = vunpack.c.l.b16 %v209
      %v366 = vunpack.c.h.b16 %v209
      %v367 = vunpack.c.l.b16 %v210
      %v368 = vunpack.c.h.b16 %v210
      %v369 = vunpack.c.l.b16 %v211
      %v370 = vunpack.c.h.b16 %v211
      %v371 = vunpack.c.l.b16 %v212
      %v372 = vunpack.c.h.b16 %v212
      %v373 = vunpack.c.l.b16 %v213
      %v374 = vunpack.c.h.b16 %v213
      %v375 = vunpack.c.l.b16 %v214
      %v376 = vunpack.c.h.b16 %v214
      %v377 = vunpack.c.l.b16 %v215
      %v378 = vunpack.c.h.b16 %v215
      %v379 = vunpack.c.l.b16 %v216
      %v380 = vunpack.c.h.b16 %v216
      %v381 = vunpack.c.l.b16 %v217
      %v382 = vunpack.c.h.b16 %v217
      %v383 = vunpack.c.l.b16 %v218
      %v384 = vunpack.c.h.b16 %v218
      %v385 = vunpack.c.l.b16 %v219
      %v386 = vunpack.c.h.b16 %v219
      %v387 = vunpack.c.l.b16 %v220
      %v388 = vunpack.c.h.b16 %v220
      %v389 = vunpack.c.l.b16 %v221
      %v390 = vunpack.c.h.b16 %v221
      %v391 = vunpack.c.l.b16 %v222
      %v392 = vunpack.c.h.b16 %v222
      %v393 = vunpack.c.l.b16 %v223
      %v394 = vunpack.c.h.b16 %v223
      %v395 = vunpack.c.l.b16 %v224
      %v396 = vunpack.c.h.b16 %v224
      %v397 = vunpack.c.l.b16 %v225
      %v398 = vunpack.c.h.b16 %v225
      %v399 = vunpack.c.l.b16 %v226
      %v400 = vunpack.c.h.b16 %v226
      %v401 = vunpack.c.l.b16 %v227
      %v402 = vunpack.c.h.b16 %v227
      %v403 = vunpack.c.l.b16 %v228
      %v404 = vunpack.c.h.b16 %v228
      %v405 = vunpack.c.l.b16 %v229
      %v406 = vunpack.c.h.b16 %v229
      %v407 = vunpack.c.l.b16 %v230
      %v408 = vunpack.c.h.b16 %v230
      %v409 = vunpack.c.l.b16 %v231
      %v410 = vunpack.c.h.b16 %v231
      %v411 = vunpack.c.l.b16 %v232
      %v412 = vunpack.c.h.b16 %v232
      %v413 = vunpack.c.l.b16 %v233
      %v414 = vunpack.c.h.b16 %v233
      %v415 = vunpack.c.l.b16 %v234
      %v416 = vunpack.c.h.b16 %v234
      %v417 = vunpack.c.l.b16 %v235
      %v418 = vunpack.c.h.b16 %v235
      %v419 = vunpack.c.l.b16 %v236
      %v420 = vunpack.c.h.b16 %v236
      %v421 = vunpack.c.l.b16 %v237
      %v422 = vunpack.c.h.b16 %v237
      %v423 = vunpack.c.l.b16 %v238
      %v424 = vunpack.c.h.b16 %v238
      %v425 = vunpack.c.l.b16 %v239
      %v426 = vunpack.c.h.b16 %v239
      %v427 = vunpack.c.l.b16 %v240
      %v428 = vunpack.c.h.b16 %v240
      %v429 = vunpack.c.l.b16 %v241
      %v430 = vunpack.c.h.b16 %v241
      %v431 = vunpack.c.l.b16 %v242
      %v432 = vunpack.c.h.b16 %v242
      %v433 = vunpack.c.l.b16 %v243
      %v434 = vunpack.c.h.b16 %v243
      %v435 = vunpack.c.l.b16 %v244
      %v436 = vunpack.c.h.b16 %v244
      %v437 = vunpack.c.l.b16 %v245
      %v438 = vunpack.c.h.b16 %v245
      %v439 = vunpack.c.l.b16 %v246
      %v440 = vunpack.c.h.b16 %v246
      %v441 = vunpack.c.l.b16 %v247
      %v442 = vunpack.c.h.b16 %v247
      %v443 = vunpack.c.l.b16 %v248
      %v444 = vunpack.c.h.b16 %v248
      %v445 = vunpack.c.l.b16 %v249
      %v446 = vunpack.c.h.b16 %v249
      %v447 = vunpack.c.l.b16 %v250
      %v448 = vunpack.c.h.b16 %v250
      %v449 = vunpack.c.l.b16 %v251
      %v450 = vunpack.c.h.b16 %v251
      %v451 = vunpack.c.l.b16 %v252
      %v452 = vunpack.c.h.b16 %v252
      %v453 = vunpack.c.l.b16 %v253
      %v454 = vunpack.c.h.b16 %v253
      %v455 = vunpack.c.l.b16 %v254
      %v456 = vunpack.c.h.b16 %v254
      %v457 = vunpack.c.l.b16 %v255
      %v458 = vunpack.c.h.b16 %v255
      %v459 = vunpack.c.l.b16 %v256
      %v460 = vunpack.c.h.b16 %v256
      %v461 = vunpack.c.l.b16 %v257
      %v462 = vunpack.c.h.b16 %v257
      %v463 = vunpack.c.l.b16 %v258
      %v464 = vunpack.c.h.b16 %v258
      %v465 = vunpack.c.l.b16 %v259
      %v466 = vunpack.c.h.b16 %v259
      %v467 = vunpack.c.l.b16 %v260
      %v468 = vunpack.c.h.b16 %v260
      %v469 = vunpack.c.l.b16 %v261
      %v470 = vunpack.c.h.b16 %v261
      %v471 = vunpack.c.l.b16 %v262
      %v472 = vunpack.c.h.b16 %v262
      %v473 = vunpack.c.l.b16 %v263
      %v474 = vunpack.c.h.b16 %v263
      %v475 = vunpack.c.l.b16 %v264
      %v476 = vunpack.c.h.b16 %v264
      %v477 = vunpack.c.l.b16 %v265
      %v478 = vunpack.c.h.b16 %v265
      %v479 = vunpack.c.l.b16 %v266
      %v480 = vunpack.c.h.b16 %v266
      %v481 = vunpack.c.l.b16 %v267
      %v482 = vunpack.c.h.b16 %v267
      %v483 = vunpack.c.l.b16 %v268
      %v484 = vunpack.c.h.b16 %v268
      %v485 = vpack.c.b16 %v359, %v357
      %v486 = vpack.c.b16 %v360, %v358
      %v487 = vpack.c.b16 %v363, %v361
      %v488 = vpack.c.b16 %v364, %v362
      %v489 = vpack.c.b16 %v367, %v365
      %v490 = vpack.c.b16 %v368, %v366
      %v491 = vpack.c.b16 %v371, %v369
      %v492 = vpack.c.b16 %v372, %v370
      %v493 = vpack.c.b16 %v375, %v373
      %v494 = vpack.c.b16 %v376, %v374
      %v495 = vpack.c.b16 %v379, %v377
      %v496 = vpack.c.b16 %v380, %v378
      %v497 = vpack.c.b16 %v383, %v381
      %v498 = vpack.c.b16 %v384, %v382
      %v499 = vpack.c.b16 %v387, %v385
      %v500 = vpack.c.b16 %v388, %v386
      %v501 = vpack.c.b16 %v391, %v389
      %v502 = vpack.c.b16 %v392, %v390
      %v503 = vpack.c.b16 %v395, %v393
      %v504 = vpack.c.b16 %v396, %v394
      %v505 = vpack.c.b16 %v399, %v397
      %v506 = vpack.c.b16 %v400, %v398
      %v507 = vpack.c.b16 %v403, %v401
      %v508 = vpack.c.b16 %v404, %v402
      %v509 = vpack.c.b16 %v407, %v405
      %v510 = vpack.c.b16 %v408, %v406
      %v511 = vpack.c.b16 %v411, %v409
      %v512 = vpack.c.b16 %v412, %v410
      %v513 = vpack.c.b16 %v415, %v413
      %v514 = vpack.c.b16 %v416, %v414
      %v515 = vpack.c.b16 %v419, %v417
      %v516 = vpack.c.b16 %v420, %v418
      %v517 = vpack.c.b16 %v423, %v421
      %v518 = vpack.c.b16 %v424, %v422
      %v519 = vpack.c.b16 %v427, %v425
      %v520 = vpack.c.b16 %v428, %v426
      %v521 = vpack.c.b16 %v431, %v429
      %v522 = vpack.c.b16 %v432, %v430
      %v523 = vpack.c.b16 %v435, %v433
      %v524 = vpack.c.b16 %v436, %v434
      %v525 = vpack.c.b16 %v439, %v437
      %v526 = vpack.c.b16 %v440, %v438
      %v527 = vpack.c.b16 %v443, %v441
      %v528 = vpack.c.b16 %v444, %v442
      %v529 = vpack.c.b16 %v447, %v445
      %v530 = vpack.c.b16 %v448, %v446
      %v531 = vpack.c.b16 %v451, %v449
      %v532 = vpack.c.b16 %v452, %v450
      %v533 = vpack.c.b16 %v455, %v453
      %v534 = vpack.c.b16 %v456, %v454
      %v535 = vpack.c.b16 %v459, %v457
      %v536 = vpack.c.b16 %v460, %v458
      %v537 = vpack.c.b16 %v463, %v461
      %v538 = vpack.c.b16 %v464, %v462
      %v539 = vpack.c.b16 %v467, %v465
      %v540 = vpack.c.b16 %v468, %v466
      %v541 = vpack.c.b16 %v471, %v469
      %v542 = vpack.c.b16 %v472, %v470
      %v543 = vpack.c.b16 %v475, %v473
      %v544 = vpack.c.b16 %v476, %v474
      %v545 = vpack.c.b16 %v479, %v477
      %v546 = vpack.c.b16 %v480, %v478
      %v547 = vpack.c.b16 %v483, %v481
      %v548 = vpack.c.b16 %v484, %v482
      %v605 = vunpack.c.l.b16 %v269
      %v606 = vunpack.c.l.b16 %v270
      %v607 = vunpack.c.l.b16 %v271
      %v608 = vunpack.c.l.b16 %v272
      %v609 = vunpack.c.l.b16 %v273
      %v610 = vunpack.c.l.b16 %v274
      %v611 = vunpack.c.l.b16 %v275
      %v612 = vunpack.c.l.b16 %v276
      %v613 = vunpack.c.l.b16 %v277
      %v614 = vunpack.c.l.b16 %v278
      %v615 = vunpack.c.l.b16 %v279
      %v616 = vunpack.c.l.b16 %v280
      %v617 = vunpack.c.l.b16 %v281
      %v618 = vunpack.c.l.b16 %v282
      %v619 = vunpack.c.l.b16 %v283
      %v620 = vunpack.c.l.b16 %v284
      %v621 = vunpack.c.l.b16 %v285
      %v622 = vunpack.c.l.b16 %v286
      %v623 = vunpack.c.l.b16 %v287
      %v624 = vunpack.c.l.b16 %v288
      %v625 = vunpack.c.l.b16 %v289
      %v626 = vunpack.c.l.b16 %v290
      %v627 = vunpack.c.l.b16 %v291
      %v628 = vunpack.c.l.b16 %v292
      %v629 = vpack.c.b16 %v606, %v605
      %v630 = vpack.c.b16 %v608, %v607
      %v631 = vpack.c.b16 %v610, %v609
      %v632 = vpack.c.b16 %v612, %v611
      %v633 = vpack.c.b16 %v614, %v613
      %v634 = vpack.c.b16 %v616, %v615
      %v635 = vpack.c.b16 %v618, %v617
      %v636 = vpack.c.b16 %v620, %v619
      %v637 = vpack.c.b16 %v622, %v621
      %v638 = vpack.c.b16 %v624, %v623
      %v639 = vpack.c.b16 %v626, %v625
      %v640 = vpack.c.b16 %v628, %v627
      %vm653 = vcmask 523264
      %v655 = vsel %vm653, %v486, 0
      %v658 = vsel %vm653, %v488, 0
      %v661 = vsel %vm653, %v490, 0
      %v664 = vsel %vm653, %v492, 0
      %v667 = vsel %vm653, %v494, 0
      %v670 = vsel %vm653, %v496, 0
      %v673 = vsel %vm653, %v498, 0
      %v676 = vsel %vm653, %v500, 0
      %v679 = vsel %vm653, %v502, 0
      %v682 = vsel %vm653, %v504, 0
      %v685 = vsel %vm653, %v506, 0
      %v688 = vsel %vm653, %v508, 0
      %v691 = vsel %vm653, %v510, 0
      %v694 = vsel %vm653, %v512, 0
      %v697 = vsel %vm653, %v514, 0
      %v700 = vsel %vm653, %v516, 0
      %v703 = vsel %vm653, %v518, 0
      %v706 = vsel %vm653, %v520, 0
      %v709 = vsel %vm653, %v522, 0
      %v712 = vsel %vm653, %v524, 0
      %v715 = vsel %vm653, %v526, 0
      %v718 = vsel %vm653, %v528, 0
      %v721 = vsel %vm653, %v530, 0
      %v724 = vsel %vm653, %v532, 0
      %v727 = vsel %vm653, %v534, 0
      %v730 = vsel %vm653, %v536, 0
      %v733 = vsel %vm653, %v538, 0
      %v736 = vsel %vm653, %v540, 0
      %v739 = vsel %vm653, %v542, 0
      %v742 = vsel %vm653, %v544, 0
      %v745 = vsel %vm653, %v546, 0
      %v748 = vsel %vm653, %v548, 0
      %750 = vmatpush.bf16.msra.mxu0 %v636
      %751 = vmatpush.bf16.msra.mxu0 %v635
      %752 = vmatpush.bf16.msra.mxu0 %v634
      %753 = vmatpush.bf16.msra.mxu0 %v633
      %754 = vmatpush.bf16.msra.mxu0 %v632
      %755 = vmatpush.bf16.msra.mxu0 %v631
      %756 = vmatpush.bf16.msra.mxu0 %v630
      %757 = vmatpush.bf16.msra.mxu0 %v629
      %758 = vmatmul.bf16.gmra.mxu0 %v485
      %v759 = vpop.f32.mrf.mxu0
      %v760 = vadd.f32 0.0, %v759
      %v761 = vpop.f32.mrf.mxu0
      %v762 = vadd.f32 0.0, %v761
      %763 = vmatmul.bf16.gmra.mxu0 %v487
      %v764 = vpop.f32.mrf.mxu0
      %v765 = vadd.f32 0.0, %v764
      %v766 = vpop.f32.mrf.mxu0
      %v767 = vadd.f32 0.0, %v766
      %768 = vmatmul.bf16.gmra.mxu0 %v489
      %v769 = vpop.f32.mrf.mxu0
      %v770 = vadd.f32 0.0, %v769
      %v771 = vpop.f32.mrf.mxu0
      %v772 = vadd.f32 0.0, %v771
      %773 = vmatmul.bf16.gmra.mxu0 %v491
      %v774 = vpop.f32.mrf.mxu0
      %v775 = vadd.f32 0.0, %v774
      %v776 = vpop.f32.mrf.mxu0
      %v777 = vadd.f32 0.0, %v776
      %778 = vmatmul.bf16.gmra.mxu0 %v493
      %v779 = vpop.f32.mrf.mxu0
      %v780 = vadd.f32 0.0, %v779
      %v781 = vpop.f32.mrf.mxu0
      %v782 = vadd.f32 0.0, %v781
      %783 = vmatmul.bf16.gmra.mxu0 %v495
      %v784 = vpop.f32.mrf.mxu0
      %v785 = vadd.f32 0.0, %v784
      %v786 = vpop.f32.mrf.mxu0
      %v787 = vadd.f32 0.0, %v786
      %788 = vmatmul.bf16.gmra.mxu0 %v497
      %v789 = vpop.f32.mrf.mxu0
      %v790 = vadd.f32 0.0, %v789
      %v791 = vpop.f32.mrf.mxu0
      %v792 = vadd.f32 0.0, %v791
      %793 = vmatmul.bf16.gmra.mxu0 %v499
      %v794 = vpop.f32.mrf.mxu0
      %v795 = vadd.f32 0.0, %v794
      %v796 = vpop.f32.mrf.mxu0
      %v797 = vadd.f32 0.0, %v796
      %798 = vmatmul.bf16.gmra.mxu0 %v501
      %v799 = vpop.f32.mrf.mxu0
      %v800 = vadd.f32 0.0, %v799
      %v801 = vpop.f32.mrf.mxu0
      %v802 = vadd.f32 0.0, %v801
      %803 = vmatmul.bf16.gmra.mxu0 %v503
      %v804 = vpop.f32.mrf.mxu0
      %v805 = vadd.f32 0.0, %v804
      %v806 = vpop.f32.mrf.mxu0
      %v807 = vadd.f32 0.0, %v806
      %808 = vmatmul.bf16.gmra.mxu0 %v505
      %v809 = vpop.f32.mrf.mxu0
      %v810 = vadd.f32 0.0, %v809
      %v811 = vpop.f32.mrf.mxu0
      %v812 = vadd.f32 0.0, %v811
      %813 = vmatmul.bf16.gmra.mxu0 %v507
      %v814 = vpop.f32.mrf.mxu0
      %v815 = vadd.f32 0.0, %v814
      %v816 = vpop.f32.mrf.mxu0
      %v817 = vadd.f32 0.0, %v816
      %818 = vmatmul.bf16.gmra.mxu0 %v509
      %v819 = vpop.f32.mrf.mxu0
      %v820 = vadd.f32 0.0, %v819
      %v821 = vpop.f32.mrf.mxu0
      %v822 = vadd.f32 0.0, %v821
      %823 = vmatmul.bf16.gmra.mxu0 %v511
      %v824 = vpop.f32.mrf.mxu0
      %v825 = vadd.f32 0.0, %v824
      %v826 = vpop.f32.mrf.mxu0
      %v827 = vadd.f32 0.0, %v826
      %828 = vmatmul.bf16.gmra.mxu0 %v513
      %v829 = vpop.f32.mrf.mxu0
      %v830 = vadd.f32 0.0, %v829
      %v831 = vpop.f32.mrf.mxu0
      %v832 = vadd.f32 0.0, %v831
      %833 = vmatmul.bf16.gmra.mxu0 %v515
      %v834 = vpop.f32.mrf.mxu0
      %v835 = vadd.f32 0.0, %v834
      %v836 = vpop.f32.mrf.mxu0
      %v837 = vadd.f32 0.0, %v836
      %838 = vmatmul.bf16.gmra.mxu0 %v517
      %v839 = vpop.f32.mrf.mxu0
      %v840 = vadd.f32 0.0, %v839
      %v841 = vpop.f32.mrf.mxu0
      %v842 = vadd.f32 0.0, %v841
      %843 = vmatmul.bf16.gmra.mxu0 %v519
      %v844 = vpop.f32.mrf.mxu0
      %v845 = vadd.f32 0.0, %v844
      %v846 = vpop.f32.mrf.mxu0
      %v847 = vadd.f32 0.0, %v846
      %848 = vmatmul.bf16.gmra.mxu0 %v521
      %v849 = vpop.f32.mrf.mxu0
      %v850 = vadd.f32 0.0, %v849
      %v851 = vpop.f32.mrf.mxu0
      %v852 = vadd.f32 0.0, %v851
      %853 = vmatmul.bf16.gmra.mxu0 %v523
      %v854 = vpop.f32.mrf.mxu0
      %v855 = vadd.f32 0.0, %v854
      %v856 = vpop.f32.mrf.mxu0
      %v857 = vadd.f32 0.0, %v856
      %858 = vmatmul.bf16.gmra.mxu0 %v525
      %v859 = vpop.f32.mrf.mxu0
      %v860 = vadd.f32 0.0, %v859
      %v861 = vpop.f32.mrf.mxu0
      %v862 = vadd.f32 0.0, %v861
      %863 = vmatmul.bf16.gmra.mxu0 %v527
      %v864 = vpop.f32.mrf.mxu0
      %v865 = vadd.f32 0.0, %v864
      %v866 = vpop.f32.mrf.mxu0
      %v867 = vadd.f32 0.0, %v866
      %868 = vmatmul.bf16.gmra.mxu0 %v529
      %v869 = vpop.f32.mrf.mxu0
      %v870 = vadd.f32 0.0, %v869
      %v871 = vpop.f32.mrf.mxu0
      %v872 = vadd.f32 0.0, %v871
      %873 = vmatmul.bf16.gmra.mxu0 %v531
      %v874 = vpop.f32.mrf.mxu0
      %v875 = vadd.f32 0.0, %v874
      %v876 = vpop.f32.mrf.mxu0
      %v877 = vadd.f32 0.0, %v876
      %878 = vmatmul.bf16.gmra.mxu0 %v533
      %v879 = vpop.f32.mrf.mxu0
      %v880 = vadd.f32 0.0, %v879
      %v881 = vpop.f32.mrf.mxu0
      %v882 = vadd.f32 0.0, %v881
      %883 = vmatmul.bf16.gmra.mxu0 %v535
      %v884 = vpop.f32.mrf.mxu0
      %v885 = vadd.f32 0.0, %v884
      %v886 = vpop.f32.mrf.mxu0
      %v887 = vadd.f32 0.0, %v886
      %888 = vmatmul.bf16.gmra.mxu0 %v537
      %v889 = vpop.f32.mrf.mxu0
      %v890 = vadd.f32 0.0, %v889
      %v891 = vpop.f32.mrf.mxu0
      %v892 = vadd.f32 0.0, %v891
      %893 = vmatmul.bf16.gmra.mxu0 %v539
      %v894 = vpop.f32.mrf.mxu0
      %v895 = vadd.f32 0.0, %v894
      %v896 = vpop.f32.mrf.mxu0
      %v897 = vadd.f32 0.0, %v896
      %898 = vmatmul.bf16.gmra.mxu0 %v541
      %v899 = vpop.f32.mrf.mxu0
      %v900 = vadd.f32 0.0, %v899
      %v901 = vpop.f32.mrf.mxu0
      %v902 = vadd.f32 0.0, %v901
      %903 = vmatmul.bf16.gmra.mxu0 %v543
      %v904 = vpop.f32.mrf.mxu0
      %v905 = vadd.f32 0.0, %v904
      %v906 = vpop.f32.mrf.mxu0
      %v907 = vadd.f32 0.0, %v906
      %908 = vmatmul.bf16.gmra.mxu0 %v545
      %v909 = vpop.f32.mrf.mxu0
      %v910 = vadd.f32 0.0, %v909
      %v911 = vpop.f32.mrf.mxu0
      %v912 = vadd.f32 0.0, %v911
      %913 = vmatmul.bf16.gmra.mxu0 %v547
      %v914 = vpop.f32.mrf.mxu0
      %v915 = vadd.f32 0.0, %v914
      %v916 = vpop.f32.mrf.mxu0
      %v917 = vadd.f32 0.0, %v916
      %918 = vdwg.mxu0
      %919 = vmatpush.bf16.msra.mxu0 0
      %920 = vmatpush.bf16.msra.mxu0 0
      %921 = vmatpush.bf16.msra.mxu0 0
      %922 = vmatpush.bf16.msra.mxu0 0
      %923 = vmatpush.bf16.msra.mxu0 %v640
      %924 = vmatpush.bf16.msra.mxu0 %v639
      %925 = vmatpush.bf16.msra.mxu0 %v638
      %926 = vmatpush.bf16.msra.mxu0 %v637
      %927 = vmatmul.bf16.gmra.mxu0 %v655
      %v928 = vpop.f32.mrf.mxu0
      %v929 = vadd.f32 %v760, %v928
      %v930 = vpop.f32.mrf.mxu0
      %v931 = vadd.f32 %v762, %v930
      %932 = vmatmul.bf16.gmra.mxu0 %v658
      %v933 = vpop.f32.mrf.mxu0
      %v934 = vadd.f32 %v765, %v933
      %v935 = vpop.f32.mrf.mxu0
      %v936 = vadd.f32 %v767, %v935
      %937 = vmatmul.bf16.gmra.mxu0 %v661
      %v938 = vpop.f32.mrf.mxu0
      %v939 = vadd.f32 %v770, %v938
      %v940 = vpop.f32.mrf.mxu0
      %v941 = vadd.f32 %v772, %v940
      %942 = vmatmul.bf16.gmra.mxu0 %v664
      %v943 = vpop.f32.mrf.mxu0
      %v944 = vadd.f32 %v775, %v943
      %v945 = vpop.f32.mrf.mxu0
      %v946 = vadd.f32 %v777, %v945
      %947 = vmatmul.bf16.gmra.mxu0 %v667
      %v948 = vpop.f32.mrf.mxu0
      %v949 = vadd.f32 %v780, %v948
      %v950 = vpop.f32.mrf.mxu0
      %v951 = vadd.f32 %v782, %v950
      %952 = vmatmul.bf16.gmra.mxu0 %v670
      %v953 = vpop.f32.mrf.mxu0
      %v954 = vadd.f32 %v785, %v953
      %v955 = vpop.f32.mrf.mxu0
      %v956 = vadd.f32 %v787, %v955
      %957 = vmatmul.bf16.gmra.mxu0 %v673
      %v958 = vpop.f32.mrf.mxu0
      %v959 = vadd.f32 %v790, %v958
      %v960 = vpop.f32.mrf.mxu0
      %v961 = vadd.f32 %v792, %v960
      %962 = vmatmul.bf16.gmra.mxu0 %v676
      %v963 = vpop.f32.mrf.mxu0
      %v964 = vadd.f32 %v795, %v963
      %v965 = vpop.f32.mrf.mxu0
      %v966 = vadd.f32 %v797, %v965
      %967 = vmatmul.bf16.gmra.mxu0 %v679
      %v968 = vpop.f32.mrf.mxu0
      %v969 = vadd.f32 %v800, %v968
      %v970 = vpop.f32.mrf.mxu0
      %v971 = vadd.f32 %v802, %v970
      %972 = vmatmul.bf16.gmra.mxu0 %v682
      %v973 = vpop.f32.mrf.mxu0
      %v974 = vadd.f32 %v805, %v973
      %v975 = vpop.f32.mrf.mxu0
      %v976 = vadd.f32 %v807, %v975
      %977 = vmatmul.bf16.gmra.mxu0 %v685
      %v978 = vpop.f32.mrf.mxu0
      %v979 = vadd.f32 %v810, %v978
      %v980 = vpop.f32.mrf.mxu0
      %v981 = vadd.f32 %v812, %v980
      %982 = vmatmul.bf16.gmra.mxu0 %v688
      %v983 = vpop.f32.mrf.mxu0
      %v984 = vadd.f32 %v815, %v983
      %v985 = vpop.f32.mrf.mxu0
      %v986 = vadd.f32 %v817, %v985
      %987 = vmatmul.bf16.gmra.mxu0 %v691
      %v988 = vpop.f32.mrf.mxu0
      %v989 = vadd.f32 %v820, %v988
      %v990 = vpop.f32.mrf.mxu0
      %v991 = vadd.f32 %v822, %v990
      %992 = vmatmul.bf16.gmra.mxu0 %v694
      %v993 = vpop.f32.mrf.mxu0
      %v994 = vadd.f32 %v825, %v993
      %v995 = vpop.f32.mrf.mxu0
      %v996 = vadd.f32 %v827, %v995
      %997 = vmatmul.bf16.gmra.mxu0 %v697
      %v998 = vpop.f32.mrf.mxu0
      %v999 = vadd.f32 %v830, %v998
      %v1000 = vpop.f32.mrf.mxu0
      %v1001 = vadd.f32 %v832, %v1000
      %1002 = vmatmul.bf16.gmra.mxu0 %v700
      %v1003 = vpop.f32.mrf.mxu0
      %v1004 = vadd.f32 %v835, %v1003
      %v1005 = vpop.f32.mrf.mxu0
      %v1006 = vadd.f32 %v837, %v1005
      %1007 = vmatmul.bf16.gmra.mxu0 %v703
      %v1008 = vpop.f32.mrf.mxu0
      %v1009 = vadd.f32 %v840, %v1008
      %v1010 = vpop.f32.mrf.mxu0
      %v1011 = vadd.f32 %v842, %v1010
      %1012 = vmatmul.bf16.gmra.mxu0 %v706
      %v1013 = vpop.f32.mrf.mxu0
      %v1014 = vadd.f32 %v845, %v1013
      %v1015 = vpop.f32.mrf.mxu0
      %v1016 = vadd.f32 %v847, %v1015
      %1017 = vmatmul.bf16.gmra.mxu0 %v709
      %v1018 = vpop.f32.mrf.mxu0
      %v1019 = vadd.f32 %v850, %v1018
      %v1020 = vpop.f32.mrf.mxu0
      %v1021 = vadd.f32 %v852, %v1020
      %1022 = vmatmul.bf16.gmra.mxu0 %v712
      %v1023 = vpop.f32.mrf.mxu0
      %v1024 = vadd.f32 %v855, %v1023
      %v1025 = vpop.f32.mrf.mxu0
      %v1026 = vadd.f32 %v857, %v1025
      %1027 = vmatmul.bf16.gmra.mxu0 %v715
      %v1028 = vpop.f32.mrf.mxu0
      %v1029 = vadd.f32 %v860, %v1028
      %v1030 = vpop.f32.mrf.mxu0
      %v1031 = vadd.f32 %v862, %v1030
      %1032 = vmatmul.bf16.gmra.mxu0 %v718
      %v1033 = vpop.f32.mrf.mxu0
      %v1034 = vadd.f32 %v865, %v1033
      %v1035 = vpop.f32.mrf.mxu0
      %v1036 = vadd.f32 %v867, %v1035
      %1037 = vmatmul.bf16.gmra.mxu0 %v721
      %v1038 = vpop.f32.mrf.mxu0
      %v1039 = vadd.f32 %v870, %v1038
      %v1040 = vpop.f32.mrf.mxu0
      %v1041 = vadd.f32 %v872, %v1040
      %1042 = vmatmul.bf16.gmra.mxu0 %v724
      %v1043 = vpop.f32.mrf.mxu0
      %v1044 = vadd.f32 %v875, %v1043
      %v1045 = vpop.f32.mrf.mxu0
      %v1046 = vadd.f32 %v877, %v1045
      %1047 = vmatmul.bf16.gmra.mxu0 %v727
      %v1048 = vpop.f32.mrf.mxu0
      %v1049 = vadd.f32 %v880, %v1048
      %v1050 = vpop.f32.mrf.mxu0
      %v1051 = vadd.f32 %v882, %v1050
      %1052 = vmatmul.bf16.gmra.mxu0 %v730
      %v1053 = vpop.f32.mrf.mxu0
      %v1054 = vadd.f32 %v885, %v1053
      %v1055 = vpop.f32.mrf.mxu0
      %v1056 = vadd.f32 %v887, %v1055
      %1057 = vmatmul.bf16.gmra.mxu0 %v733
      %v1058 = vpop.f32.mrf.mxu0
      %v1059 = vadd.f32 %v890, %v1058
      %v1060 = vpop.f32.mrf.mxu0
      %v1061 = vadd.f32 %v892, %v1060
      %1062 = vmatmul.bf16.gmra.mxu0 %v736
      %v1063 = vpop.f32.mrf.mxu0
      %v1064 = vadd.f32 %v895, %v1063
      %v1065 = vpop.f32.mrf.mxu0
      %v1066 = vadd.f32 %v897, %v1065
      %1067 = vmatmul.bf16.gmra.mxu0 %v739
      %v1068 = vpop.f32.mrf.mxu0
      %v1069 = vadd.f32 %v900, %v1068
      %v1070 = vpop.f32.mrf.mxu0
      %v1071 = vadd.f32 %v902, %v1070
      %1072 = vmatmul.bf16.gmra.mxu0 %v742
      %v1073 = vpop.f32.mrf.mxu0
      %v1074 = vadd.f32 %v905, %v1073
      %v1075 = vpop.f32.mrf.mxu0
      %v1076 = vadd.f32 %v907, %v1075
      %1077 = vmatmul.bf16.gmra.mxu0 %v745
      %v1078 = vpop.f32.mrf.mxu0
      %v1079 = vadd.f32 %v910, %v1078
      %v1080 = vpop.f32.mrf.mxu0
      %v1081 = vadd.f32 %v912, %v1080
      %1082 = vmatmul.bf16.gmra.mxu0 %v748
      %v1083 = vpop.f32.mrf.mxu0
      %v1084 = vadd.f32 %v915, %v1083
      %v1085 = vpop.f32.mrf.mxu0
      %v1086 = vadd.f32 %v917, %v1085
      %1087 = vdwg.mxu0
      %v1088 = vld [vmem:[%s2] sm:$0x1]
      %v1090 = vperm.slane %v1088, 0
      %v1092 = vmul.f32 %v929, %v1090
      %v1093 = vmul.f32 %v931, %v1090
      %v1094 = vmul.f32 %v934, %v1090
      %v1095 = vmul.f32 %v936, %v1090
      %v1096 = vmul.f32 %v939, %v1090
      %v1097 = vmul.f32 %v941, %v1090
      %v1098 = vmul.f32 %v944, %v1090
      %v1099 = vmul.f32 %v946, %v1090
      %v1100 = vmul.f32 %v949, %v1090
      %v1101 = vmul.f32 %v951, %v1090
      %v1102 = vmul.f32 %v954, %v1090
      %v1103 = vmul.f32 %v956, %v1090
      %v1104 = vmul.f32 %v959, %v1090
      %v1105 = vmul.f32 %v961, %v1090
      %v1106 = vmul.f32 %v964, %v1090
      %v1107 = vmul.f32 %v966, %v1090
      %v1108 = vmul.f32 %v969, %v1090
      %v1109 = vmul.f32 %v971, %v1090
      %v1110 = vmul.f32 %v974, %v1090
      %v1111 = vmul.f32 %v976, %v1090
      %v1112 = vmul.f32 %v979, %v1090
      %v1113 = vmul.f32 %v981, %v1090
      %v1114 = vmul.f32 %v984, %v1090
      %v1115 = vmul.f32 %v986, %v1090
      %v1116 = vmul.f32 %v989, %v1090
      %v1117 = vmul.f32 %v991, %v1090
      %v1118 = vmul.f32 %v994, %v1090
      %v1119 = vmul.f32 %v996, %v1090
      %v1120 = vmul.f32 %v999, %v1090
      %v1121 = vmul.f32 %v1001, %v1090
      %v1122 = vmul.f32 %v1004, %v1090
      %v1123 = vmul.f32 %v1006, %v1090
      %v1124 = vmul.f32 %v1009, %v1090
      %v1125 = vmul.f32 %v1011, %v1090
      %v1126 = vmul.f32 %v1014, %v1090
      %v1127 = vmul.f32 %v1016, %v1090
      %v1128 = vmul.f32 %v1019, %v1090
      %v1129 = vmul.f32 %v1021, %v1090
      %v1130 = vmul.f32 %v1024, %v1090
      %v1131 = vmul.f32 %v1026, %v1090
      %v1132 = vmul.f32 %v1029, %v1090
      %v1133 = vmul.f32 %v1031, %v1090
      %v1134 = vmul.f32 %v1034, %v1090
      %v1135 = vmul.f32 %v1036, %v1090
      %v1136 = vmul.f32 %v1039, %v1090
      %v1137 = vmul.f32 %v1041, %v1090
      %v1138 = vmul.f32 %v1044, %v1090
      %v1139 = vmul.f32 %v1046, %v1090
      %v1140 = vmul.f32 %v1049, %v1090
      %v1141 = vmul.f32 %v1051, %v1090
      %v1142 = vmul.f32 %v1054, %v1090
      %v1143 = vmul.f32 %v1056, %v1090
      %v1144 = vmul.f32 %v1059, %v1090
      %v1145 = vmul.f32 %v1061, %v1090
      %v1146 = vmul.f32 %v1064, %v1090
      %v1147 = vmul.f32 %v1066, %v1090
      %v1148 = vmul.f32 %v1069, %v1090
      %v1149 = vmul.f32 %v1071, %v1090
      %v1150 = vmul.f32 %v1074, %v1090
      %v1151 = vmul.f32 %v1076, %v1090
      %v1152 = vmul.f32 %v1079, %v1090
      %v1153 = vmul.f32 %v1081, %v1090
      %v1154 = vmul.f32 %v1084, %v1090
      %v1155 = vmul.f32 %v1086, %v1090
      %v1156 = vld [vmem:[%s3] sm:$0x1]
      %v1158 = vperm.slane %v1156, 0
      %v1160 = vadd.f32 %v1092, %v1158
      %v1161 = vadd.f32 %v1093, %v1158
      %v1162 = vadd.f32 %v1094, %v1158
      %v1163 = vadd.f32 %v1095, %v1158
      %v1164 = vadd.f32 %v1096, %v1158
      %v1165 = vadd.f32 %v1097, %v1158
      %v1166 = vadd.f32 %v1098, %v1158
      %v1167 = vadd.f32 %v1099, %v1158
      %v1168 = vadd.f32 %v1100, %v1158
      %v1169 = vadd.f32 %v1101, %v1158
      %v1170 = vadd.f32 %v1102, %v1158
      %v1171 = vadd.f32 %v1103, %v1158
      %v1172 = vadd.f32 %v1104, %v1158
      %v1173 = vadd.f32 %v1105, %v1158
      %v1174 = vadd.f32 %v1106, %v1158
      %v1175 = vadd.f32 %v1107, %v1158
      %v1176 = vadd.f32 %v1108, %v1158
      %v1177 = vadd.f32 %v1109, %v1158
      %v1178 = vadd.f32 %v1110, %v1158
      %v1179 = vadd.f32 %v1111, %v1158
      %v1180 = vadd.f32 %v1112, %v1158
      %v1181 = vadd.f32 %v1113, %v1158
      %v1182 = vadd.f32 %v1114, %v1158
      %v1183 = vadd.f32 %v1115, %v1158
      %v1184 = vadd.f32 %v1116, %v1158
      %v1185 = vadd.f32 %v1117, %v1158
      %v1186 = vadd.f32 %v1118, %v1158
      %v1187 = vadd.f32 %v1119, %v1158
      %v1188 = vadd.f32 %v1120, %v1158
      %v1189 = vadd.f32 %v1121, %v1158
      %v1190 = vadd.f32 %v1122, %v1158
      %v1191 = vadd.f32 %v1123, %v1158
      %v1192 = vadd.f32 %v1124, %v1158
      %v1193 = vadd.f32 %v1125, %v1158
      %v1194 = vadd.f32 %v1126, %v1158
      %v1195 = vadd.f32 %v1127, %v1158
      %v1196 = vadd.f32 %v1128, %v1158
      %v1197 = vadd.f32 %v1129, %v1158
      %v1198 = vadd.f32 %v1130, %v1158
      %v1199 = vadd.f32 %v1131, %v1158
      %v1200 = vadd.f32 %v1132, %v1158
      %v1201 = vadd.f32 %v1133, %v1158
      %v1202 = vadd.f32 %v1134, %v1158
      %v1203 = vadd.f32 %v1135, %v1158
      %v1204 = vadd.f32 %v1136, %v1158
      %v1205 = vadd.f32 %v1137, %v1158
      %v1206 = vadd.f32 %v1138, %v1158
      %v1207 = vadd.f32 %v1139, %v1158
      %v1208 = vadd.f32 %v1140, %v1158
      %v1209 = vadd.f32 %v1141, %v1158
      %v1210 = vadd.f32 %v1142, %v1158
      %v1211 = vadd.f32 %v1143, %v1158
      %v1212 = vadd.f32 %v1144, %v1158
      %v1213 = vadd.f32 %v1145, %v1158
      %v1214 = vadd.f32 %v1146, %v1158
      %v1215 = vadd.f32 %v1147, %v1158
      %v1216 = vadd.f32 %v1148, %v1158
      %v1217 = vadd.f32 %v1149, %v1158
      %v1218 = vadd.f32 %v1150, %v1158
      %v1219 = vadd.f32 %v1151, %v1158
      %v1220 = vadd.f32 %v1152, %v1158
      %v1221 = vadd.f32 %v1153, %v1158
      %v1222 = vadd.f32 %v1154, %v1158
      %v1223 = vadd.f32 %v1155, %v1158
      %v1224 = vmax.f32 %v1160, 0.0
      %v1225 = vmax.f32 %v1161, 0.0
      %v1226 = vmax.f32 %v1162, 0.0
      %v1227 = vmax.f32 %v1163, 0.0
      %v1228 = vmax.f32 %v1164, 0.0
      %v1229 = vmax.f32 %v1165, 0.0
      %v1230 = vmax.f32 %v1166, 0.0
      %v1231 = vmax.f32 %v1167, 0.0
      %v1232 = vmax.f32 %v1168, 0.0
      %v1233 = vmax.f32 %v1169, 0.0
      %v1234 = vmax.f32 %v1170, 0.0
      %v1235 = vmax.f32 %v1171, 0.0
      %v1236 = vmax.f32 %v1172, 0.0
      %v1237 = vmax.f32 %v1173, 0.0
      %v1238 = vmax.f32 %v1174, 0.0
      %v1239 = vmax.f32 %v1175, 0.0
      %v1240 = vmax.f32 %v1176, 0.0
      %v1241 = vmax.f32 %v1177, 0.0
      %v1242 = vmax.f32 %v1178, 0.0
      %v1243 = vmax.f32 %v1179, 0.0
      %v1244 = vmax.f32 %v1180, 0.0
      %v1245 = vmax.f32 %v1181, 0.0
      %v1246 = vmax.f32 %v1182, 0.0
      %v1247 = vmax.f32 %v1183, 0.0
      %v1248 = vmax.f32 %v1184, 0.0
      %v1249 = vmax.f32 %v1185, 0.0
      %v1250 = vmax.f32 %v1186, 0.0
      %v1251 = vmax.f32 %v1187, 0.0
      %v1252 = vmax.f32 %v1188, 0.0
      %v1253 = vmax.f32 %v1189, 0.0
      %v1254 = vmax.f32 %v1190, 0.0
      %v1255 = vmax.f32 %v1191, 0.0
      %v1256 = vmax.f32 %v1192, 0.0
      %v1257 = vmax.f32 %v1193, 0.0
      %v1258 = vmax.f32 %v1194, 0.0
      %v1259 = vmax.f32 %v1195, 0.0
      %v1260 = vmax.f32 %v1196, 0.0
      %v1261 = vmax.f32 %v1197, 0.0
      %v1262 = vmax.f32 %v1198, 0.0
      %v1263 = vmax.f32 %v1199, 0.0
      %v1264 = vmax.f32 %v1200, 0.0
      %v1265 = vmax.f32 %v1201, 0.0
      %v1266 = vmax.f32 %v1202, 0.0
      %v1267 = vmax.f32 %v1203, 0.0
      %v1268 = vmax.f32 %v1204, 0.0
      %v1269 = vmax.f32 %v1205, 0.0
      %v1270 = vmax.f32 %v1206, 0.0
      %v1271 = vmax.f32 %v1207, 0.0
      %v1272 = vmax.f32 %v1208, 0.0
      %v1273 = vmax.f32 %v1209, 0.0
      %v1274 = vmax.f32 %v1210, 0.0
      %v1275 = vmax.f32 %v1211, 0.0
      %v1276 = vmax.f32 %v1212, 0.0
      %v1277 = vmax.f32 %v1213, 0.0
      %v1278 = vmax.f32 %v1214, 0.0
      %v1279 = vmax.f32 %v1215, 0.0
      %v1280 = vmax.f32 %v1216, 0.0
      %v1281 = vmax.f32 %v1217, 0.0
      %v1282 = vmax.f32 %v1218, 0.0
      %v1283 = vmax.f32 %v1219, 0.0
      %v1284 = vmax.f32 %v1220, 0.0
      %v1285 = vmax.f32 %v1221, 0.0
      %v1286 = vmax.f32 %v1222, 0.0
      %v1287 = vmax.f32 %v1223, 0.0
      %v1288 = vpack.c.bf16 %v1224, %v1224
      %v1289 = vpack.c.bf16 %v1225, %v1225
      %v1290 = vpack.c.bf16 %v1226, %v1226
      %v1291 = vpack.c.bf16 %v1227, %v1227
      %v1292 = vpack.c.bf16 %v1228, %v1228
      %v1293 = vpack.c.bf16 %v1229, %v1229
      %v1294 = vpack.c.bf16 %v1230, %v1230
      %v1295 = vpack.c.bf16 %v1231, %v1231
      %v1296 = vpack.c.bf16 %v1232, %v1232
      %v1297 = vpack.c.bf16 %v1233, %v1233
      %v1298 = vpack.c.bf16 %v1234, %v1234
      %v1299 = vpack.c.bf16 %v1235, %v1235
      %v1300 = vpack.c.bf16 %v1236, %v1236
      %v1301 = vpack.c.bf16 %v1237, %v1237
      %v1302 = vpack.c.bf16 %v1238, %v1238
      %v1303 = vpack.c.bf16 %v1239, %v1239
      %v1304 = vpack.c.bf16 %v1240, %v1240
      %v1305 = vpack.c.bf16 %v1241, %v1241
      %v1306 = vpack.c.bf16 %v1242, %v1242
      %v1307 = vpack.c.bf16 %v1243, %v1243
      %v1308 = vpack.c.bf16 %v1244, %v1244
      %v1309 = vpack.c.bf16 %v1245, %v1245
      %v1310 = vpack.c.bf16 %v1246, %v1246
      %v1311 = vpack.c.bf16 %v1247, %v1247
      %v1312 = vpack.c.bf16 %v1248, %v1248
      %v1313 = vpack.c.bf16 %v1249, %v1249
      %v1314 = vpack.c.bf16 %v1250, %v1250
      %v1315 = vpack.c.bf16 %v1251, %v1251
      %v1316 = vpack.c.bf16 %v1252, %v1252
      %v1317 = vpack.c.bf16 %v1253, %v1253
      %v1318 = vpack.c.bf16 %v1254, %v1254
      %v1319 = vpack.c.bf16 %v1255, %v1255
      %v1320 = vpack.c.bf16 %v1256, %v1256
      %v1321 = vpack.c.bf16 %v1257, %v1257
      %v1322 = vpack.c.bf16 %v1258, %v1258
      %v1323 = vpack.c.bf16 %v1259, %v1259
      %v1324 = vpack.c.bf16 %v1260, %v1260
      %v1325 = vpack.c.bf16 %v1261, %v1261
      %v1326 = vpack.c.bf16 %v1262, %v1262
      %v1327 = vpack.c.bf16 %v1263, %v1263
      %v1328 = vpack.c.bf16 %v1264, %v1264
      %v1329 = vpack.c.bf16 %v1265, %v1265
      %v1330 = vpack.c.bf16 %v1266, %v1266
      %v1331 = vpack.c.bf16 %v1267, %v1267
      %v1332 = vpack.c.bf16 %v1268, %v1268
      %v1333 = vpack.c.bf16 %v1269, %v1269
      %v1334 = vpack.c.bf16 %v1270, %v1270
      %v1335 = vpack.c.bf16 %v1271, %v1271
      %v1336 = vpack.c.bf16 %v1272, %v1272
      %v1337 = vpack.c.bf16 %v1273, %v1273
      %v1338 = vpack.c.bf16 %v1274, %v1274
      %v1339 = vpack.c.bf16 %v1275, %v1275
      %v1340 = vpack.c.bf16 %v1276, %v1276
      %v1341 = vpack.c.bf16 %v1277, %v1277
      %v1342 = vpack.c.bf16 %v1278, %v1278
      %v1343 = vpack.c.bf16 %v1279, %v1279
      %v1344 = vpack.c.bf16 %v1280, %v1280
      %v1345 = vpack.c.bf16 %v1281, %v1281
      %v1346 = vpack.c.bf16 %v1282, %v1282
      %v1347 = vpack.c.bf16 %v1283, %v1283
      %v1348 = vpack.c.bf16 %v1284, %v1284
      %v1349 = vpack.c.bf16 %v1285, %v1285
      %v1350 = vpack.c.bf16 %v1286, %v1286
      %v1351 = vpack.c.bf16 %v1287, %v1287
      %vm1352 = vcmask 257024
      %1353 = vst.msk [vmem:[%s202] sm:$0xf] %vm1352, %v1288
      %1354 = vst.msk [vmem:[%s202 + $0x4] sm:$0xf] %vm1352, %v1289
      %1355 = vst.msk [vmem:[%s202 + $0x8] sm:$0xf] %vm1352, %v1290
      %1356 = vst.msk [vmem:[%s202 + $0xc] sm:$0xf] %vm1352, %v1291
      %1357 = vst.msk [vmem:[%s202 + $0x10] sm:$0xf] %vm1352, %v1292
      %1358 = vst.msk [vmem:[%s202 + $0x14] sm:$0xf] %vm1352, %v1293
      %1359 = vst.msk [vmem:[%s202 + $0x18] sm:$0xf] %vm1352, %v1294
      %1360 = vst.msk [vmem:[%s202 + $0x1c] sm:$0xf] %vm1352, %v1295
      %1361 = vst.msk [vmem:[%s202 + $0x20] sm:$0xf] %vm1352, %v1296
      %1362 = vst.msk [vmem:[%s202 + $0x24] sm:$0xf] %vm1352, %v1297
      %1363 = vst.msk [vmem:[%s202 + $0x28] sm:$0xf] %vm1352, %v1298
      %1364 = vst.msk [vmem:[%s202 + $0x2c] sm:$0xf] %vm1352, %v1299
      %1365 = vst.msk [vmem:[%s202 + $0x30] sm:$0xf] %vm1352, %v1300
      %1366 = vst.msk [vmem:[%s202 + $0x34] sm:$0xf] %vm1352, %v1301
      %1367 = vst.msk [vmem:[%s202 + $0x38] sm:$0xf] %vm1352, %v1302
      %1368 = vst.msk [vmem:[%s202 + $0x3c] sm:$0xf] %vm1352, %v1303
      %1369 = vst.msk [vmem:[%s202 + $0x40] sm:$0xf] %vm1352, %v1304
      %1370 = vst.msk [vmem:[%s202 + $0x44] sm:$0xf] %vm1352, %v1305
      %1371 = vst.msk [vmem:[%s202 + $0x48] sm:$0xf] %vm1352, %v1306
      %1372 = vst.msk [vmem:[%s202 + $0x4c] sm:$0xf] %vm1352, %v1307
      %1373 = vst.msk [vmem:[%s202 + $0x50] sm:$0xf] %vm1352, %v1308
      %1374 = vst.msk [vmem:[%s202 + $0x54] sm:$0xf] %vm1352, %v1309
      %1375 = vst.msk [vmem:[%s202 + $0x58] sm:$0xf] %vm1352, %v1310
      %1376 = vst.msk [vmem:[%s202 + $0x5c] sm:$0xf] %vm1352, %v1311
      %1377 = vst.msk [vmem:[%s202 + $0x60] sm:$0xf] %vm1352, %v1312
      %1378 = vst.msk [vmem:[%s202 + $0x64] sm:$0xf] %vm1352, %v1313
      %1379 = vst.msk [vmem:[%s202 + $0x68] sm:$0xf] %vm1352, %v1314
      %1380 = vst.msk [vmem:[%s202 + $0x6c] sm:$0xf] %vm1352, %v1315
      %1381 = vst.msk [vmem:[%s202 + $0x70] sm:$0xf] %vm1352, %v1316
      %1382 = vst.msk [vmem:[%s202 + $0x74] sm:$0xf] %vm1352, %v1317
      %1383 = vst.msk [vmem:[%s202 + $0x78] sm:$0xf] %vm1352, %v1318
      %1384 = vst.msk [vmem:[%s202 + $0x7c] sm:$0xf] %vm1352, %v1319
      %1385 = vst.msk [vmem:[%s202 + $0x80] sm:$0xf] %vm1352, %v1320
      %1386 = vst.msk [vmem:[%s202 + $0x84] sm:$0xf] %vm1352, %v1321
      %1387 = vst.msk [vmem:[%s202 + $0x88] sm:$0xf] %vm1352, %v1322
      %1388 = vst.msk [vmem:[%s202 + $0x8c] sm:$0xf] %vm1352, %v1323
      %1389 = vst.msk [vmem:[%s202 + $0x90] sm:$0xf] %vm1352, %v1324
      %1390 = vst.msk [vmem:[%s202 + $0x94] sm:$0xf] %vm1352, %v1325
      %1391 = vst.msk [vmem:[%s202 + $0x98] sm:$0xf] %vm1352, %v1326
      %1392 = vst.msk [vmem:[%s202 + $0x9c] sm:$0xf] %vm1352, %v1327
      %1393 = vst.msk [vmem:[%s202 + $0xa0] sm:$0xf] %vm1352, %v1328
      %1394 = vst.msk [vmem:[%s202 + $0xa4] sm:$0xf] %vm1352, %v1329
      %1395 = vst.msk [vmem:[%s202 + $0xa8] sm:$0xf] %vm1352, %v1330
      %1396 = vst.msk [vmem:[%s202 + $0xac] sm:$0xf] %vm1352, %v1331
      %1397 = vst.msk [vmem:[%s202 + $0xb0] sm:$0xf] %vm1352, %v1332
      %1398 = vst.msk [vmem:[%s202 + $0xb4] sm:$0xf] %vm1352, %v1333
      %1399 = vst.msk [vmem:[%s202 + $0xb8] sm:$0xf] %vm1352, %v1334
      %1400 = vst.msk [vmem:[%s202 + $0xbc] sm:$0xf] %vm1352, %v1335
      %1401 = vst.msk [vmem:[%s202 + $0xc0] sm:$0xf] %vm1352, %v1336
      %1402 = vst.msk [vmem:[%s202 + $0xc4] sm:$0xf] %vm1352, %v1337
      %1403 = vst.msk [vmem:[%s202 + $0xc8] sm:$0xf] %vm1352, %v1338
      %1404 = vst.msk [vmem:[%s202 + $0xcc] sm:$0xf] %vm1352, %v1339
      %1405 = vst.msk [vmem:[%s202 + $0xd0] sm:$0xf] %vm1352, %v1340
      %1406 = vst.msk [vmem:[%s202 + $0xd4] sm:$0xf] %vm1352, %v1341
      %1407 = vst.msk [vmem:[%s202 + $0xd8] sm:$0xf] %vm1352, %v1342
      %1408 = vst.msk [vmem:[%s202 + $0xdc] sm:$0xf] %vm1352, %v1343
      %1409 = vst.msk [vmem:[%s202 + $0xe0] sm:$0xf] %vm1352, %v1344
      %1410 = vst.msk [vmem:[%s202 + $0xe4] sm:$0xf] %vm1352, %v1345
      %1411 = vst.msk [vmem:[%s202 + $0xe8] sm:$0xf] %vm1352, %v1346
      %1412 = vst.msk [vmem:[%s202 + $0xec] sm:$0xf] %vm1352, %v1347
      %1413 = vst.msk [vmem:[%s202 + $0xf0] sm:$0xf] %vm1352, %v1348
      %1414 = vst.msk [vmem:[%s202 + $0xf4] sm:$0xf] %vm1352, %v1349
      %1415 = vst.msk [vmem:[%s202 + $0xf8] sm:$0xf] %vm1352, %v1350
      %1416 = vst.msk [vmem:[%s202 + $0xfc] sm:$0xf] %vm1352, %v1351
      %s1417 = smul.u32 64, %s15
      %p1418 = scmp.lt.s32.totalorder %s1417, 127
      %s1419 = scalar_select %p1418, %s1417, 127
      %s1420 = smul.addr %s1419, 4
      %s1421 = scalar_lea.vmem %s4, %s1420
      // Predicated region
      $region37: #{localization_forward.5} parent=35 // pred_check
        %p1422 = pneg %p122
      $region38: #{localization_forward.5} parent=35 // pred_check_branch
        %1424 = sbr.rel (%p1422) target = $region40
      $region39: #{localization_forward.5} parent=35 // pred_region
        %s1425 = smul.u32 64, %s15
      $region40: #{localization_forward.5} parent=35 // pred_fallthru
        _
    $region36: #{localization_forward.5} parent=5 // pred_fallthru
      _
    %p1426 = scmp.le.s32.totalorder 2, %s10
    // Predicated region
    $region41: #{localization_forward.5} parent=5 // pred_check
      %p1427 = pneg %p1426
    $region42: #{localization_forward.5} parent=5 // pred_check_branch
      %1429 = sbr.rel (%p1427) target = $region44
    $region43: #{localization_forward.5} parent=5 // pred_region
      %s1430 = ssub.s32 %s10, 2
      // Predicated region
      $region45: #{localization_forward.5} parent=43 // pred_check
        %p1431 = pneg %p128
      $region46: #{localization_forward.5} parent=43 // pred_check_branch
        %1433 = sbr.rel (%p1431) target = $region48
      $region47: #{localization_forward.5} parent=43 // pred_region
        %s1434 = smul.u32 64, %s16
        %p1435 = scmp.lt.s32.totalorder %s1434, 127
        %s1436 = scalar_select %p1435, %s1434, 127
        %s1437 = smul.addr %s1436, 4
        %s1438 = scalar_lea.vmem %s4, %s1437
      $region48: #{localization_forward.5} parent=43 // pred_fallthru
        _
    $region44: #{localization_forward.5} parent=5 // pred_fallthru
      _
  $region6: #{localization_forward.5} parent=0 // loop_footer
    %s14 = sadd.s32 1, %s10
  $region7: #{localization_forward.5} parent=0 // loop_footer_branch
    %9 = sbr.rel target = $region3
  $region8: #{localization_forward.5} parent=0 // loop_exit
    _

// kernel: localization_forward.6
$region0: #{localization_forward.6}
  #allocation0 [shape = 'u32[]', space=smem, size = 0x4, offset = 0x4, fixed_abs, tag = 'smem constant byte address 0x4 - core index']
  #allocation1 [shape = 'u32[72,128]{1,0:T(1,128)}', space=vmem, size = 0x9000, scoped, tag = 'internal scratch']
  %s0 = inlined_call_operand.vmem [shape: bf16[1024,288], index: 0, kind: input, shape index: {}]
  %s1 = inlined_call_operand.vmem [shape: bf16[288,16], index: 1, kind: input, shape index: {}]
  %s2 = inlined_call_operand.vmem [shape: f32[1,16], index: 2, kind: input, shape index: {}]
  %s3 = inlined_call_operand.vmem [shape: f32[1,16], index: 3, kind: input, shape index: {}]
  %s4 = inlined_call_operand.vmem [shape: bf16[16,8], index: 4, kind: input, shape index: {}]
  %s5 = inlined_call_operand.vmem [shape: f32[1,8], index: 5, kind: input, shape index: {}]
  %s6 = inlined_call_operand.vmem [shape: f32[1024,8], index: 6, kind: output, shape index: {}]
  %s7 = sld [smem:[#allocation0]]
  $region57: #{localization_forward.6} parent=0
    _
  %s9 = ssub.s32 1, %s7
  %s10 = scalar_select 0, %s9, %s7
  loop: start=0, step=1, limit=4
  $region2: #{localization_forward.6} parent=0 // loop_pre_header
    _
  $region3: #{localization_forward.6} parent=0 // loop_header
    %s12 = sphi 0, %s16
    %p13 = scmp.ge.s32.totalorder %s12, 4
    %s22 = sphi 0, %s24
    %s25 = sphi 0, %s22
    %s26 = sphi 0, %s25
    %s42 = sphi 0, %s26
    %s46 = sphi 0, %s46
    %s48 = sphi 0, %s46
    %s49 = sphi 0, %s48
    %s63 = sphi 0, %s49
    %s67 = sphi 0, %s67
    %s69 = sphi 0, %s67
    %s70 = sphi 0, %s69
    %s84 = sphi 0, %s70
    %s88 = sphi 0, %s88
    %s90 = sphi 0, %s88
    %s91 = sphi 0, %s90
    %s105 = sphi 0, %s91
    %s109 = sphi 0, %s109
    %s111 = sphi 0, %s109
    %s112 = sphi 0, %s111
    %s126 = sphi 0, %s112
    %s130 = sphi 0, %s130
    %s132 = sphi 0, %s130
    %s133 = sphi 0, %s132
    %s147 = sphi 0, %s133
    %s153 = sphi 0, %s155
    %s156 = sphi 0, %s153
    %s157 = sphi 0, %s156
    %s173 = sphi 0, %s157
  $region4: #{localization_forward.6} parent=0 // loop_header_branch
    %15 = sbr.rel (%p13) target = $region8
  $region5: #{localization_forward.6} parent=0 // loop_body
    %s17 = ssub.s32 %s12, 1
    %s18 = ssub.s32 %s12, 2
    %s19 = sadd.s32 %s12, 1
    %s20 = ssub.s32 %s12, %s19
    %p21 = scmp.eq.s32.totalorder %s20, 0
    %s23 = sadd.s32 %s22, 1
    %s24 = scalar_select %p21, %s22, %s23
    %p27 = pneg %p21
    %p28 = scmp.eq.s32.totalorder %s12, 1
    %p29 = por %p27, %p28
    %p30 = scmp.ne.s32.totalorder %s22, %s25
    %p31 = scmp.eq.s32.totalorder %s12, 0
    %p32 = por %p30, %p31
    %p33 = scmp.ne.s32.totalorder %s22, %s25
    %p34 = scmp.eq.s32.totalorder %s17, 1
    %p35 = por %p33, %p34
    %p36 = scmp.ne.s32.totalorder %s25, %s26
    %p37 = scmp.eq.s32.totalorder %s17, 0
    %p38 = por %p36, %p37
    %p39 = scmp.ne.s32.totalorder %s25, %s26
    %p40 = scmp.eq.s32.totalorder %s18, 1
    %p41 = por %p39, %p40
    %p43 = scmp.ne.s32.totalorder %s26, %s42
    %p44 = scmp.eq.s32.totalorder %s18, 0
    %p45 = por %p43, %p44
    %s47 = sadd.s32 %s46, 1
    %p50 = scmp.eq.s32.totalorder %s12, 1
    %p51 = scmp.ne.s32.totalorder %s46, %s48
    %p52 = scmp.eq.s32.totalorder %s12, 0
    %p53 = por %p51, %p52
    %p54 = scmp.ne.s32.totalorder %s46, %s48
    %p55 = scmp.eq.s32.totalorder %s17, 1
    %p56 = por %p54, %p55
    %p57 = scmp.ne.s32.totalorder %s48, %s49
    %p58 = scmp.eq.s32.totalorder %s17, 0
    %p59 = por %p57, %p58
    %p60 = scmp.ne.s32.totalorder %s48, %s49
    %p61 = scmp.eq.s32.totalorder %s18, 1
    %p62 = por %p60, %p61
    %p64 = scmp.ne.s32.totalorder %s49, %s63
    %p65 = scmp.eq.s32.totalorder %s18, 0
    %p66 = por %p64, %p65
    %s68 = sadd.s32 %s67, 1
    %p71 = scmp.eq.s32.totalorder %s12, 1
    %p72 = scmp.ne.s32.totalorder %s67, %s69
    %p73 = scmp.eq.s32.totalorder %s12, 0
    %p74 = por %p72, %p73
    %p75 = scmp.ne.s32.totalorder %s67, %s69
    %p76 = scmp.eq.s32.totalorder %s17, 1
    %p77 = por %p75, %p76
    %p78 = scmp.ne.s32.totalorder %s69, %s70
    %p79 = scmp.eq.s32.totalorder %s17, 0
    %p80 = por %p78, %p79
    %p81 = scmp.ne.s32.totalorder %s69, %s70
    %p82 = scmp.eq.s32.totalorder %s18, 1
    %p83 = por %p81, %p82
    %p85 = scmp.ne.s32.totalorder %s70, %s84
    %p86 = scmp.eq.s32.totalorder %s18, 0
    %p87 = por %p85, %p86
    %s89 = sadd.s32 %s88, 1
    %p92 = scmp.eq.s32.totalorder %s12, 1
    %p93 = scmp.ne.s32.totalorder %s88, %s90
    %p94 = scmp.eq.s32.totalorder %s12, 0
    %p95 = por %p93, %p94
    %p96 = scmp.ne.s32.totalorder %s88, %s90
    %p97 = scmp.eq.s32.totalorder %s17, 1
    %p98 = por %p96, %p97
    %p99 = scmp.ne.s32.totalorder %s90, %s91
    %p100 = scmp.eq.s32.totalorder %s17, 0
    %p101 = por %p99, %p100
    %p102 = scmp.ne.s32.totalorder %s90, %s91
    %p103 = scmp.eq.s32.totalorder %s18, 1
    %p104 = por %p102, %p103
    %p106 = scmp.ne.s32.totalorder %s91, %s105
    %p107 = scmp.eq.s32.totalorder %s18, 0
    %p108 = por %p106, %p107
    %s110 = sadd.s32 %s109, 1
    %p113 = scmp.eq.s32.totalorder %s12, 1
    %p114 = scmp.ne.s32.totalorder %s109, %s111
    %p115 = scmp.eq.s32.totalorder %s12, 0
    %p116 = por %p114, %p115
    %p117 = scmp.ne.s32.totalorder %s109, %s111
    %p118 = scmp.eq.s32.totalorder %s17, 1
    %p119 = por %p117, %p118
    %p120 = scmp.ne.s32.totalorder %s111, %s112
    %p121 = scmp.eq.s32.totalorder %s17, 0
    %p122 = por %p120, %p121
    %p123 = scmp.ne.s32.totalorder %s111, %s112
    %p124 = scmp.eq.s32.totalorder %s18, 1
    %p125 = por %p123, %p124
    %p127 = scmp.ne.s32.totalorder %s112, %s126
    %p128 = scmp.eq.s32.totalorder %s18, 0
    %p129 = por %p127, %p128
    %s131 = sadd.s32 %s130, 1
    %p134 = scmp.eq.s32.totalorder %s12, 1
    %p135 = scmp.ne.s32.totalorder %s130, %s132
    %p136 = scmp.eq.s32.totalorder %s12, 0
    %p137 = por %p135, %p136
    %p138 = scmp.ne.s32.totalorder %s130, %s132
    %p139 = scmp.eq.s32.totalorder %s17, 1
    %p140 = por %p138, %p139
    %p141 = scmp.ne.s32.totalorder %s132, %s133
    %p142 = scmp.eq.s32.totalorder %s17, 0
    %p143 = por %p141, %p142
    %p144 = scmp.ne.s32.totalorder %s132, %s133
    %p145 = scmp.eq.s32.totalorder %s18, 1
    %p146 = por %p144, %p145
    %p148 = scmp.ne.s32.totalorder %s133, %s147
    %p149 = scmp.eq.s32.totalorder %s18, 0
    %p150 = por %p148, %p149
    %s151 = ssub.s32 %s12, %s19
    %p152 = scmp.eq.s32.totalorder %s151, 0
    %s154 = sadd.s32 %s153, 1
    %s155 = scalar_select %p152, %s153, %s154
    %p158 = pneg %p152
    %p159 = scmp.eq.s32.totalorder %s12, 1
    %p160 = por %p158, %p159
    %p161 = scmp.ne.s32.totalorder %s153, %s156
    %p162 = scmp.eq.s32.totalorder %s12, 0
    %p163 = por %p161, %p162
    %p164 = scmp.ne.s32.totalorder %s153, %s156
    %p165 = scmp.eq.s32.totalorder %s17, 1
    %p166 = por %p164, %p165
    %p167 = scmp.ne.s32.totalorder %s156, %s157
    %p168 = scmp.eq.s32.totalorder %s17, 0
    %p169 = por %p167, %p168
    %p170 = scmp.ne.s32.totalorder %s156, %s157
    %p171 = scmp.eq.s32.totalorder %s18, 1
    %p172 = por %p170, %p171
    %p174 = scmp.ne.s32.totalorder %s157, %s173
    %p175 = scmp.eq.s32.totalorder %s18, 0
    %p176 = por %p174, %p175
    %p177 = scmp.le.s32.totalorder 1, %s12
    %p178 = scmp.lt.s32.totalorder %s12, 3
    %p179 = pnand %p177, %p178
    %p180 = pneg %p179
    // Predicated region
    $region9: #{localization_forward.6} parent=5 // pred_check
      _
    $region10: #{localization_forward.6} parent=5 // pred_check_branch
      %182 = sbr.rel (%p179) target = $region12
    $region11: #{localization_forward.6} parent=5 // pred_region
      %s183 = ssub.s32 %s12, 1
      // Predicated region
      $region13: #{localization_forward.6} parent=11 // pred_check
        %p184 = pneg %p59
      $region14: #{localization_forward.6} parent=11 // pred_check_branch
        %186 = sbr.rel (%p184) target = $region16
      $region15: #{localization_forward.6} parent=11 // pred_region
        _
      $region16: #{localization_forward.6} parent=11 // pred_fallthru
        _
      // Predicated region
      $region17: #{localization_forward.6} parent=11 // pred_check
        %p187 = pneg %p80
      $region18: #{localization_forward.6} parent=11 // pred_check_branch
        %189 = sbr.rel (%p187) target = $region20
      $region19: #{localization_forward.6} parent=11 // pred_region
        _
      $region20: #{localization_forward.6} parent=11 // pred_fallthru
        _
      // Predicated region
      $region21: #{localization_forward.6} parent=11 // pred_check
        %p190 = pneg %p101
      $region22: #{localization_forward.6} parent=11 // pred_check_branch
        %192 = sbr.rel (%p190) target = $region24
      $region23: #{localization_forward.6} parent=11 // pred_region
        _
      $region24: #{localization_forward.6} parent=11 // pred_fallthru
        _
      // Predicated region
      $region25: #{localization_forward.6} parent=11 // pred_check
        %p193 = pneg %p122
      $region26: #{localization_forward.6} parent=11 // pred_check_branch
        %195 = sbr.rel (%p193) target = $region28
      $region27: #{localization_forward.6} parent=11 // pred_region
        _
      $region28: #{localization_forward.6} parent=11 // pred_fallthru
        _
      // Predicated region
      $region29: #{localization_forward.6} parent=11 // pred_check
        %p196 = pneg %p143
      $region30: #{localization_forward.6} parent=11 // pred_check_branch
        %198 = sbr.rel (%p196) target = $region32
      $region31: #{localization_forward.6} parent=11 // pred_region
        _
      $region32: #{localization_forward.6} parent=11 // pred_fallthru
        _
    $region12: #{localization_forward.6} parent=5 // pred_fallthru
      _
    %p199 = scmp.lt.s32.totalorder %s12, 2
    // Predicated region
    $region33: #{localization_forward.6} parent=5 // pred_check
      %p200 = pneg %p199
    $region34: #{localization_forward.6} parent=5 // pred_check_branch
      %202 = sbr.rel (%p200) target = $region36
    $region35: #{localization_forward.6} parent=5 // pred_region
      // Predicated region
      $region37: #{localization_forward.6} parent=35 // pred_check
        %p203 = pneg %p32
      $region38: #{localization_forward.6} parent=35 // pred_check_branch
        %205 = sbr.rel (%p203) target = $region40
      $region39: #{localization_forward.6} parent=35 // pred_region
        %s206 = smul.u32 64, %s12
        %p207 = scmp.lt.s32.totalorder %s206, 127
        %s208 = scalar_select %p207, %s206, 127
        %s209 = smul.addr %s208, 3
        %s210 = smul.addr %s209, 4
        %s211 = scalar_lea.vmem %s0, %s210
        %s212 = smul.u32 64, %s12
      $region40: #{localization_forward.6} parent=35 // pred_fallthru
        _
    $region36: #{localization_forward.6} parent=5 // pred_fallthru
      _
    %p213 = scmp.le.s32.totalorder 1, %s12
    %p214 = scmp.lt.s32.totalorder %s12, 3
    %p215 = pnand %p213, %p214
    %p216 = pneg %p215
    // Predicated region
    $region41: #{localization_forward.6} parent=5 // pred_check
      _
    $region42: #{localization_forward.6} parent=5 // pred_check_branch
      %218 = sbr.rel (%p215) target = $region44
    $region43: #{localization_forward.6} parent=5 // pred_region
      %s219 = ssub.s32 %s12, 1
      %s220 = smul.u32 64, %s17
      %p221 = scmp.lt.s32.totalorder %s220, 127
      %s222 = scalar_select %p221, %s220, 127
      %s223 = smul.addr %s222, 3
      %s224 = smul.addr %s223, 4
      %s225 = scalar_lea.vmem %s0, %s224
      %p226 = pneg %p38
      %p227 = pneg %p35
      %p228 = pneg %p59
      %p229 = pneg %p56
      %p230 = pneg %p80
      %p231 = pneg %p77
      %p232 = pneg %p101
      %p233 = pneg %p98
      %p234 = pneg %p122
      %p235 = pneg %p119
      %p236 = pneg %p143
      %p237 = pneg %p140
      %p238 = pneg %p169
      %p239 = pneg %p166
      %s240 = smul.u32 64, %s17
      %p241 = scmp.lt.s32.totalorder %s240, 127
      %s242 = scalar_select %p241, %s240, 127
      %s243 = smul.addr %s242, 8
      %s244 = scalar_lea.vmem %s6, %s243
      %s245 = smul.u32 64, %s17
      %p246 = scmp.lt.s32.totalorder %s245, 127
      %s247 = scalar_select %p246, %s245, 127
      %s248 = smul.addr %s247, 3
      %s249 = smul.addr %s248, 4
      %s250 = scalar_lea.vmem %s0, %s249
      %s251 = smul.u32 64, %s17
      %s252 = smul.u32 64, %s17
      %p253 = scmp.lt.s32.totalorder %s252, 127
      %s254 = scalar_select %p253, %s252, 127
      %s255 = smul.addr %s254, 8
      %s256 = scalar_lea.vmem %s6, %s255
      %s257 = smul.u32 64, %s17
      %v259 = vld [vmem:[%s250] sm:$0xff]
      %v260 = vld [vmem:[%s250 + $0x8] sm:$0xf]
      %v261 = vld [vmem:[%s250 + $0xc] sm:$0xff]
      %v262 = vld [vmem:[%s250 + $0x14] sm:$0xf]
      %v263 = vld [vmem:[%s250 + $0x18] sm:$0xff]
      %v264 = vld [vmem:[%s250 + $0x20] sm:$0xf]
      %v265 = vld [vmem:[%s250 + $0x24] sm:$0xff]
      %v266 = vld [vmem:[%s250 + $0x2c] sm:$0xf]
      %v267 = vld [vmem:[%s250 + $0x30] sm:$0xff]
      %v268 = vld [vmem:[%s250 + $0x38] sm:$0xf]
      %v269 = vld [vmem:[%s250 + $0x3c] sm:$0xff]
      %v270 = vld [vmem:[%s250 + $0x44] sm:$0xf]
      %v271 = vld [vmem:[%s250 + $0x48] sm:$0xff]
      %v272 = vld [vmem:[%s250 + $0x50] sm:$0xf]
      %v273 = vld [vmem:[%s250 + $0x54] sm:$0xff]
      %v274 = vld [vmem:[%s250 + $0x5c] sm:$0xf]
      %v275 = vld [vmem:[%s250 + $0x60] sm:$0xff]
      %v276 = vld [vmem:[%s250 + $0x68] sm:$0xf]
      %v277 = vld [vmem:[%s250 + $0x6c] sm:$0xff]
      %v278 = vld [vmem:[%s250 + $0x74] sm:$0xf]
      %v279 = vld [vmem:[%s250 + $0x78] sm:$0xff]
      %v280 = vld [vmem:[%s250 + $0x80] sm:$0xf]
      %v281 = vld [vmem:[%s250 + $0x84] sm:$0xff]
      %v282 = vld [vmem:[%s250 + $0x8c] sm:$0xf]
      %v283 = vld [vmem:[%s250 + $0x90] sm:$0xff]
      %v284 = vld [vmem:[%s250 + $0x98] sm:$0xf]
      %v285 = vld [vmem:[%s250 + $0x9c] sm:$0xff]
      %v286 = vld [vmem:[%s250 + $0xa4] sm:$0xf]
      %v287 = vld [vmem:[%s250 + $0xa8] sm:$0xff]
      %v288 = vld [vmem:[%s250 + $0xb0] sm:$0xf]
      %v289 = vld [vmem:[%s250 + $0xb4] sm:$0xff]
      %v290 = vld [vmem:[%s250 + $0xbc] sm:$0xf]
      %v291 = vld [vmem:[%s250 + $0xc0] sm:$0xff]
      %v292 = vld [vmem:[%s250 + $0xc8] sm:$0xf]
      %v293 = vld [vmem:[%s250 + $0xcc] sm:$0xff]
      %v294 = vld [vmem:[%s250 + $0xd4] sm:$0xf]
      %v295 = vld [vmem:[%s250 + $0xd8] sm:$0xff]
      %v296 = vld [vmem:[%s250 + $0xe0] sm:$0xf]
      %v297 = vld [vmem:[%s250 + $0xe4] sm:$0xff]
      %v298 = vld [vmem:[%s250 + $0xec] sm:$0xf]
      %v299 = vld [vmem:[%s250 + $0xf0] sm:$0xff]
      %v300 = vld [vmem:[%s250 + $0xf8] sm:$0xf]
      %v301 = vld [vmem:[%s250 + $0xfc] sm:$0xff]
      %v302 = vld [vmem:[%s250 + $0x104] sm:$0xf]
      %v303 = vld [vmem:[%s250 + $0x108] sm:$0xff]
      %v304 = vld [vmem:[%s250 + $0x110] sm:$0xf]
      %v305 = vld [vmem:[%s250 + $0x114] sm:$0xff]
      %v306 = vld [vmem:[%s250 + $0x11c] sm:$0xf]
      %v307 = vld [vmem:[%s250 + $0x120] sm:$0xff]
      %v308 = vld [vmem:[%s250 + $0x128] sm:$0xf]
      %v309 = vld [vmem:[%s250 + $0x12c] sm:$0xff]
      %v310 = vld [vmem:[%s250 + $0x134] sm:$0xf]
      %v311 = vld [vmem:[%s250 + $0x138] sm:$0xff]
      %v312 = vld [vmem:[%s250 + $0x140] sm:$0xf]
      %v313 = vld [vmem:[%s250 + $0x144] sm:$0xff]
      %v314 = vld [vmem:[%s250 + $0x14c] sm:$0xf]
      %v315 = vld [vmem:[%s250 + $0x150] sm:$0xff]
      %v316 = vld [vmem:[%s250 + $0x158] sm:$0xf]
      %v317 = vld [vmem:[%s250 + $0x15c] sm:$0xff]
      %v318 = vld [vmem:[%s250 + $0x164] sm:$0xf]
      %v319 = vld [vmem:[%s250 + $0x168] sm:$0xff]
      %v320 = vld [vmem:[%s250 + $0x170] sm:$0xf]
      %v321 = vld [vmem:[%s250 + $0x174] sm:$0xff]
      %v322 = vld [vmem:[%s250 + $0x17c] sm:$0xf]
      %v323 = vld [vmem:[%s250 + $0x180] sm:$0xff]
      %v324 = vld [vmem:[%s250 + $0x188] sm:$0xf]
      %v325 = vld [vmem:[%s250 + $0x18c] sm:$0xff]
      %v326 = vld [vmem:[%s250 + $0x194] sm:$0xf]
      %v327 = vld [vmem:[%s250 + $0x198] sm:$0xff]
      %v328 = vld [vmem:[%s250 + $0x1a0] sm:$0xf]
      %v329 = vld [vmem:[%s250 + $0x1a4] sm:$0xff]
      %v330 = vld [vmem:[%s250 + $0x1ac] sm:$0xf]
      %v331 = vld [vmem:[%s250 + $0x1b0] sm:$0xff]
      %v332 = vld [vmem:[%s250 + $0x1b8] sm:$0xf]
      %v333 = vld [vmem:[%s250 + $0x1bc] sm:$0xff]
      %v334 = vld [vmem:[%s250 + $0x1c4] sm:$0xf]
      %v335 = vld [vmem:[%s250 + $0x1c8] sm:$0xff]
      %v336 = vld [vmem:[%s250 + $0x1d0] sm:$0xf]
      %v337 = vld [vmem:[%s250 + $0x1d4] sm:$0xff]
      %v338 = vld [vmem:[%s250 + $0x1dc] sm:$0xf]
      %v339 = vld [vmem:[%s250 + $0x1e0] sm:$0xff]
      %v340 = vld [vmem:[%s250 + $0x1e8] sm:$0xf]
      %v341 = vld [vmem:[%s250 + $0x1ec] sm:$0xff]
      %v342 = vld [vmem:[%s250 + $0x1f4] sm:$0xf]
      %v343 = vld [vmem:[%s250 + $0x1f8] sm:$0xff]
      %v344 = vld [vmem:[%s250 + $0x200] sm:$0xf]
      %v345 = vld [vmem:[%s250 + $0x204] sm:$0xff]
      %v346 = vld [vmem:[%s250 + $0x20c] sm:$0xf]
      %v347 = vld [vmem:[%s250 + $0x210] sm:$0xff]
      %v348 = vld [vmem:[%s250 + $0x218] sm:$0xf]
      %v349 = vld [vmem:[%s250 + $0x21c] sm:$0xff]
      %v350 = vld [vmem:[%s250 + $0x224] sm:$0xf]
      %v351 = vld [vmem:[%s250 + $0x228] sm:$0xff]
      %v352 = vld [vmem:[%s250 + $0x230] sm:$0xf]
      %v353 = vld [vmem:[%s250 + $0x234] sm:$0xff]
      %v354 = vld [vmem:[%s250 + $0x23c] sm:$0xf]
      %v355 = vld [vmem:[%s250 + $0x240] sm:$0xff]
      %v356 = vld [vmem:[%s250 + $0x248] sm:$0xf]
      %v357 = vld [vmem:[%s250 + $0x24c] sm:$0xff]
      %v358 = vld [vmem:[%s250 + $0x254] sm:$0xf]
      %v359 = vld [vmem:[%s250 + $0x258] sm:$0xff]
      %v360 = vld [vmem:[%s250 + $0x260] sm:$0xf]
      %v361 = vld [vmem:[%s250 + $0x264] sm:$0xff]
      %v362 = vld [vmem:[%s250 + $0x26c] sm:$0xf]
      %v363 = vld [vmem:[%s250 + $0x270] sm:$0xff]
      %v364 = vld [vmem:[%s250 + $0x278] sm:$0xf]
      %v365 = vld [vmem:[%s250 + $0x27c] sm:$0xff]
      %v366 = vld [vmem:[%s250 + $0x284] sm:$0xf]
      %v367 = vld [vmem:[%s250 + $0x288] sm:$0xff]
      %v368 = vld [vmem:[%s250 + $0x290] sm:$0xf]
      %v369 = vld [vmem:[%s250 + $0x294] sm:$0xff]
      %v370 = vld [vmem:[%s250 + $0x29c] sm:$0xf]
      %v371 = vld [vmem:[%s250 + $0x2a0] sm:$0xff]
      %v372 = vld [vmem:[%s250 + $0x2a8] sm:$0xf]
      %v373 = vld [vmem:[%s250 + $0x2ac] sm:$0xff]
      %v374 = vld [vmem:[%s250 + $0x2b4] sm:$0xf]
      %v375 = vld [vmem:[%s250 + $0x2b8] sm:$0xff]
      %v376 = vld [vmem:[%s250 + $0x2c0] sm:$0xf]
      %v377 = vld [vmem:[%s250 + $0x2c4] sm:$0xff]
      %v378 = vld [vmem:[%s250 + $0x2cc] sm:$0xf]
      %v379 = vld [vmem:[%s250 + $0x2d0] sm:$0xff]
      %v380 = vld [vmem:[%s250 + $0x2d8] sm:$0xf]
      %v381 = vld [vmem:[%s250 + $0x2dc] sm:$0xff]
      %v382 = vld [vmem:[%s250 + $0x2e4] sm:$0xf]
      %v383 = vld [vmem:[%s250 + $0x2e8] sm:$0xff]
      %v384 = vld [vmem:[%s250 + $0x2f0] sm:$0xf]
      %v385 = vld [vmem:[%s250 + $0x2f4] sm:$0xff]
      %v386 = vld [vmem:[%s250 + $0x2fc] sm:$0xf]
      %v387 = vld [vmem:[%s1] sm:$0xf]
      %v388 = vld [vmem:[%s1 + $0x4] sm:$0xf]
      %v389 = vld [vmem:[%s1 + $0x8] sm:$0xf]
      %v390 = vld [vmem:[%s1 + $0xc] sm:$0xf]
      %v391 = vld [vmem:[%s1 + $0x10] sm:$0xf]
      %v392 = vld [vmem:[%s1 + $0x14] sm:$0xf]
      %v393 = vld [vmem:[%s1 + $0x18] sm:$0xf]
      %v394 = vld [vmem:[%s1 + $0x1c] sm:$0xf]
      %v395 = vld [vmem:[%s1 + $0x20] sm:$0xf]
      %v396 = vld [vmem:[%s1 + $0x24] sm:$0xf]
      %v397 = vld [vmem:[%s1 + $0x28] sm:$0xf]
      %v398 = vld [vmem:[%s1 + $0x2c] sm:$0xf]
      %v399 = vld [vmem:[%s1 + $0x30] sm:$0xf]
      %v400 = vld [vmem:[%s1 + $0x34] sm:$0xf]
      %v401 = vld [vmem:[%s1 + $0x38] sm:$0xf]
      %v402 = vld [vmem:[%s1 + $0x3c] sm:$0xf]
      %v403 = vld [vmem:[%s1 + $0x40] sm:$0xf]
      %v404 = vld [vmem:[%s1 + $0x44] sm:$0xf]
      %v405 = vld [vmem:[%s1 + $0x48] sm:$0xf]
      %v406 = vld [vmem:[%s1 + $0x4c] sm:$0xf]
      %v407 = vld [vmem:[%s1 + $0x50] sm:$0xf]
      %v408 = vld [vmem:[%s1 + $0x54] sm:$0xf]
      %v409 = vld [vmem:[%s1 + $0x58] sm:$0xf]
      %v410 = vld [vmem:[%s1 + $0x5c] sm:$0xf]
      %v411 = vld [vmem:[%s1 + $0x60] sm:$0xf]
      %v412 = vld [vmem:[%s1 + $0x64] sm:$0xf]
      %v413 = vld [vmem:[%s1 + $0x68] sm:$0xf]
      %v414 = vld [vmem:[%s1 + $0x6c] sm:$0xf]
      %v415 = vld [vmem:[%s1 + $0x70] sm:$0xf]
      %v416 = vld [vmem:[%s1 + $0x74] sm:$0xf]
      %v417 = vld [vmem:[%s1 + $0x78] sm:$0xf]
      %v418 = vld [vmem:[%s1 + $0x7c] sm:$0xf]
      %v419 = vld [vmem:[%s1 + $0x80] sm:$0xf]
      %v420 = vld [vmem:[%s1 + $0x84] sm:$0xf]
      %v421 = vld [vmem:[%s1 + $0x88] sm:$0xf]
      %v422 = vld [vmem:[%s1 + $0x8c] sm:$0xf]
      %v551 = vunpack.c.l.b16 %v259
      %v552 = vunpack.c.h.b16 %v259
      %v553 = vunpack.c.l.b16 %v260
      %v554 = vunpack.c.l.b16 %v261
      %v555 = vunpack.c.h.b16 %v261
      %v556 = vunpack.c.l.b16 %v262
      %v557 = vunpack.c.l.b16 %v263
      %v558 = vunpack.c.h.b16 %v263
      %v559 = vunpack.c.l.b16 %v264
      %v560 = vunpack.c.l.b16 %v265
      %v561 = vunpack.c.h.b16 %v265
      %v562 = vunpack.c.l.b16 %v266
      %v563 = vunpack.c.l.b16 %v267
      %v564 = vunpack.c.h.b16 %v267
      %v565 = vunpack.c.l.b16 %v268
      %v566 = vunpack.c.l.b16 %v269
      %v567 = vunpack.c.h.b16 %v269
      %v568 = vunpack.c.l.b16 %v270
      %v569 = vunpack.c.l.b16 %v271
      %v570 = vunpack.c.h.b16 %v271
      %v571 = vunpack.c.l.b16 %v272
      %v572 = vunpack.c.l.b16 %v273
      %v573 = vunpack.c.h.b16 %v273
      %v574 = vunpack.c.l.b16 %v274
      %v575 = vunpack.c.l.b16 %v275
      %v576 = vunpack.c.h.b16 %v275
      %v577 = vunpack.c.l.b16 %v276
      %v578 = vunpack.c.l.b16 %v277
      %v579 = vunpack.c.h.b16 %v277
      %v580 = vunpack.c.l.b16 %v278
      %v581 = vunpack.c.l.b16 %v279
      %v582 = vunpack.c.h.b16 %v279
      %v583 = vunpack.c.l.b16 %v280
      %v584 = vunpack.c.l.b16 %v281
      %v585 = vunpack.c.h.b16 %v281
      %v586 = vunpack.c.l.b16 %v282
      %v587 = vunpack.c.l.b16 %v283
      %v588 = vunpack.c.h.b16 %v283
      %v589 = vunpack.c.l.b16 %v284
      %v590 = vunpack.c.l.b16 %v285
      %v591 = vunpack.c.h.b16 %v285
      %v592 = vunpack.c.l.b16 %v286
      %v593 = vunpack.c.l.b16 %v287
      %v594 = vunpack.c.h.b16 %v287
      %v595 = vunpack.c.l.b16 %v288
      %v596 = vunpack.c.l.b16 %v289
      %v597 = vunpack.c.h.b16 %v289
      %v598 = vunpack.c.l.b16 %v290
      %v599 = vunpack.c.l.b16 %v291
      %v600 = vunpack.c.h.b16 %v291
      %v601 = vunpack.c.l.b16 %v292
      %v602 = vunpack.c.l.b16 %v293
      %v603 = vunpack.c.h.b16 %v293
      %v604 = vunpack.c.l.b16 %v294
      %v605 = vunpack.c.l.b16 %v295
      %v606 = vunpack.c.h.b16 %v295
      %v607 = vunpack.c.l.b16 %v296
      %v608 = vunpack.c.l.b16 %v297
      %v609 = vunpack.c.h.b16 %v297
      %v610 = vunpack.c.l.b16 %v298
      %v611 = vunpack.c.l.b16 %v299
      %v612 = vunpack.c.h.b16 %v299
      %v613 = vunpack.c.l.b16 %v300
      %v614 = vunpack.c.l.b16 %v301
      %v615 = vunpack.c.h.b16 %v301
      %v616 = vunpack.c.l.b16 %v302
      %v617 = vunpack.c.l.b16 %v303
      %v618 = vunpack.c.h.b16 %v303
      %v619 = vunpack.c.l.b16 %v304
      %v620 = vunpack.c.l.b16 %v305
      %v621 = vunpack.c.h.b16 %v305
      %v622 = vunpack.c.l.b16 %v306
      %v623 = vunpack.c.l.b16 %v307
      %v624 = vunpack.c.h.b16 %v307
      %v625 = vunpack.c.l.b16 %v308
      %v626 = vunpack.c.l.b16 %v309
      %v627 = vunpack.c.h.b16 %v309
      %v628 = vunpack.c.l.b16 %v310
      %v629 = vunpack.c.l.b16 %v311
      %v630 = vunpack.c.h.b16 %v311
      %v631 = vunpack.c.l.b16 %v312
      %v632 = vunpack.c.l.b16 %v313
      %v633 = vunpack.c.h.b16 %v313
      %v634 = vunpack.c.l.b16 %v314
      %v635 = vunpack.c.l.b16 %v315
      %v636 = vunpack.c.h.b16 %v315
      %v637 = vunpack.c.l.b16 %v316
      %v638 = vunpack.c.l.b16 %v317
      %v639 = vunpack.c.h.b16 %v317
      %v640 = vunpack.c.l.b16 %v318
      %v641 = vunpack.c.l.b16 %v319
      %v642 = vunpack.c.h.b16 %v319
      %v643 = vunpack.c.l.b16 %v320
      %v644 = vunpack.c.l.b16 %v321
      %v645 = vunpack.c.h.b16 %v321
      %v646 = vunpack.c.l.b16 %v322
      %v647 = vunpack.c.l.b16 %v323
      %v648 = vunpack.c.h.b16 %v323
      %v649 = vunpack.c.l.b16 %v324
      %v650 = vunpack.c.l.b16 %v325
      %v651 = vunpack.c.h.b16 %v325
      %v652 = vunpack.c.l.b16 %v326
      %v653 = vunpack.c.l.b16 %v327
      %v654 = vunpack.c.h.b16 %v327
      %v655 = vunpack.c.l.b16 %v328
      %v656 = vunpack.c.l.b16 %v329
      %v657 = vunpack.c.h.b16 %v329
      %v658 = vunpack.c.l.b16 %v330
      %v659 = vunpack.c.l.b16 %v331
      %v660 = vunpack.c.h.b16 %v331
      %v661 = vunpack.c.l.b16 %v332
      %v662 = vunpack.c.l.b16 %v333
      %v663 = vunpack.c.h.b16 %v333
      %v664 = vunpack.c.l.b16 %v334
      %v665 = vunpack.c.l.b16 %v335
      %v666 = vunpack.c.h.b16 %v335
      %v667 = vunpack.c.l.b16 %v336
      %v668 = vunpack.c.l.b16 %v337
      %v669 = vunpack.c.h.b16 %v337
      %v670 = vunpack.c.l.b16 %v338
      %v671 = vunpack.c.l.b16 %v339
      %v672 = vunpack.c.h.b16 %v339
      %v673 = vunpack.c.l.b16 %v340
      %v674 = vunpack.c.l.b16 %v341
      %v675 = vunpack.c.h.b16 %v341
      %v676 = vunpack.c.l.b16 %v342
      %v677 = vunpack.c.l.b16 %v343
      %v678 = vunpack.c.h.b16 %v343
      %v679 = vunpack.c.l.b16 %v344
      %v680 = vunpack.c.l.b16 %v345
      %v681 = vunpack.c.h.b16 %v345
      %v682 = vunpack.c.l.b16 %v346
      %v683 = vunpack.c.l.b16 %v347
      %v684 = vunpack.c.h.b16 %v347
      %v685 = vunpack.c.l.b16 %v348
      %v686 = vunpack.c.l.b16 %v349
      %v687 = vunpack.c.h.b16 %v349
      %v688 = vunpack.c.l.b16 %v350
      %v689 = vunpack.c.l.b16 %v351
      %v690 = vunpack.c.h.b16 %v351
      %v691 = vunpack.c.l.b16 %v352
      %v692 = vunpack.c.l.b16 %v353
      %v693 = vunpack.c.h.b16 %v353
      %v694 = vunpack.c.l.b16 %v354
      %v695 = vunpack.c.l.b16 %v355
      %v696 = vunpack.c.h.b16 %v355
      %v697 = vunpack.c.l.b16 %v356
      %v698 = vunpack.c.l.b16 %v357
      %v699 = vunpack.c.h.b16 %v357
      %v700 = vunpack.c.l.b16 %v358
      %v701 = vunpack.c.l.b16 %v359
      %v702 = vunpack.c.h.b16 %v359
      %v703 = vunpack.c.l.b16 %v360
      %v704 = vunpack.c.l.b16 %v361
      %v705 = vunpack.c.h.b16 %v361
      %v706 = vunpack.c.l.b16 %v362
      %v707 = vunpack.c.l.b16 %v363
      %v708 = vunpack.c.h.b16 %v363
      %v709 = vunpack.c.l.b16 %v364
      %v710 = vunpack.c.l.b16 %v365
      %v711 = vunpack.c.h.b16 %v365
      %v712 = vunpack.c.l.b16 %v366
      %v713 = vunpack.c.l.b16 %v367
      %v714 = vunpack.c.h.b16 %v367
      %v715 = vunpack.c.l.b16 %v368
      %v716 = vunpack.c.l.b16 %v369
      %v717 = vunpack.c.h.b16 %v369
      %v718 = vunpack.c.l.b16 %v370
      %v719 = vunpack.c.l.b16 %v371
      %v720 = vunpack.c.h.b16 %v371
      %v721 = vunpack.c.l.b16 %v372
      %v722 = vunpack.c.l.b16 %v373
      %v723 = vunpack.c.h.b16 %v373
      %v724 = vunpack.c.l.b16 %v374
      %v725 = vunpack.c.l.b16 %v375
      %v726 = vunpack.c.h.b16 %v375
      %v727 = vunpack.c.l.b16 %v376
      %v728 = vunpack.c.l.b16 %v377
      %v729 = vunpack.c.h.b16 %v377
      %v730 = vunpack.c.l.b16 %v378
      %v731 = vunpack.c.l.b16 %v379
      %v732 = vunpack.c.h.b16 %v379
      %v733 = vunpack.c.l.b16 %v380
      %v734 = vunpack.c.l.b16 %v381
      %v735 = vunpack.c.h.b16 %v381
      %v736 = vunpack.c.l.b16 %v382
      %v737 = vunpack.c.l.b16 %v383
      %v738 = vunpack.c.h.b16 %v383
      %v739 = vunpack.c.l.b16 %v384
      %v740 = vunpack.c.l.b16 %v385
      %v741 = vunpack.c.h.b16 %v385
      %v742 = vunpack.c.l.b16 %v386
      %v743 = vpack.c.b16 %v554, %v551
      %v744 = vpack.c.b16 %v555, %v552
      %v745 = vpack.c.b16 %v556, %v553
      %v746 = vpack.c.b16 %v560, %v557
      %v747 = vpack.c.b16 %v561, %v558
      %v748 = vpack.c.b16 %v562, %v559
      %v749 = vpack.c.b16 %v566, %v563
      %v750 = vpack.c.b16 %v567, %v564
      %v751 = vpack.c.b16 %v568, %v565
      %v752 = vpack.c.b16 %v572, %v569
      %v753 = vpack.c.b16 %v573, %v570
      %v754 = vpack.c.b16 %v574, %v571
      %v755 = vpack.c.b16 %v578, %v575
      %v756 = vpack.c.b16 %v579, %v576
      %v757 = vpack.c.b16 %v580, %v577
      %v758 = vpack.c.b16 %v584, %v581
      %v759 = vpack.c.b16 %v585, %v582
      %v760 = vpack.c.b16 %v586, %v583
      %v761 = vpack.c.b16 %v590, %v587
      %v762 = vpack.c.b16 %v591, %v588
      %v763 = vpack.c.b16 %v592, %v589
      %v764 = vpack.c.b16 %v596, %v593
      %v765 = vpack.c.b16 %v597, %v594
      %v766 = vpack.c.b16 %v598, %v595
      %v767 = vpack.c.b16 %v602, %v599
      %v768 = vpack.c.b16 %v603, %v600
      %v769 = vpack.c.b16 %v604, %v601
      %v770 = vpack.c.b16 %v608, %v605
      %v771 = vpack.c.b16 %v609, %v606
      %v772 = vpack.c.b16 %v610, %v607
      %v773 = vpack.c.b16 %v614, %v611
      %v774 = vpack.c.b16 %v615, %v612
      %v775 = vpack.c.b16 %v616, %v613
      %v776 = vpack.c.b16 %v620, %v617
      %v777 = vpack.c.b16 %v621, %v618
      %v778 = vpack.c.b16 %v622, %v619
      %v779 = vpack.c.b16 %v626, %v623
      %v780 = vpack.c.b16 %v627, %v624
      %v781 = vpack.c.b16 %v628, %v625
      %v782 = vpack.c.b16 %v632, %v629
      %v783 = vpack.c.b16 %v633, %v630
      %v784 = vpack.c.b16 %v634, %v631
      %v785 = vpack.c.b16 %v638, %v635
      %v786 = vpack.c.b16 %v639, %v636
      %v787 = vpack.c.b16 %v640, %v637
      %v788 = vpack.c.b16 %v644, %v641
      %v789 = vpack.c.b16 %v645, %v642
      %v790 = vpack.c.b16 %v646, %v643
      %v791 = vpack.c.b16 %v650, %v647
      %v792 = vpack.c.b16 %v651, %v648
      %v793 = vpack.c.b16 %v652, %v649
      %v794 = vpack.c.b16 %v656, %v653
      %v795 = vpack.c.b16 %v657, %v654
      %v796 = vpack.c.b16 %v658, %v655
      %v797 = vpack.c.b16 %v662, %v659
      %v798 = vpack.c.b16 %v663, %v660
      %v799 = vpack.c.b16 %v664, %v661
      %v800 = vpack.c.b16 %v668, %v665
      %v801 = vpack.c.b16 %v669, %v666
      %v802 = vpack.c.b16 %v670, %v667
      %v803 = vpack.c.b16 %v674, %v671
      %v804 = vpack.c.b16 %v675, %v672
      %v805 = vpack.c.b16 %v676, %v673
      %v806 = vpack.c.b16 %v680, %v677
      %v807 = vpack.c.b16 %v681, %v678
      %v808 = vpack.c.b16 %v682, %v679
      %v809 = vpack.c.b16 %v686, %v683
      %v810 = vpack.c.b16 %v687, %v684
      %v811 = vpack.c.b16 %v688, %v685
      %v812 = vpack.c.b16 %v692, %v689
      %v813 = vpack.c.b16 %v693, %v690
      %v814 = vpack.c.b16 %v694, %v691
      %v815 = vpack.c.b16 %v698, %v695
      %v816 = vpack.c.b16 %v699, %v696
      %v817 = vpack.c.b16 %v700, %v697
      %v818 = vpack.c.b16 %v704, %v701
      %v819 = vpack.c.b16 %v705, %v702
      %v820 = vpack.c.b16 %v706, %v703
      %v821 = vpack.c.b16 %v710, %v707
      %v822 = vpack.c.b16 %v711, %v708
      %v823 = vpack.c.b16 %v712, %v709
      %v824 = vpack.c.b16 %v716, %v713
      %v825 = vpack.c.b16 %v717, %v714
      %v826 = vpack.c.b16 %v718, %v715
      %v827 = vpack.c.b16 %v722, %v719
      %v828 = vpack.c.b16 %v723, %v720
      %v829 = vpack.c.b16 %v724, %v721
      %v830 = vpack.c.b16 %v728, %v725
      %v831 = vpack.c.b16 %v729, %v726
      %v832 = vpack.c.b16 %v730, %v727
      %v833 = vpack.c.b16 %v734, %v731
      %v834 = vpack.c.b16 %v735, %v732
      %v835 = vpack.c.b16 %v736, %v733
      %v836 = vpack.c.b16 %v740, %v737
      %v837 = vpack.c.b16 %v741, %v738
      %v838 = vpack.c.b16 %v742, %v739
      %v939 = vunpack.c.l.b16 %v387
      %v940 = vunpack.c.l.b16 %v388
      %v941 = vunpack.c.l.b16 %v389
      %v942 = vunpack.c.l.b16 %v390
      %v943 = vunpack.c.l.b16 %v391
      %v944 = vunpack.c.l.b16 %v392
      %v945 = vunpack.c.l.b16 %v393
      %v946 = vunpack.c.l.b16 %v394
      %v947 = vunpack.c.l.b16 %v395
      %v948 = vunpack.c.l.b16 %v396
      %v949 = vunpack.c.l.b16 %v397
      %v950 = vunpack.c.l.b16 %v398
      %v951 = vunpack.c.l.b16 %v399
      %v952 = vunpack.c.l.b16 %v400
      %v953 = vunpack.c.l.b16 %v401
      %v954 = vunpack.c.l.b16 %v402
      %v955 = vunpack.c.l.b16 %v403
      %v956 = vunpack.c.l.b16 %v404
      %v957 = vunpack.c.l.b16 %v405
      %v958 = vunpack.c.l.b16 %v406
      %v959 = vunpack.c.l.b16 %v407
      %v960 = vunpack.c.l.b16 %v408
      %v961 = vunpack.c.l.b16 %v409
      %v962 = vunpack.c.l.b16 %v410
      %v963 = vunpack.c.l.b16 %v411
      %v964 = vunpack.c.l.b16 %v412
      %v965 = vunpack.c.l.b16 %v413
      %v966 = vunpack.c.l.b16 %v414
      %v967 = vunpack.c.l.b16 %v415
      %v968 = vunpack.c.l.b16 %v416
      %v969 = vunpack.c.l.b16 %v417
      %v970 = vunpack.c.l.b16 %v418
      %v971 = vunpack.c.l.b16 %v419
      %v972 = vunpack.c.l.b16 %v420
      %v973 = vunpack.c.l.b16 %v421
      %v974 = vunpack.c.l.b16 %v422
      %v975 = vpack.c.b16 %v940, %v939
      %v976 = vpack.c.b16 %v942, %v941
      %v977 = vpack.c.b16 %v944, %v943
      %v978 = vpack.c.b16 %v946, %v945
      %v979 = vpack.c.b16 %v948, %v947
      %v980 = vpack.c.b16 %v950, %v949
      %v981 = vpack.c.b16 %v952, %v951
      %v982 = vpack.c.b16 %v954, %v953
      %v983 = vpack.c.b16 %v956, %v955
      %v984 = vpack.c.b16 %v958, %v957
      %v985 = vpack.c.b16 %v960, %v959
      %v986 = vpack.c.b16 %v962, %v961
      %v987 = vpack.c.b16 %v964, %v963
      %v988 = vpack.c.b16 %v966, %v965
      %v989 = vpack.c.b16 %v968, %v967
      %v990 = vpack.c.b16 %v970, %v969
      %v991 = vpack.c.b16 %v972, %v971
      %v992 = vpack.c.b16 %v974, %v973
      %vm1011 = vcmask 261120
      %v1013 = vsel %vm1011, %v745, 0
      %v1016 = vsel %vm1011, %v748, 0
      %v1019 = vsel %vm1011, %v751, 0
      %v1022 = vsel %vm1011, %v754, 0
      %v1025 = vsel %vm1011, %v757, 0
      %v1028 = vsel %vm1011, %v760, 0
      %v1031 = vsel %vm1011, %v763, 0
      %v1034 = vsel %vm1011, %v766, 0
      %v1037 = vsel %vm1011, %v769, 0
      %v1040 = vsel %vm1011, %v772, 0
      %v1043 = vsel %vm1011, %v775, 0
      %v1046 = vsel %vm1011, %v778, 0
      %v1049 = vsel %vm1011, %v781, 0
      %v1052 = vsel %vm1011, %v784, 0
      %v1055 = vsel %vm1011, %v787, 0
      %v1058 = vsel %vm1011, %v790, 0
      %v1061 = vsel %vm1011, %v793, 0
      %v1064 = vsel %vm1011, %v796, 0
      %v1067 = vsel %vm1011, %v799, 0
      %v1070 = vsel %vm1011, %v802, 0
      %v1073 = vsel %vm1011, %v805, 0
      %v1076 = vsel %vm1011, %v808, 0
      %v1079 = vsel %vm1011, %v811, 0
      %v1082 = vsel %vm1011, %v814, 0
      %v1085 = vsel %vm1011, %v817, 0
      %v1088 = vsel %vm1011, %v820, 0
      %v1091 = vsel %vm1011, %v823, 0
      %v1094 = vsel %vm1011, %v826, 0
      %v1097 = vsel %vm1011, %v829, 0
      %v1100 = vsel %vm1011, %v832, 0
      %v1103 = vsel %vm1011, %v835, 0
      %v1106 = vsel %vm1011, %v838, 0
      %1108 = vmatpush.bf16.msra.mxu0 %v982
      %1109 = vmatpush.bf16.msra.mxu0 %v981
      %1110 = vmatpush.bf16.msra.mxu0 %v980
      %1111 = vmatpush.bf16.msra.mxu0 %v979
      %1112 = vmatpush.bf16.msra.mxu0 %v978
      %1113 = vmatpush.bf16.msra.mxu0 %v977
      %1114 = vmatpush.bf16.msra.mxu0 %v976
      %1115 = vmatpush.bf16.msra.mxu0 %v975
      %1116 = vmatmul.bf16.gmra.mxu0 %v743
      %v1117 = vpop.f32.mrf.mxu0
      %v1118 = vadd.f32 0.0, %v1117
      %v1119 = vpop.f32.mrf.mxu0
      %v1120 = vadd.f32 0.0, %v1119
      %1121 = vmatmul.bf16.gmra.mxu0 %v746
      %v1122 = vpop.f32.mrf.mxu0
      %v1123 = vadd.f32 0.0, %v1122
      %v1124 = vpop.f32.mrf.mxu0
      %v1125 = vadd.f32 0.0, %v1124
      %1126 = vmatmul.bf16.gmra.mxu0 %v749
      %v1127 = vpop.f32.mrf.mxu0
      %v1128 = vadd.f32 0.0, %v1127
      %v1129 = vpop.f32.mrf.mxu0
      %v1130 = vadd.f32 0.0, %v1129
      %1131 = vmatmul.bf16.gmra.mxu0 %v752
      %v1132 = vpop.f32.mrf.mxu0
      %v1133 = vadd.f32 0.0, %v1132
      %v1134 = vpop.f32.mrf.mxu0
      %v1135 = vadd.f32 0.0, %v1134
      %1136 = vmatmul.bf16.gmra.mxu0 %v755
      %v1137 = vpop.f32.mrf.mxu0
      %v1138 = vadd.f32 0.0, %v1137
      %v1139 = vpop.f32.mrf.mxu0
      %v1140 = vadd.f32 0.0, %v1139
      %1141 = vmatmul.bf16.gmra.mxu0 %v758
      %v1142 = vpop.f32.mrf.mxu0
      %v1143 = vadd.f32 0.0, %v1142
      %v1144 = vpop.f32.mrf.mxu0
      %v1145 = vadd.f32 0.0, %v1144
      %1146 = vmatmul.bf16.gmra.mxu0 %v761
      %v1147 = vpop.f32.mrf.mxu0
      %v1148 = vadd.f32 0.0, %v1147
      %v1149 = vpop.f32.mrf.mxu0
      %v1150 = vadd.f32 0.0, %v1149
      %1151 = vmatmul.bf16.gmra.mxu0 %v764
      %v1152 = vpop.f32.mrf.mxu0
      %v1153 = vadd.f32 0.0, %v1152
      %v1154 = vpop.f32.mrf.mxu0
      %v1155 = vadd.f32 0.0, %v1154
      %1156 = vmatmul.bf16.gmra.mxu0 %v767
      %v1157 = vpop.f32.mrf.mxu0
      %v1158 = vadd.f32 0.0, %v1157
      %v1159 = vpop.f32.mrf.mxu0
      %v1160 = vadd.f32 0.0, %v1159
      %1161 = vmatmul.bf16.gmra.mxu0 %v770
      %v1162 = vpop.f32.mrf.mxu0
      %v1163 = vadd.f32 0.0, %v1162
      %v1164 = vpop.f32.mrf.mxu0
      %v1165 = vadd.f32 0.0, %v1164
      %1166 = vmatmul.bf16.gmra.mxu0 %v773
      %v1167 = vpop.f32.mrf.mxu0
      %v1168 = vadd.f32 0.0, %v1167
      %v1169 = vpop.f32.mrf.mxu0
      %v1170 = vadd.f32 0.0, %v1169
      %1171 = vmatmul.bf16.gmra.mxu0 %v776
      %v1172 = vpop.f32.mrf.mxu0
      %v1173 = vadd.f32 0.0, %v1172
      %v1174 = vpop.f32.mrf.mxu0
      %v1175 = vadd.f32 0.0, %v1174
      %1176 = vmatmul.bf16.gmra.mxu0 %v779
      %v1177 = vpop.f32.mrf.mxu0
      %v1178 = vadd.f32 0.0, %v1177
      %v1179 = vpop.f32.mrf.mxu0
      %v1180 = vadd.f32 0.0, %v1179
      %1181 = vmatmul.bf16.gmra.mxu0 %v782
      %v1182 = vpop.f32.mrf.mxu0
      %v1183 = vadd.f32 0.0, %v1182
      %v1184 = vpop.f32.mrf.mxu0
      %v1185 = vadd.f32 0.0, %v1184
      %1186 = vmatmul.bf16.gmra.mxu0 %v785
      %v1187 = vpop.f32.mrf.mxu0
      %v1188 = vadd.f32 0.0, %v1187
      %v1189 = vpop.f32.mrf.mxu0
      %v1190 = vadd.f32 0.0, %v1189
      %1191 = vmatmul.bf16.gmra.mxu0 %v788
      %v1192 = vpop.f32.mrf.mxu0
      %v1193 = vadd.f32 0.0, %v1192
      %v1194 = vpop.f32.mrf.mxu0
      %v1195 = vadd.f32 0.0, %v1194
      %1196 = vmatmul.bf16.gmra.mxu0 %v791
      %v1197 = vpop.f32.mrf.mxu0
      %v1198 = vadd.f32 0.0, %v1197
      %v1199 = vpop.f32.mrf.mxu0
      %v1200 = vadd.f32 0.0, %v1199
      %1201 = vmatmul.bf16.gmra.mxu0 %v794
      %v1202 = vpop.f32.mrf.mxu0
      %v1203 = vadd.f32 0.0, %v1202
      %v1204 = vpop.f32.mrf.mxu0
      %v1205 = vadd.f32 0.0, %v1204
      %1206 = vmatmul.bf16.gmra.mxu0 %v797
      %v1207 = vpop.f32.mrf.mxu0
      %v1208 = vadd.f32 0.0, %v1207
      %v1209 = vpop.f32.mrf.mxu0
      %v1210 = vadd.f32 0.0, %v1209
      %1211 = vmatmul.bf16.gmra.mxu0 %v800
      %v1212 = vpop.f32.mrf.mxu0
      %v1213 = vadd.f32 0.0, %v1212
      %v1214 = vpop.f32.mrf.mxu0
      %v1215 = vadd.f32 0.0, %v1214
      %1216 = vmatmul.bf16.gmra.mxu0 %v803
      %v1217 = vpop.f32.mrf.mxu0
      %v1218 = vadd.f32 0.0, %v1217
      %v1219 = vpop.f32.mrf.mxu0
      %v1220 = vadd.f32 0.0, %v1219
      %1221 = vmatmul.bf16.gmra.mxu0 %v806
      %v1222 = vpop.f32.mrf.mxu0
      %v1223 = vadd.f32 0.0, %v1222
      %v1224 = vpop.f32.mrf.mxu0
      %v1225 = vadd.f32 0.0, %v1224
      %1226 = vmatmul.bf16.gmra.mxu0 %v809
      %v1227 = vpop.f32.mrf.mxu0
      %v1228 = vadd.f32 0.0, %v1227
      %v1229 = vpop.f32.mrf.mxu0
      %v1230 = vadd.f32 0.0, %v1229
      %1231 = vmatmul.bf16.gmra.mxu0 %v812
      %v1232 = vpop.f32.mrf.mxu0
      %v1233 = vadd.f32 0.0, %v1232
      %v1234 = vpop.f32.mrf.mxu0
      %v1235 = vadd.f32 0.0, %v1234
      %1236 = vmatmul.bf16.gmra.mxu0 %v815
      %v1237 = vpop.f32.mrf.mxu0
      %v1238 = vadd.f32 0.0, %v1237
      %v1239 = vpop.f32.mrf.mxu0
      %v1240 = vadd.f32 0.0, %v1239
      %1241 = vmatmul.bf16.gmra.mxu0 %v818
      %v1242 = vpop.f32.mrf.mxu0
      %v1243 = vadd.f32 0.0, %v1242
      %v1244 = vpop.f32.mrf.mxu0
      %v1245 = vadd.f32 0.0, %v1244
      %1246 = vmatmul.bf16.gmra.mxu0 %v821
      %v1247 = vpop.f32.mrf.mxu0
      %v1248 = vadd.f32 0.0, %v1247
      %v1249 = vpop.f32.mrf.mxu0
      %v1250 = vadd.f32 0.0, %v1249
      %1251 = vmatmul.bf16.gmra.mxu0 %v824
      %v1252 = vpop.f32.mrf.mxu0
      %v1253 = vadd.f32 0.0, %v1252
      %v1254 = vpop.f32.mrf.mxu0
      %v1255 = vadd.f32 0.0, %v1254
      %1256 = vmatmul.bf16.gmra.mxu0 %v827
      %v1257 = vpop.f32.mrf.mxu0
      %v1258 = vadd.f32 0.0, %v1257
      %v1259 = vpop.f32.mrf.mxu0
      %v1260 = vadd.f32 0.0, %v1259
      %1261 = vmatmul.bf16.gmra.mxu0 %v830
      %v1262 = vpop.f32.mrf.mxu0
      %v1263 = vadd.f32 0.0, %v1262
      %v1264 = vpop.f32.mrf.mxu0
      %v1265 = vadd.f32 0.0, %v1264
      %1266 = vmatmul.bf16.gmra.mxu0 %v833
      %v1267 = vpop.f32.mrf.mxu0
      %v1268 = vadd.f32 0.0, %v1267
      %v1269 = vpop.f32.mrf.mxu0
      %v1270 = vadd.f32 0.0, %v1269
      %1271 = vmatmul.bf16.gmra.mxu0 %v836
      %v1272 = vpop.f32.mrf.mxu0
      %v1273 = vadd.f32 0.0, %v1272
      %v1274 = vpop.f32.mrf.mxu0
      %v1275 = vadd.f32 0.0, %v1274
      %1276 = vdwg.mxu0
      %1277 = vmatpush.bf16.msra.mxu0 %v990
      %1278 = vmatpush.bf16.msra.mxu0 %v989
      %1279 = vmatpush.bf16.msra.mxu0 %v988
      %1280 = vmatpush.bf16.msra.mxu0 %v987
      %1281 = vmatpush.bf16.msra.mxu0 %v986
      %1282 = vmatpush.bf16.msra.mxu0 %v985
      %1283 = vmatpush.bf16.msra.mxu0 %v984
      %1284 = vmatpush.bf16.msra.mxu0 %v983
      %1285 = vmatmul.bf16.gmra.mxu0 %v744
      %v1286 = vpop.f32.mrf.mxu0
      %v1287 = vadd.f32 %v1118, %v1286
      %v1288 = vpop.f32.mrf.mxu0
      %v1289 = vadd.f32 %v1120, %v1288
      %1290 = vmatmul.bf16.gmra.mxu0 %v747
      %v1291 = vpop.f32.mrf.mxu0
      %v1292 = vadd.f32 %v1123, %v1291
      %v1293 = vpop.f32.mrf.mxu0
      %v1294 = vadd.f32 %v1125, %v1293
      %1295 = vmatmul.bf16.gmra.mxu0 %v750
      %v1296 = vpop.f32.mrf.mxu0
      %v1297 = vadd.f32 %v1128, %v1296
      %v1298 = vpop.f32.mrf.mxu0
      %v1299 = vadd.f32 %v1130, %v1298
      %1300 = vmatmul.bf16.gmra.mxu0 %v753
      %v1301 = vpop.f32.mrf.mxu0
      %v1302 = vadd.f32 %v1133, %v1301
      %v1303 = vpop.f32.mrf.mxu0
      %v1304 = vadd.f32 %v1135, %v1303
      %1305 = vmatmul.bf16.gmra.mxu0 %v756
      %v1306 = vpop.f32.mrf.mxu0
      %v1307 = vadd.f32 %v1138, %v1306
      %v1308 = vpop.f32.mrf.mxu0
      %v1309 = vadd.f32 %v1140, %v1308
      %1310 = vmatmul.bf16.gmra.mxu0 %v759
      %v1311 = vpop.f32.mrf.mxu0
      %v1312 = vadd.f32 %v1143, %v1311
      %v1313 = vpop.f32.mrf.mxu0
      %v1314 = vadd.f32 %v1145, %v1313
      %1315 = vmatmul.bf16.gmra.mxu0 %v762
      %v1316 = vpop.f32.mrf.mxu0
      %v1317 = vadd.f32 %v1148, %v1316
      %v1318 = vpop.f32.mrf.mxu0
      %v1319 = vadd.f32 %v1150, %v1318
      %1320 = vmatmul.bf16.gmra.mxu0 %v765
      %v1321 = vpop.f32.mrf.mxu0
      %v1322 = vadd.f32 %v1153, %v1321
      %v1323 = vpop.f32.mrf.mxu0
      %v1324 = vadd.f32 %v1155, %v1323
      %1325 = vmatmul.bf16.gmra.mxu0 %v768
      %v1326 = vpop.f32.mrf.mxu0
      %v1327 = vadd.f32 %v1158, %v1326
      %v1328 = vpop.f32.mrf.mxu0
      %v1329 = vadd.f32 %v1160, %v1328
      %1330 = vmatmul.bf16.gmra.mxu0 %v771
      %v1331 = vpop.f32.mrf.mxu0
      %v1332 = vadd.f32 %v1163, %v1331
      %v1333 = vpop.f32.mrf.mxu0
      %v1334 = vadd.f32 %v1165, %v1333
      %1335 = vmatmul.bf16.gmra.mxu0 %v774
      %v1336 = vpop.f32.mrf.mxu0
      %v1337 = vadd.f32 %v1168, %v1336
      %v1338 = vpop.f32.mrf.mxu0
      %v1339 = vadd.f32 %v1170, %v1338
      %1340 = vmatmul.bf16.gmra.mxu0 %v777
      %v1341 = vpop.f32.mrf.mxu0
      %v1342 = vadd.f32 %v1173, %v1341
      %v1343 = vpop.f32.mrf.mxu0
      %v1344 = vadd.f32 %v1175, %v1343
      %1345 = vmatmul.bf16.gmra.mxu0 %v780
      %v1346 = vpop.f32.mrf.mxu0
      %v1347 = vadd.f32 %v1178, %v1346
      %v1348 = vpop.f32.mrf.mxu0
      %v1349 = vadd.f32 %v1180, %v1348
      %1350 = vmatmul.bf16.gmra.mxu0 %v783
      %v1351 = vpop.f32.mrf.mxu0
      %v1352 = vadd.f32 %v1183, %v1351
      %v1353 = vpop.f32.mrf.mxu0
      %v1354 = vadd.f32 %v1185, %v1353
      %1355 = vmatmul.bf16.gmra.mxu0 %v786
      %v1356 = vpop.f32.mrf.mxu0
      %v1357 = vadd.f32 %v1188, %v1356
      %v1358 = vpop.f32.mrf.mxu0
      %v1359 = vadd.f32 %v1190, %v1358
      %1360 = vmatmul.bf16.gmra.mxu0 %v789
      %v1361 = vpop.f32.mrf.mxu0
      %v1362 = vadd.f32 %v1193, %v1361
      %v1363 = vpop.f32.mrf.mxu0
      %v1364 = vadd.f32 %v1195, %v1363
      %1365 = vmatmul.bf16.gmra.mxu0 %v792
      %v1366 = vpop.f32.mrf.mxu0
      %v1367 = vadd.f32 %v1198, %v1366
      %v1368 = vpop.f32.mrf.mxu0
      %v1369 = vadd.f32 %v1200, %v1368
      %1370 = vmatmul.bf16.gmra.mxu0 %v795
      %v1371 = vpop.f32.mrf.mxu0
      %v1372 = vadd.f32 %v1203, %v1371
      %v1373 = vpop.f32.mrf.mxu0
      %v1374 = vadd.f32 %v1205, %v1373
      %1375 = vmatmul.bf16.gmra.mxu0 %v798
      %v1376 = vpop.f32.mrf.mxu0
      %v1377 = vadd.f32 %v1208, %v1376
      %v1378 = vpop.f32.mrf.mxu0
      %v1379 = vadd.f32 %v1210, %v1378
      %1380 = vmatmul.bf16.gmra.mxu0 %v801
      %v1381 = vpop.f32.mrf.mxu0
      %v1382 = vadd.f32 %v1213, %v1381
      %v1383 = vpop.f32.mrf.mxu0
      %v1384 = vadd.f32 %v1215, %v1383
      %1385 = vmatmul.bf16.gmra.mxu0 %v804
      %v1386 = vpop.f32.mrf.mxu0
      %v1387 = vadd.f32 %v1218, %v1386
      %v1388 = vpop.f32.mrf.mxu0
      %v1389 = vadd.f32 %v1220, %v1388
      %1390 = vmatmul.bf16.gmra.mxu0 %v807
      %v1391 = vpop.f32.mrf.mxu0
      %v1392 = vadd.f32 %v1223, %v1391
      %v1393 = vpop.f32.mrf.mxu0
      %v1394 = vadd.f32 %v1225, %v1393
      %1395 = vmatmul.bf16.gmra.mxu0 %v810
      %v1396 = vpop.f32.mrf.mxu0
      %v1397 = vadd.f32 %v1228, %v1396
      %v1398 = vpop.f32.mrf.mxu0
      %v1399 = vadd.f32 %v1230, %v1398
      %1400 = vmatmul.bf16.gmra.mxu0 %v813
      %v1401 = vpop.f32.mrf.mxu0
      %v1402 = vadd.f32 %v1233, %v1401
      %v1403 = vpop.f32.mrf.mxu0
      %v1404 = vadd.f32 %v1235, %v1403
      %1405 = vmatmul.bf16.gmra.mxu0 %v816
      %v1406 = vpop.f32.mrf.mxu0
      %v1407 = vadd.f32 %v1238, %v1406
      %v1408 = vpop.f32.mrf.mxu0
      %v1409 = vadd.f32 %v1240, %v1408
      %1410 = vmatmul.bf16.gmra.mxu0 %v819
      %v1411 = vpop.f32.mrf.mxu0
      %v1412 = vadd.f32 %v1243, %v1411
      %v1413 = vpop.f32.mrf.mxu0
      %v1414 = vadd.f32 %v1245, %v1413
      %1415 = vmatmul.bf16.gmra.mxu0 %v822
      %v1416 = vpop.f32.mrf.mxu0
      %v1417 = vadd.f32 %v1248, %v1416
      %v1418 = vpop.f32.mrf.mxu0
      %v1419 = vadd.f32 %v1250, %v1418
      %1420 = vmatmul.bf16.gmra.mxu0 %v825
      %v1421 = vpop.f32.mrf.mxu0
      %v1422 = vadd.f32 %v1253, %v1421
      %v1423 = vpop.f32.mrf.mxu0
      %v1424 = vadd.f32 %v1255, %v1423
      %1425 = vmatmul.bf16.gmra.mxu0 %v828
      %v1426 = vpop.f32.mrf.mxu0
      %v1427 = vadd.f32 %v1258, %v1426
      %v1428 = vpop.f32.mrf.mxu0
      %v1429 = vadd.f32 %v1260, %v1428
      %1430 = vmatmul.bf16.gmra.mxu0 %v831
      %v1431 = vpop.f32.mrf.mxu0
      %v1432 = vadd.f32 %v1263, %v1431
      %v1433 = vpop.f32.mrf.mxu0
      %v1434 = vadd.f32 %v1265, %v1433
      %1435 = vmatmul.bf16.gmra.mxu0 %v834
      %v1436 = vpop.f32.mrf.mxu0
      %v1437 = vadd.f32 %v1268, %v1436
      %v1438 = vpop.f32.mrf.mxu0
      %v1439 = vadd.f32 %v1270, %v1438
      %1440 = vmatmul.bf16.gmra.mxu0 %v837
      %v1441 = vpop.f32.mrf.mxu0
      %v1442 = vadd.f32 %v1273, %v1441
      %v1443 = vpop.f32.mrf.mxu0
      %v1444 = vadd.f32 %v1275, %v1443
      %1445 = vdwg.mxu0
      %1446 = vmatpush.bf16.msra.mxu0 0
      %1447 = vmatpush.bf16.msra.mxu0 0
      %1448 = vmatpush.bf16.msra.mxu0 0
      %1449 = vmatpush.bf16.msra.mxu0 0
      %1450 = vmatpush.bf16.msra.mxu0 0
      %1451 = vmatpush.bf16.msra.mxu0 0
      %1452 = vmatpush.bf16.msra.mxu0 %v992
      %1453 = vmatpush.bf16.msra.mxu0 %v991
      %1454 = vmatmul.bf16.gmra.mxu0 %v1013
      %v1455 = vpop.f32.mrf.mxu0
      %v1456 = vadd.f32 %v1287, %v1455
      %v1457 = vpop.f32.mrf.mxu0
      %v1458 = vadd.f32 %v1289, %v1457
      %1459 = vmatmul.bf16.gmra.mxu0 %v1016
      %v1460 = vpop.f32.mrf.mxu0
      %v1461 = vadd.f32 %v1292, %v1460
      %v1462 = vpop.f32.mrf.mxu0
      %v1463 = vadd.f32 %v1294, %v1462
      %1464 = vmatmul.bf16.gmra.mxu0 %v1019
      %v1465 = vpop.f32.mrf.mxu0
      %v1466 = vadd.f32 %v1297, %v1465
      %v1467 = vpop.f32.mrf.mxu0
      %v1468 = vadd.f32 %v1299, %v1467
      %1469 = vmatmul.bf16.gmra.mxu0 %v1022
      %v1470 = vpop.f32.mrf.mxu0
      %v1471 = vadd.f32 %v1302, %v1470
      %v1472 = vpop.f32.mrf.mxu0
      %v1473 = vadd.f32 %v1304, %v1472
      %1474 = vmatmul.bf16.gmra.mxu0 %v1025
      %v1475 = vpop.f32.mrf.mxu0
      %v1476 = vadd.f32 %v1307, %v1475
      %v1477 = vpop.f32.mrf.mxu0
      %v1478 = vadd.f32 %v1309, %v1477
      %1479 = vmatmul.bf16.gmra.mxu0 %v1028
      %v1480 = vpop.f32.mrf.mxu0
      %v1481 = vadd.f32 %v1312, %v1480
      %v1482 = vpop.f32.mrf.mxu0
      %v1483 = vadd.f32 %v1314, %v1482
      %1484 = vmatmul.bf16.gmra.mxu0 %v1031
      %v1485 = vpop.f32.mrf.mxu0
      %v1486 = vadd.f32 %v1317, %v1485
      %v1487 = vpop.f32.mrf.mxu0
      %v1488 = vadd.f32 %v1319, %v1487
      %1489 = vmatmul.bf16.gmra.mxu0 %v1034
      %v1490 = vpop.f32.mrf.mxu0
      %v1491 = vadd.f32 %v1322, %v1490
      %v1492 = vpop.f32.mrf.mxu0
      %v1493 = vadd.f32 %v1324, %v1492
      %1494 = vmatmul.bf16.gmra.mxu0 %v1037
      %v1495 = vpop.f32.mrf.mxu0
      %v1496 = vadd.f32 %v1327, %v1495
      %v1497 = vpop.f32.mrf.mxu0
      %v1498 = vadd.f32 %v1329, %v1497
      %1499 = vmatmul.bf16.gmra.mxu0 %v1040
      %v1500 = vpop.f32.mrf.mxu0
      %v1501 = vadd.f32 %v1332, %v1500
      %v1502 = vpop.f32.mrf.mxu0
      %v1503 = vadd.f32 %v1334, %v1502
      %1504 = vmatmul.bf16.gmra.mxu0 %v1043
      %v1505 = vpop.f32.mrf.mxu0
      %v1506 = vadd.f32 %v1337, %v1505
      %v1507 = vpop.f32.mrf.mxu0
      %v1508 = vadd.f32 %v1339, %v1507
      %1509 = vmatmul.bf16.gmra.mxu0 %v1046
      %v1510 = vpop.f32.mrf.mxu0
      %v1511 = vadd.f32 %v1342, %v1510
      %v1512 = vpop.f32.mrf.mxu0
      %v1513 = vadd.f32 %v1344, %v1512
      %1514 = vmatmul.bf16.gmra.mxu0 %v1049
      %v1515 = vpop.f32.mrf.mxu0
      %v1516 = vadd.f32 %v1347, %v1515
      %v1517 = vpop.f32.mrf.mxu0
      %v1518 = vadd.f32 %v1349, %v1517
      %1519 = vmatmul.bf16.gmra.mxu0 %v1052
      %v1520 = vpop.f32.mrf.mxu0
      %v1521 = vadd.f32 %v1352, %v1520
      %v1522 = vpop.f32.mrf.mxu0
      %v1523 = vadd.f32 %v1354, %v1522
      %1524 = vmatmul.bf16.gmra.mxu0 %v1055
      %v1525 = vpop.f32.mrf.mxu0
      %v1526 = vadd.f32 %v1357, %v1525
      %v1527 = vpop.f32.mrf.mxu0
      %v1528 = vadd.f32 %v1359, %v1527
      %1529 = vmatmul.bf16.gmra.mxu0 %v1058
      %v1530 = vpop.f32.mrf.mxu0
      %v1531 = vadd.f32 %v1362, %v1530
      %v1532 = vpop.f32.mrf.mxu0
      %v1533 = vadd.f32 %v1364, %v1532
      %1534 = vmatmul.bf16.gmra.mxu0 %v1061
      %v1535 = vpop.f32.mrf.mxu0
      %v1536 = vadd.f32 %v1367, %v1535
      %v1537 = vpop.f32.mrf.mxu0
      %v1538 = vadd.f32 %v1369, %v1537
      %1539 = vmatmul.bf16.gmra.mxu0 %v1064
      %v1540 = vpop.f32.mrf.mxu0
      %v1541 = vadd.f32 %v1372, %v1540
      %v1542 = vpop.f32.mrf.mxu0
      %v1543 = vadd.f32 %v1374, %v1542
      %1544 = vmatmul.bf16.gmra.mxu0 %v1067
      %v1545 = vpop.f32.mrf.mxu0
      %v1546 = vadd.f32 %v1377, %v1545
      %v1547 = vpop.f32.mrf.mxu0
      %v1548 = vadd.f32 %v1379, %v1547
      %1549 = vmatmul.bf16.gmra.mxu0 %v1070
      %v1550 = vpop.f32.mrf.mxu0
      %v1551 = vadd.f32 %v1382, %v1550
      %v1552 = vpop.f32.mrf.mxu0
      %v1553 = vadd.f32 %v1384, %v1552
      %1554 = vmatmul.bf16.gmra.mxu0 %v1073
      %v1555 = vpop.f32.mrf.mxu0
      %v1556 = vadd.f32 %v1387, %v1555
      %v1557 = vpop.f32.mrf.mxu0
      %v1558 = vadd.f32 %v1389, %v1557
      %1559 = vmatmul.bf16.gmra.mxu0 %v1076
      %v1560 = vpop.f32.mrf.mxu0
      %v1561 = vadd.f32 %v1392, %v1560
      %v1562 = vpop.f32.mrf.mxu0
      %v1563 = vadd.f32 %v1394, %v1562
      %1564 = vmatmul.bf16.gmra.mxu0 %v1079
      %v1565 = vpop.f32.mrf.mxu0
      %v1566 = vadd.f32 %v1397, %v1565
      %v1567 = vpop.f32.mrf.mxu0
      %v1568 = vadd.f32 %v1399, %v1567
      %1569 = vmatmul.bf16.gmra.mxu0 %v1082
      %v1570 = vpop.f32.mrf.mxu0
      %v1571 = vadd.f32 %v1402, %v1570
      %v1572 = vpop.f32.mrf.mxu0
      %v1573 = vadd.f32 %v1404, %v1572
      %1574 = vmatmul.bf16.gmra.mxu0 %v1085
      %v1575 = vpop.f32.mrf.mxu0
      %v1576 = vadd.f32 %v1407, %v1575
      %v1577 = vpop.f32.mrf.mxu0
      %v1578 = vadd.f32 %v1409, %v1577
      %1579 = vmatmul.bf16.gmra.mxu0 %v1088
      %v1580 = vpop.f32.mrf.mxu0
      %v1581 = vadd.f32 %v1412, %v1580
      %v1582 = vpop.f32.mrf.mxu0
      %v1583 = vadd.f32 %v1414, %v1582
      %1584 = vmatmul.bf16.gmra.mxu0 %v1091
      %v1585 = vpop.f32.mrf.mxu0
      %v1586 = vadd.f32 %v1417, %v1585
      %v1587 = vpop.f32.mrf.mxu0
      %v1588 = vadd.f32 %v1419, %v1587
      %1589 = vmatmul.bf16.gmra.mxu0 %v1094
      %v1590 = vpop.f32.mrf.mxu0
      %v1591 = vadd.f32 %v1422, %v1590
      %v1592 = vpop.f32.mrf.mxu0
      %v1593 = vadd.f32 %v1424, %v1592
      %1594 = vmatmul.bf16.gmra.mxu0 %v1097
      %v1595 = vpop.f32.mrf.mxu0
      %v1596 = vadd.f32 %v1427, %v1595
      %v1597 = vpop.f32.mrf.mxu0
      %v1598 = vadd.f32 %v1429, %v1597
      %1599 = vmatmul.bf16.gmra.mxu0 %v1100
      %v1600 = vpop.f32.mrf.mxu0
      %v1601 = vadd.f32 %v1432, %v1600
      %v1602 = vpop.f32.mrf.mxu0
      %v1603 = vadd.f32 %v1434, %v1602
      %1604 = vmatmul.bf16.gmra.mxu0 %v1103
      %v1605 = vpop.f32.mrf.mxu0
      %v1606 = vadd.f32 %v1437, %v1605
      %v1607 = vpop.f32.mrf.mxu0
      %v1608 = vadd.f32 %v1439, %v1607
      %1609 = vmatmul.bf16.gmra.mxu0 %v1106
      %v1610 = vpop.f32.mrf.mxu0
      %v1611 = vadd.f32 %v1442, %v1610
      %v1612 = vpop.f32.mrf.mxu0
      %v1613 = vadd.f32 %v1444, %v1612
      %1614 = vdwg.mxu0
      %v1615 = vld [vmem:[%s2] sm:$0x1]
      %v1617 = vperm.slane %v1615, 0
      %v1619 = vmul.f32 %v1456, %v1617
      %v1620 = vmul.f32 %v1458, %v1617
      %v1621 = vmul.f32 %v1461, %v1617
      %v1622 = vmul.f32 %v1463, %v1617
      %v1623 = vmul.f32 %v1466, %v1617
      %v1624 = vmul.f32 %v1468, %v1617
      %v1625 = vmul.f32 %v1471, %v1617
      %v1626 = vmul.f32 %v1473, %v1617
      %v1627 = vmul.f32 %v1476, %v1617
      %v1628 = vmul.f32 %v1478, %v1617
      %v1629 = vmul.f32 %v1481, %v1617
      %v1630 = vmul.f32 %v1483, %v1617
      %v1631 = vmul.f32 %v1486, %v1617
      %v1632 = vmul.f32 %v1488, %v1617
      %v1633 = vmul.f32 %v1491, %v1617
      %v1634 = vmul.f32 %v1493, %v1617
      %v1635 = vmul.f32 %v1496, %v1617
      %v1636 = vmul.f32 %v1498, %v1617
      %v1637 = vmul.f32 %v1501, %v1617
      %v1638 = vmul.f32 %v1503, %v1617
      %v1639 = vmul.f32 %v1506, %v1617
      %v1640 = vmul.f32 %v1508, %v1617
      %v1641 = vmul.f32 %v1511, %v1617
      %v1642 = vmul.f32 %v1513, %v1617
      %v1643 = vmul.f32 %v1516, %v1617
      %v1644 = vmul.f32 %v1518, %v1617
      %v1645 = vmul.f32 %v1521, %v1617
      %v1646 = vmul.f32 %v1523, %v1617
      %v1647 = vmul.f32 %v1526, %v1617
      %v1648 = vmul.f32 %v1528, %v1617
      %v1649 = vmul.f32 %v1531, %v1617
      %v1650 = vmul.f32 %v1533, %v1617
      %v1651 = vmul.f32 %v1536, %v1617
      %v1652 = vmul.f32 %v1538, %v1617
      %v1653 = vmul.f32 %v1541, %v1617
      %v1654 = vmul.f32 %v1543, %v1617
      %v1655 = vmul.f32 %v1546, %v1617
      %v1656 = vmul.f32 %v1548, %v1617
      %v1657 = vmul.f32 %v1551, %v1617
      %v1658 = vmul.f32 %v1553, %v1617
      %v1659 = vmul.f32 %v1556, %v1617
      %v1660 = vmul.f32 %v1558, %v1617
      %v1661 = vmul.f32 %v1561, %v1617
      %v1662 = vmul.f32 %v1563, %v1617
      %v1663 = vmul.f32 %v1566, %v1617
      %v1664 = vmul.f32 %v1568, %v1617
      %v1665 = vmul.f32 %v1571, %v1617
      %v1666 = vmul.f32 %v1573, %v1617
      %v1667 = vmul.f32 %v1576, %v1617
      %v1668 = vmul.f32 %v1578, %v1617
      %v1669 = vmul.f32 %v1581, %v1617
      %v1670 = vmul.f32 %v1583, %v1617
      %v1671 = vmul.f32 %v1586, %v1617
      %v1672 = vmul.f32 %v1588, %v1617
      %v1673 = vmul.f32 %v1591, %v1617
      %v1674 = vmul.f32 %v1593, %v1617
      %v1675 = vmul.f32 %v1596, %v1617
      %v1676 = vmul.f32 %v1598, %v1617
      %v1677 = vmul.f32 %v1601, %v1617
      %v1678 = vmul.f32 %v1603, %v1617
      %v1679 = vmul.f32 %v1606, %v1617
      %v1680 = vmul.f32 %v1608, %v1617
      %v1681 = vmul.f32 %v1611, %v1617
      %v1682 = vmul.f32 %v1613, %v1617
      %v1683 = vld [vmem:[%s3] sm:$0x1]
      %v1685 = vperm.slane %v1683, 0
      %v1687 = vadd.f32 %v1619, %v1685
      %v1688 = vadd.f32 %v1620, %v1685
      %v1689 = vadd.f32 %v1621, %v1685
      %v1690 = vadd.f32 %v1622, %v1685
      %v1691 = vadd.f32 %v1623, %v1685
      %v1692 = vadd.f32 %v1624, %v1685
      %v1693 = vadd.f32 %v1625, %v1685
      %v1694 = vadd.f32 %v1626, %v1685
      %v1695 = vadd.f32 %v1627, %v1685
      %v1696 = vadd.f32 %v1628, %v1685
      %v1697 = vadd.f32 %v1629, %v1685
      %v1698 = vadd.f32 %v1630, %v1685
      %v1699 = vadd.f32 %v1631, %v1685
      %v1700 = vadd.f32 %v1632, %v1685
      %v1701 = vadd.f32 %v1633, %v1685
      %v1702 = vadd.f32 %v1634, %v1685
      %v1703 = vadd.f32 %v1635, %v1685
      %v1704 = vadd.f32 %v1636, %v1685
      %v1705 = vadd.f32 %v1637, %v1685
      %v1706 = vadd.f32 %v1638, %v1685
      %v1707 = vadd.f32 %v1639, %v1685
      %v1708 = vadd.f32 %v1640, %v1685
      %v1709 = vadd.f32 %v1641, %v1685
      %v1710 = vadd.f32 %v1642, %v1685
      %v1711 = vadd.f32 %v1643, %v1685
      %v1712 = vadd.f32 %v1644, %v1685
      %v1713 = vadd.f32 %v1645, %v1685
      %v1714 = vadd.f32 %v1646, %v1685
      %v1715 = vadd.f32 %v1647, %v1685
      %v1716 = vadd.f32 %v1648, %v1685
      %v1717 = vadd.f32 %v1649, %v1685
      %v1718 = vadd.f32 %v1650, %v1685
      %v1719 = vadd.f32 %v1651, %v1685
      %v1720 = vadd.f32 %v1652, %v1685
      %v1721 = vadd.f32 %v1653, %v1685
      %v1722 = vadd.f32 %v1654, %v1685
      %v1723 = vadd.f32 %v1655, %v1685
      %v1724 = vadd.f32 %v1656, %v1685
      %v1725 = vadd.f32 %v1657, %v1685
      %v1726 = vadd.f32 %v1658, %v1685
      %v1727 = vadd.f32 %v1659, %v1685
      %v1728 = vadd.f32 %v1660, %v1685
      %v1729 = vadd.f32 %v1661, %v1685
      %v1730 = vadd.f32 %v1662, %v1685
      %v1731 = vadd.f32 %v1663, %v1685
      %v1732 = vadd.f32 %v1664, %v1685
      %v1733 = vadd.f32 %v1665, %v1685
      %v1734 = vadd.f32 %v1666, %v1685
      %v1735 = vadd.f32 %v1667, %v1685
      %v1736 = vadd.f32 %v1668, %v1685
      %v1737 = vadd.f32 %v1669, %v1685
      %v1738 = vadd.f32 %v1670, %v1685
      %v1739 = vadd.f32 %v1671, %v1685
      %v1740 = vadd.f32 %v1672, %v1685
      %v1741 = vadd.f32 %v1673, %v1685
      %v1742 = vadd.f32 %v1674, %v1685
      %v1743 = vadd.f32 %v1675, %v1685
      %v1744 = vadd.f32 %v1676, %v1685
      %v1745 = vadd.f32 %v1677, %v1685
      %v1746 = vadd.f32 %v1678, %v1685
      %v1747 = vadd.f32 %v1679, %v1685
      %v1748 = vadd.f32 %v1680, %v1685
      %v1749 = vadd.f32 %v1681, %v1685
      %v1750 = vadd.f32 %v1682, %v1685
      %v1751 = vmax.f32 %v1687, 0.0
      %v1752 = vmax.f32 %v1688, 0.0
      %v1753 = vmax.f32 %v1689, 0.0
      %v1754 = vmax.f32 %v1690, 0.0
      %v1755 = vmax.f32 %v1691, 0.0
      %v1756 = vmax.f32 %v1692, 0.0
      %v1757 = vmax.f32 %v1693, 0.0
      %v1758 = vmax.f32 %v1694, 0.0
      %v1759 = vmax.f32 %v1695, 0.0
      %v1760 = vmax.f32 %v1696, 0.0
      %v1761 = vmax.f32 %v1697, 0.0
      %v1762 = vmax.f32 %v1698, 0.0
      %v1763 = vmax.f32 %v1699, 0.0
      %v1764 = vmax.f32 %v1700, 0.0
      %v1765 = vmax.f32 %v1701, 0.0
      %v1766 = vmax.f32 %v1702, 0.0
      %v1767 = vmax.f32 %v1703, 0.0
      %v1768 = vmax.f32 %v1704, 0.0
      %v1769 = vmax.f32 %v1705, 0.0
      %v1770 = vmax.f32 %v1706, 0.0
      %v1771 = vmax.f32 %v1707, 0.0
      %v1772 = vmax.f32 %v1708, 0.0
      %v1773 = vmax.f32 %v1709, 0.0
      %v1774 = vmax.f32 %v1710, 0.0
      %v1775 = vmax.f32 %v1711, 0.0
      %v1776 = vmax.f32 %v1712, 0.0
      %v1777 = vmax.f32 %v1713, 0.0
      %v1778 = vmax.f32 %v1714, 0.0
      %v1779 = vmax.f32 %v1715, 0.0
      %v1780 = vmax.f32 %v1716, 0.0
      %v1781 = vmax.f32 %v1717, 0.0
      %v1782 = vmax.f32 %v1718, 0.0
      %v1783 = vmax.f32 %v1719, 0.0
      %v1784 = vmax.f32 %v1720, 0.0
      %v1785 = vmax.f32 %v1721, 0.0
      %v1786 = vmax.f32 %v1722, 0.0
      %v1787 = vmax.f32 %v1723, 0.0
      %v1788 = vmax.f32 %v1724, 0.0
      %v1789 = vmax.f32 %v1725, 0.0
      %v1790 = vmax.f32 %v1726, 0.0
      %v1791 = vmax.f32 %v1727, 0.0
      %v1792 = vmax.f32 %v1728, 0.0
      %v1793 = vmax.f32 %v1729, 0.0
      %v1794 = vmax.f32 %v1730, 0.0
      %v1795 = vmax.f32 %v1731, 0.0
      %v1796 = vmax.f32 %v1732, 0.0
      %v1797 = vmax.f32 %v1733, 0.0
      %v1798 = vmax.f32 %v1734, 0.0
      %v1799 = vmax.f32 %v1735, 0.0
      %v1800 = vmax.f32 %v1736, 0.0
      %v1801 = vmax.f32 %v1737, 0.0
      %v1802 = vmax.f32 %v1738, 0.0
      %v1803 = vmax.f32 %v1739, 0.0
      %v1804 = vmax.f32 %v1740, 0.0
      %v1805 = vmax.f32 %v1741, 0.0
      %v1806 = vmax.f32 %v1742, 0.0
      %v1807 = vmax.f32 %v1743, 0.0
      %v1808 = vmax.f32 %v1744, 0.0
      %v1809 = vmax.f32 %v1745, 0.0
      %v1810 = vmax.f32 %v1746, 0.0
      %v1811 = vmax.f32 %v1747, 0.0
      %v1812 = vmax.f32 %v1748, 0.0
      %v1813 = vmax.f32 %v1749, 0.0
      %v1814 = vmax.f32 %v1750, 0.0
      %v1815 = vpack.c.bf16 %v1752, %v1751
      %v1816 = vpack.c.bf16 %v1754, %v1753
      %v1817 = vpack.c.bf16 %v1756, %v1755
      %v1818 = vpack.c.bf16 %v1758, %v1757
      %v1819 = vpack.c.bf16 %v1760, %v1759
      %v1820 = vpack.c.bf16 %v1762, %v1761
      %v1821 = vpack.c.bf16 %v1764, %v1763
      %v1822 = vpack.c.bf16 %v1766, %v1765
      %v1823 = vpack.c.bf16 %v1768, %v1767
      %v1824 = vpack.c.bf16 %v1770, %v1769
      %v1825 = vpack.c.bf16 %v1772, %v1771
      %v1826 = vpack.c.bf16 %v1774, %v1773
      %v1827 = vpack.c.bf16 %v1776, %v1775
      %v1828 = vpack.c.bf16 %v1778, %v1777
      %v1829 = vpack.c.bf16 %v1780, %v1779
      %v1830 = vpack.c.bf16 %v1782, %v1781
      %v1831 = vpack.c.bf16 %v1784, %v1783
      %v1832 = vpack.c.bf16 %v1786, %v1785
      %v1833 = vpack.c.bf16 %v1788, %v1787
      %v1834 = vpack.c.bf16 %v1790, %v1789
      %v1835 = vpack.c.bf16 %v1792, %v1791
      %v1836 = vpack.c.bf16 %v1794, %v1793
      %v1837 = vpack.c.bf16 %v1796, %v1795
      %v1838 = vpack.c.bf16 %v1798, %v1797
      %v1839 = vpack.c.bf16 %v1800, %v1799
      %v1840 = vpack.c.bf16 %v1802, %v1801
      %v1841 = vpack.c.bf16 %v1804, %v1803
      %v1842 = vpack.c.bf16 %v1806, %v1805
      %v1843 = vpack.c.bf16 %v1808, %v1807
      %v1844 = vpack.c.bf16 %v1810, %v1809
      %v1845 = vpack.c.bf16 %v1812, %v1811
      %v1846 = vpack.c.bf16 %v1814, %v1813
      %v1847 = vld [vmem:[%s4] sm:$0xf]
      %v1848 = vld [vmem:[%s4 + $0x4] sm:$0xf]
      %v1849 = vld [vmem:[%s5] sm:$0x1]
      %v1851 = vperm.slane %v1849, 0
      %v1855 = vunpack.c.l.b16 %v1847
      %v1856 = vunpack.c.l.b16 %v1848
      %v1857 = vpack.c.b16 %v1856, %v1855
      %vm1859 = vcmask 130048
      %v1861 = vsel %vm1859, %v1815, 0
      %v1864 = vsel %vm1859, %v1816, 0
      %v1867 = vsel %vm1859, %v1817, 0
      %v1870 = vsel %vm1859, %v1818, 0
      %v1873 = vsel %vm1859, %v1819, 0
      %v1876 = vsel %vm1859, %v1820, 0
      %v1879 = vsel %vm1859, %v1821, 0
      %v1882 = vsel %vm1859, %v1822, 0
      %v1885 = vsel %vm1859, %v1823, 0
      %v1888 = vsel %vm1859, %v1824, 0
      %v1891 = vsel %vm1859, %v1825, 0
      %v1894 = vsel %vm1859, %v1826, 0
      %v1897 = vsel %vm1859, %v1827, 0
      %v1900 = vsel %vm1859, %v1828, 0
      %v1903 = vsel %vm1859, %v1829, 0
      %v1906 = vsel %vm1859, %v1830, 0
      %v1909 = vsel %vm1859, %v1831, 0
      %v1912 = vsel %vm1859, %v1832, 0
      %v1915 = vsel %vm1859, %v1833, 0
      %v1918 = vsel %vm1859, %v1834, 0
      %v1921 = vsel %vm1859, %v1835, 0
      %v1924 = vsel %vm1859, %v1836, 0
      %v1927 = vsel %vm1859, %v1837, 0
      %v1930 = vsel %vm1859, %v1838, 0
      %v1933 = vsel %vm1859, %v1839, 0
      %v1936 = vsel %vm1859, %v1840, 0
      %v1939 = vsel %vm1859, %v1841, 0
      %v1942 = vsel %vm1859, %v1842, 0
      %v1945 = vsel %vm1859, %v1843, 0
      %v1948 = vsel %vm1859, %v1844, 0
      %v1951 = vsel %vm1859, %v1845, 0
      %v1954 = vsel %vm1859, %v1846, 0
      %1956 = vmatpush.bf16.msra.mxu0 0
      %1957 = vmatpush.bf16.msra.mxu0 0
      %1958 = vmatpush.bf16.msra.mxu0 0
      %1959 = vmatpush.bf16.msra.mxu0 0
      %1960 = vmatpush.bf16.msra.mxu0 0
      %1961 = vmatpush.bf16.msra.mxu0 0
      %1962 = vmatpush.bf16.msra.mxu0 0
      %1963 = vmatpush.bf16.msra.mxu0 %v1857
      %1964 = vmatmul.bf16.gmra.mxu0 %v1861
      %v1965 = vpop.f32.mrf.mxu0
      %v1966 = vadd.f32 %v1851, %v1965
      %v1967 = vpop.f32.mrf.mxu0
      %v1968 = vadd.f32 %v1851, %v1967
      %1969 = vmatmul.bf16.gmra.mxu0 %v1864
      %v1970 = vpop.f32.mrf.mxu0
      %v1971 = vadd.f32 %v1851, %v1970
      %v1972 = vpop.f32.mrf.mxu0
      %v1973 = vadd.f32 %v1851, %v1972
      %1974 = vmatmul.bf16.gmra.mxu0 %v1867
      %v1975 = vpop.f32.mrf.mxu0
      %v1976 = vadd.f32 %v1851, %v1975
      %v1977 = vpop.f32.mrf.mxu0
      %v1978 = vadd.f32 %v1851, %v1977
      %1979 = vmatmul.bf16.gmra.mxu0 %v1870
      %v1980 = vpop.f32.mrf.mxu0
      %v1981 = vadd.f32 %v1851, %v1980
      %v1982 = vpop.f32.mrf.mxu0
      %v1983 = vadd.f32 %v1851, %v1982
      %1984 = vmatmul.bf16.gmra.mxu0 %v1873
      %v1985 = vpop.f32.mrf.mxu0
      %v1986 = vadd.f32 %v1851, %v1985
      %v1987 = vpop.f32.mrf.mxu0
      %v1988 = vadd.f32 %v1851, %v1987
      %1989 = vmatmul.bf16.gmra.mxu0 %v1876
      %v1990 = vpop.f32.mrf.mxu0
      %v1991 = vadd.f32 %v1851, %v1990
      %v1992 = vpop.f32.mrf.mxu0
      %v1993 = vadd.f32 %v1851, %v1992
      %1994 = vmatmul.bf16.gmra.mxu0 %v1879
      %v1995 = vpop.f32.mrf.mxu0
      %v1996 = vadd.f32 %v1851, %v1995
      %v1997 = vpop.f32.mrf.mxu0
      %v1998 = vadd.f32 %v1851, %v1997
      %1999 = vmatmul.bf16.gmra.mxu0 %v1882
      %v2000 = vpop.f32.mrf.mxu0
      %v2001 = vadd.f32 %v1851, %v2000
      %v2002 = vpop.f32.mrf.mxu0
      %v2003 = vadd.f32 %v1851, %v2002
      %2004 = vmatmul.bf16.gmra.mxu0 %v1885
      %v2005 = vpop.f32.mrf.mxu0
      %v2006 = vadd.f32 %v1851, %v2005
      %v2007 = vpop.f32.mrf.mxu0
      %v2008 = vadd.f32 %v1851, %v2007
      %2009 = vmatmul.bf16.gmra.mxu0 %v1888
      %v2010 = vpop.f32.mrf.mxu0
      %v2011 = vadd.f32 %v1851, %v2010
      %v2012 = vpop.f32.mrf.mxu0
      %v2013 = vadd.f32 %v1851, %v2012
      %2014 = vmatmul.bf16.gmra.mxu0 %v1891
      %v2015 = vpop.f32.mrf.mxu0
      %v2016 = vadd.f32 %v1851, %v2015
      %v2017 = vpop.f32.mrf.mxu0
      %v2018 = vadd.f32 %v1851, %v2017
      %2019 = vmatmul.bf16.gmra.mxu0 %v1894
      %v2020 = vpop.f32.mrf.mxu0
      %v2021 = vadd.f32 %v1851, %v2020
      %v2022 = vpop.f32.mrf.mxu0
      %v2023 = vadd.f32 %v1851, %v2022
      %2024 = vmatmul.bf16.gmra.mxu0 %v1897
      %v2025 = vpop.f32.mrf.mxu0
      %v2026 = vadd.f32 %v1851, %v2025
      %v2027 = vpop.f32.mrf.mxu0
      %v2028 = vadd.f32 %v1851, %v2027
      %2029 = vmatmul.bf16.gmra.mxu0 %v1900
      %v2030 = vpop.f32.mrf.mxu0
      %v2031 = vadd.f32 %v1851, %v2030
      %v2032 = vpop.f32.mrf.mxu0
      %v2033 = vadd.f32 %v1851, %v2032
      %2034 = vmatmul.bf16.gmra.mxu0 %v1903
      %v2035 = vpop.f32.mrf.mxu0
      %v2036 = vadd.f32 %v1851, %v2035
      %v2037 = vpop.f32.mrf.mxu0
      %v2038 = vadd.f32 %v1851, %v2037
      %2039 = vmatmul.bf16.gmra.mxu0 %v1906
      %v2040 = vpop.f32.mrf.mxu0
      %v2041 = vadd.f32 %v1851, %v2040
      %v2042 = vpop.f32.mrf.mxu0
      %v2043 = vadd.f32 %v1851, %v2042
      %2044 = vmatmul.bf16.gmra.mxu0 %v1909
      %v2045 = vpop.f32.mrf.mxu0
      %v2046 = vadd.f32 %v1851, %v2045
      %v2047 = vpop.f32.mrf.mxu0
      %v2048 = vadd.f32 %v1851, %v2047
      %2049 = vmatmul.bf16.gmra.mxu0 %v1912
      %v2050 = vpop.f32.mrf.mxu0
      %v2051 = vadd.f32 %v1851, %v2050
      %v2052 = vpop.f32.mrf.mxu0
      %v2053 = vadd.f32 %v1851, %v2052
      %2054 = vmatmul.bf16.gmra.mxu0 %v1915
      %v2055 = vpop.f32.mrf.mxu0
      %v2056 = vadd.f32 %v1851, %v2055
      %v2057 = vpop.f32.mrf.mxu0
      %v2058 = vadd.f32 %v1851, %v2057
      %2059 = vmatmul.bf16.gmra.mxu0 %v1918
      %v2060 = vpop.f32.mrf.mxu0
      %v2061 = vadd.f32 %v1851, %v2060
      %v2062 = vpop.f32.mrf.mxu0
      %v2063 = vadd.f32 %v1851, %v2062
      %2064 = vmatmul.bf16.gmra.mxu0 %v1921
      %v2065 = vpop.f32.mrf.mxu0
      %v2066 = vadd.f32 %v1851, %v2065
      %v2067 = vpop.f32.mrf.mxu0
      %v2068 = vadd.f32 %v1851, %v2067
      %2069 = vmatmul.bf16.gmra.mxu0 %v1924
      %v2070 = vpop.f32.mrf.mxu0
      %v2071 = vadd.f32 %v1851, %v2070
      %v2072 = vpop.f32.mrf.mxu0
      %v2073 = vadd.f32 %v1851, %v2072
      %2074 = vmatmul.bf16.gmra.mxu0 %v1927
      %v2075 = vpop.f32.mrf.mxu0
      %v2076 = vadd.f32 %v1851, %v2075
      %v2077 = vpop.f32.mrf.mxu0
      %v2078 = vadd.f32 %v1851, %v2077
      %2079 = vmatmul.bf16.gmra.mxu0 %v1930
      %v2080 = vpop.f32.mrf.mxu0
      %v2081 = vadd.f32 %v1851, %v2080
      %v2082 = vpop.f32.mrf.mxu0
      %v2083 = vadd.f32 %v1851, %v2082
      %2084 = vmatmul.bf16.gmra.mxu0 %v1933
      %v2085 = vpop.f32.mrf.mxu0
      %v2086 = vadd.f32 %v1851, %v2085
      %v2087 = vpop.f32.mrf.mxu0
      %v2088 = vadd.f32 %v1851, %v2087
      %2089 = vmatmul.bf16.gmra.mxu0 %v1936
      %v2090 = vpop.f32.mrf.mxu0
      %v2091 = vadd.f32 %v1851, %v2090
      %v2092 = vpop.f32.mrf.mxu0
      %v2093 = vadd.f32 %v1851, %v2092
      %2094 = vmatmul.bf16.gmra.mxu0 %v1939
      %v2095 = vpop.f32.mrf.mxu0
      %v2096 = vadd.f32 %v1851, %v2095
      %v2097 = vpop.f32.mrf.mxu0
      %v2098 = vadd.f32 %v1851, %v2097
      %2099 = vmatmul.bf16.gmra.mxu0 %v1942
      %v2100 = vpop.f32.mrf.mxu0
      %v2101 = vadd.f32 %v1851, %v2100
      %v2102 = vpop.f32.mrf.mxu0
      %v2103 = vadd.f32 %v1851, %v2102
      %2104 = vmatmul.bf16.gmra.mxu0 %v1945
      %v2105 = vpop.f32.mrf.mxu0
      %v2106 = vadd.f32 %v1851, %v2105
      %v2107 = vpop.f32.mrf.mxu0
      %v2108 = vadd.f32 %v1851, %v2107
      %2109 = vmatmul.bf16.gmra.mxu0 %v1948
      %v2110 = vpop.f32.mrf.mxu0
      %v2111 = vadd.f32 %v1851, %v2110
      %v2112 = vpop.f32.mrf.mxu0
      %v2113 = vadd.f32 %v1851, %v2112
      %2114 = vmatmul.bf16.gmra.mxu0 %v1951
      %v2115 = vpop.f32.mrf.mxu0
      %v2116 = vadd.f32 %v1851, %v2115
      %v2117 = vpop.f32.mrf.mxu0
      %v2118 = vadd.f32 %v1851, %v2117
      %2119 = vmatmul.bf16.gmra.mxu0 %v1954
      %v2120 = vpop.f32.mrf.mxu0
      %v2121 = vadd.f32 %v1851, %v2120
      %v2122 = vpop.f32.mrf.mxu0
      %v2123 = vadd.f32 %v1851, %v2122
      %2124 = vdwg.mxu0
      %vm2125 = vcmask 64512
      %2126 = vst.msk [vmem:[%s256] sm:$0xff] %vm2125, %v1966
      %2127 = vst.msk [vmem:[%s256 + $0x8] sm:$0xff] %vm2125, %v1968
      %2128 = vst.msk [vmem:[%s256 + $0x10] sm:$0xff] %vm2125, %v1971
      %2129 = vst.msk [vmem:[%s256 + $0x18] sm:$0xff] %vm2125, %v1973
      %2130 = vst.msk [vmem:[%s256 + $0x20] sm:$0xff] %vm2125, %v1976
      %2131 = vst.msk [vmem:[%s256 + $0x28] sm:$0xff] %vm2125, %v1978
      %2132 = vst.msk [vmem:[%s256 + $0x30] sm:$0xff] %vm2125, %v1981
      %2133 = vst.msk [vmem:[%s256 + $0x38] sm:$0xff] %vm2125, %v1983
      %2134 = vst.msk [vmem:[%s256 + $0x40] sm:$0xff] %vm2125, %v1986
      %2135 = vst.msk [vmem:[%s256 + $0x48] sm:$0xff] %vm2125, %v1988
      %2136 = vst.msk [vmem:[%s256 + $0x50] sm:$0xff] %vm2125, %v1991
      %2137 = vst.msk [vmem:[%s256 + $0x58] sm:$0xff] %vm2125, %v1993
      %2138 = vst.msk [vmem:[%s256 + $0x60] sm:$0xff] %vm2125, %v1996
      %2139 = vst.msk [vmem:[%s256 + $0x68] sm:$0xff] %vm2125, %v1998
      %2140 = vst.msk [vmem:[%s256 + $0x70] sm:$0xff] %vm2125, %v2001
      %2141 = vst.msk [vmem:[%s256 + $0x78] sm:$0xff] %vm2125, %v2003
      %2142 = vst.msk [vmem:[%s256 + $0x80] sm:$0xff] %vm2125, %v2006
      %2143 = vst.msk [vmem:[%s256 + $0x88] sm:$0xff] %vm2125, %v2008
      %2144 = vst.msk [vmem:[%s256 + $0x90] sm:$0xff] %vm2125, %v2011
      %2145 = vst.msk [vmem:[%s256 + $0x98] sm:$0xff] %vm2125, %v2013
      %2146 = vst.msk [vmem:[%s256 + $0xa0] sm:$0xff] %vm2125, %v2016
      %2147 = vst.msk [vmem:[%s256 + $0xa8] sm:$0xff] %vm2125, %v2018
      %2148 = vst.msk [vmem:[%s256 + $0xb0] sm:$0xff] %vm2125, %v2021
      %2149 = vst.msk [vmem:[%s256 + $0xb8] sm:$0xff] %vm2125, %v2023
      %2150 = vst.msk [vmem:[%s256 + $0xc0] sm:$0xff] %vm2125, %v2026
      %2151 = vst.msk [vmem:[%s256 + $0xc8] sm:$0xff] %vm2125, %v2028
      %2152 = vst.msk [vmem:[%s256 + $0xd0] sm:$0xff] %vm2125, %v2031
      %2153 = vst.msk [vmem:[%s256 + $0xd8] sm:$0xff] %vm2125, %v2033
      %2154 = vst.msk [vmem:[%s256 + $0xe0] sm:$0xff] %vm2125, %v2036
      %2155 = vst.msk [vmem:[%s256 + $0xe8] sm:$0xff] %vm2125, %v2038
      %2156 = vst.msk [vmem:[%s256 + $0xf0] sm:$0xff] %vm2125, %v2041
      %2157 = vst.msk [vmem:[%s256 + $0xf8] sm:$0xff] %vm2125, %v2043
      %2158 = vst.msk [vmem:[%s256 + $0x100] sm:$0xff] %vm2125, %v2046
      %2159 = vst.msk [vmem:[%s256 + $0x108] sm:$0xff] %vm2125, %v2048
      %2160 = vst.msk [vmem:[%s256 + $0x110] sm:$0xff] %vm2125, %v2051
      %2161 = vst.msk [vmem:[%s256 + $0x118] sm:$0xff] %vm2125, %v2053
      %2162 = vst.msk [vmem:[%s256 + $0x120] sm:$0xff] %vm2125, %v2056
      %2163 = vst.msk [vmem:[%s256 + $0x128] sm:$0xff] %vm2125, %v2058
      %2164 = vst.msk [vmem:[%s256 + $0x130] sm:$0xff] %vm2125, %v2061
      %2165 = vst.msk [vmem:[%s256 + $0x138] sm:$0xff] %vm2125, %v2063
      %2166 = vst.msk [vmem:[%s256 + $0x140] sm:$0xff] %vm2125, %v2066
      %2167 = vst.msk [vmem:[%s256 + $0x148] sm:$0xff] %vm2125, %v2068
      %2168 = vst.msk [vmem:[%s256 + $0x150] sm:$0xff] %vm2125, %v2071
      %2169 = vst.msk [vmem:[%s256 + $0x158] sm:$0xff] %vm2125, %v2073
      %2170 = vst.msk [vmem:[%s256 + $0x160] sm:$0xff] %vm2125, %v2076
      %2171 = vst.msk [vmem:[%s256 + $0x168] sm:$0xff] %vm2125, %v2078
      %2172 = vst.msk [vmem:[%s256 + $0x170] sm:$0xff] %vm2125, %v2081
      %2173 = vst.msk [vmem:[%s256 + $0x178] sm:$0xff] %vm2125, %v2083
      %2174 = vst.msk [vmem:[%s256 + $0x180] sm:$0xff] %vm2125, %v2086
      %2175 = vst.msk [vmem:[%s256 + $0x188] sm:$0xff] %vm2125, %v2088
      %2176 = vst.msk [vmem:[%s256 + $0x190] sm:$0xff] %vm2125, %v2091
      %2177 = vst.msk [vmem:[%s256 + $0x198] sm:$0xff] %vm2125, %v2093
      %2178 = vst.msk [vmem:[%s256 + $0x1a0] sm:$0xff] %vm2125, %v2096
      %2179 = vst.msk [vmem:[%s256 + $0x1a8] sm:$0xff] %vm2125, %v2098
      %2180 = vst.msk [vmem:[%s256 + $0x1b0] sm:$0xff] %vm2125, %v2101
      %2181 = vst.msk [vmem:[%s256 + $0x1b8] sm:$0xff] %vm2125, %v2103
      %2182 = vst.msk [vmem:[%s256 + $0x1c0] sm:$0xff] %vm2125, %v2106
      %2183 = vst.msk [vmem:[%s256 + $0x1c8] sm:$0xff] %vm2125, %v2108
      %2184 = vst.msk [vmem:[%s256 + $0x1d0] sm:$0xff] %vm2125, %v2111
      %2185 = vst.msk [vmem:[%s256 + $0x1d8] sm:$0xff] %vm2125, %v2113
      %2186 = vst.msk [vmem:[%s256 + $0x1e0] sm:$0xff] %vm2125, %v2116
      %2187 = vst.msk [vmem:[%s256 + $0x1e8] sm:$0xff] %vm2125, %v2118
      %2188 = vst.msk [vmem:[%s256 + $0x1f0] sm:$0xff] %vm2125, %v2121
      %2189 = vst.msk [vmem:[%s256 + $0x1f8] sm:$0xff] %vm2125, %v2123
      %s2190 = smul.u32 64, %s17
      %p2191 = scmp.lt.s32.totalorder %s2190, 127
      %s2192 = scalar_select %p2191, %s2190, 127
      %s2193 = smul.addr %s2192, 8
      %s2194 = scalar_lea.vmem %s6, %s2193
      // Predicated region
      $region45: #{localization_forward.6} parent=43 // pred_check
        %p2195 = pneg %p166
      $region46: #{localization_forward.6} parent=43 // pred_check_branch
        %2197 = sbr.rel (%p2195) target = $region48
      $region47: #{localization_forward.6} parent=43 // pred_region
        %s2198 = smul.u32 64, %s17
      $region48: #{localization_forward.6} parent=43 // pred_fallthru
        _
    $region44: #{localization_forward.6} parent=5 // pred_fallthru
      _
    %p2199 = scmp.le.s32.totalorder 2, %s12
    // Predicated region
    $region49: #{localization_forward.6} parent=5 // pred_check
      %p2200 = pneg %p2199
    $region50: #{localization_forward.6} parent=5 // pred_check_branch
      %2202 = sbr.rel (%p2200) target = $region52
    $region51: #{localization_forward.6} parent=5 // pred_region
      %s2203 = ssub.s32 %s12, 2
      // Predicated region
      $region53: #{localization_forward.6} parent=51 // pred_check
        %p2204 = pneg %p172
      $region54: #{localization_forward.6} parent=51 // pred_check_branch
        %2206 = sbr.rel (%p2204) target = $region56
      $region55: #{localization_forward.6} parent=51 // pred_region
        %s2207 = smul.u32 64, %s18
        %p2208 = scmp.lt.s32.totalorder %s2207, 127
        %s2209 = scalar_select %p2208, %s2207, 127
        %s2210 = smul.addr %s2209, 8
        %s2211 = scalar_lea.vmem %s6, %s2210
      $region56: #{localization_forward.6} parent=51 // pred_fallthru
        _
    $region52: #{localization_forward.6} parent=5 // pred_fallthru
      _
  $region6: #{localization_forward.6} parent=0 // loop_footer
    %s16 = sadd.s32 1, %s12
  $region7: #{localization_forward.6} parent=0 // loop_footer_branch
    %11 = sbr.rel target = $region3
  $region8: #{localization_forward.6} parent=0 // loop_exit
    _

// kernel: localization_forward.7
$region0: #{localization_forward.7}
  #allocation0 [shape = 'u32[]', space=smem, size = 0x4, offset = 0x4, fixed_abs, tag = 'smem constant byte address 0x4 - core index']
  #allocation1 [shape = 'u32[72,128]{1,0:T(1,128)}', space=vmem, size = 0x9000, scoped, tag = 'internal scratch']
  %s0 = inlined_call_operand.vmem [shape: bf16[1024,72], index: 0, kind: input, shape index: {}]
  %s1 = inlined_call_operand.vmem [shape: bf16[72,32], index: 1, kind: input, shape index: {}]
  %s2 = inlined_call_operand.vmem [shape: f32[1,32], index: 2, kind: input, shape index: {}]
  %s3 = inlined_call_operand.vmem [shape: f32[1,32], index: 3, kind: input, shape index: {}]
  %s4 = inlined_call_operand.vmem [shape: bf16[32,6], index: 4, kind: input, shape index: {}]
  %s5 = inlined_call_operand.vmem [shape: f32[1,6], index: 5, kind: input, shape index: {}]
  %s6 = inlined_call_operand.vmem [shape: f32[1024,6], index: 6, kind: output, shape index: {}]
  %s7 = sld [smem:[#allocation0]]
  $region57: #{localization_forward.7} parent=0
    _
  %s9 = ssub.s32 1, %s7
  %s10 = scalar_select 0, %s9, %s7
  loop: start=0, step=1, limit=4
  $region2: #{localization_forward.7} parent=0 // loop_pre_header
    _
  $region3: #{localization_forward.7} parent=0 // loop_header
    %s12 = sphi 0, %s16
    %p13 = scmp.ge.s32.totalorder %s12, 4
    %s22 = sphi 0, %s24
    %s25 = sphi 0, %s22
    %s26 = sphi 0, %s25
    %s42 = sphi 0, %s26
    %s46 = sphi 0, %s46
    %s48 = sphi 0, %s46
    %s49 = sphi 0, %s48
    %s63 = sphi 0, %s49
    %s67 = sphi 0, %s67
    %s69 = sphi 0, %s67
    %s70 = sphi 0, %s69
    %s84 = sphi 0, %s70
    %s88 = sphi 0, %s88
    %s90 = sphi 0, %s88
    %s91 = sphi 0, %s90
    %s105 = sphi 0, %s91
    %s109 = sphi 0, %s109
    %s111 = sphi 0, %s109
    %s112 = sphi 0, %s111
    %s126 = sphi 0, %s112
    %s130 = sphi 0, %s130
    %s132 = sphi 0, %s130
    %s133 = sphi 0, %s132
    %s147 = sphi 0, %s133
    %s153 = sphi 0, %s155
    %s156 = sphi 0, %s153
    %s157 = sphi 0, %s156
    %s173 = sphi 0, %s157
  $region4: #{localization_forward.7} parent=0 // loop_header_branch
    %15 = sbr.rel (%p13) target = $region8
  $region5: #{localization_forward.7} parent=0 // loop_body
    %s17 = ssub.s32 %s12, 1
    %s18 = ssub.s32 %s12, 2
    %s19 = sadd.s32 %s12, 1
    %s20 = ssub.s32 %s12, %s19
    %p21 = scmp.eq.s32.totalorder %s20, 0
    %s23 = sadd.s32 %s22, 1
    %s24 = scalar_select %p21, %s22, %s23
    %p27 = pneg %p21
    %p28 = scmp.eq.s32.totalorder %s12, 1
    %p29 = por %p27, %p28
    %p30 = scmp.ne.s32.totalorder %s22, %s25
    %p31 = scmp.eq.s32.totalorder %s12, 0
    %p32 = por %p30, %p31
    %p33 = scmp.ne.s32.totalorder %s22, %s25
    %p34 = scmp.eq.s32.totalorder %s17, 1
    %p35 = por %p33, %p34
    %p36 = scmp.ne.s32.totalorder %s25, %s26
    %p37 = scmp.eq.s32.totalorder %s17, 0
    %p38 = por %p36, %p37
    %p39 = scmp.ne.s32.totalorder %s25, %s26
    %p40 = scmp.eq.s32.totalorder %s18, 1
    %p41 = por %p39, %p40
    %p43 = scmp.ne.s32.totalorder %s26, %s42
    %p44 = scmp.eq.s32.totalorder %s18, 0
    %p45 = por %p43, %p44
    %s47 = sadd.s32 %s46, 1
    %p50 = scmp.eq.s32.totalorder %s12, 1
    %p51 = scmp.ne.s32.totalorder %s46, %s48
    %p52 = scmp.eq.s32.totalorder %s12, 0
    %p53 = por %p51, %p52
    %p54 = scmp.ne.s32.totalorder %s46, %s48
    %p55 = scmp.eq.s32.totalorder %s17, 1
    %p56 = por %p54, %p55
    %p57 = scmp.ne.s32.totalorder %s48, %s49
    %p58 = scmp.eq.s32.totalorder %s17, 0
    %p59 = por %p57, %p58
    %p60 = scmp.ne.s32.totalorder %s48, %s49
    %p61 = scmp.eq.s32.totalorder %s18, 1
    %p62 = por %p60, %p61
    %p64 = scmp.ne.s32.totalorder %s49, %s63
    %p65 = scmp.eq.s32.totalorder %s18, 0
    %p66 = por %p64, %p65
    %s68 = sadd.s32 %s67, 1
    %p71 = scmp.eq.s32.totalorder %s12, 1
    %p72 = scmp.ne.s32.totalorder %s67, %s69
    %p73 = scmp.eq.s32.totalorder %s12, 0
    %p74 = por %p72, %p73
    %p75 = scmp.ne.s32.totalorder %s67, %s69
    %p76 = scmp.eq.s32.totalorder %s17, 1
    %p77 = por %p75, %p76
    %p78 = scmp.ne.s32.totalorder %s69, %s70
    %p79 = scmp.eq.s32.totalorder %s17, 0
    %p80 = por %p78, %p79
    %p81 = scmp.ne.s32.totalorder %s69, %s70
    %p82 = scmp.eq.s32.totalorder %s18, 1
    %p83 = por %p81, %p82
    %p85 = scmp.ne.s32.totalorder %s70, %s84
    %p86 = scmp.eq.s32.totalorder %s18, 0
    %p87 = por %p85, %p86
    %s89 = sadd.s32 %s88, 1
    %p92 = scmp.eq.s32.totalorder %s12, 1
    %p93 = scmp.ne.s32.totalorder %s88, %s90
    %p94 = scmp.eq.s32.totalorder %s12, 0
    %p95 = por %p93, %p94
    %p96 = scmp.ne.s32.totalorder %s88, %s90
    %p97 = scmp.eq.s32.totalorder %s17, 1
    %p98 = por %p96, %p97
    %p99 = scmp.ne.s32.totalorder %s90, %s91
    %p100 = scmp.eq.s32.totalorder %s17, 0
    %p101 = por %p99, %p100
    %p102 = scmp.ne.s32.totalorder %s90, %s91
    %p103 = scmp.eq.s32.totalorder %s18, 1
    %p104 = por %p102, %p103
    %p106 = scmp.ne.s32.totalorder %s91, %s105
    %p107 = scmp.eq.s32.totalorder %s18, 0
    %p108 = por %p106, %p107
    %s110 = sadd.s32 %s109, 1
    %p113 = scmp.eq.s32.totalorder %s12, 1
    %p114 = scmp.ne.s32.totalorder %s109, %s111
    %p115 = scmp.eq.s32.totalorder %s12, 0
    %p116 = por %p114, %p115
    %p117 = scmp.ne.s32.totalorder %s109, %s111
    %p118 = scmp.eq.s32.totalorder %s17, 1
    %p119 = por %p117, %p118
    %p120 = scmp.ne.s32.totalorder %s111, %s112
    %p121 = scmp.eq.s32.totalorder %s17, 0
    %p122 = por %p120, %p121
    %p123 = scmp.ne.s32.totalorder %s111, %s112
    %p124 = scmp.eq.s32.totalorder %s18, 1
    %p125 = por %p123, %p124
    %p127 = scmp.ne.s32.totalorder %s112, %s126
    %p128 = scmp.eq.s32.totalorder %s18, 0
    %p129 = por %p127, %p128
    %s131 = sadd.s32 %s130, 1
    %p134 = scmp.eq.s32.totalorder %s12, 1
    %p135 = scmp.ne.s32.totalorder %s130, %s132
    %p136 = scmp.eq.s32.totalorder %s12, 0
    %p137 = por %p135, %p136
    %p138 = scmp.ne.s32.totalorder %s130, %s132
    %p139 = scmp.eq.s32.totalorder %s17, 1
    %p140 = por %p138, %p139
    %p141 = scmp.ne.s32.totalorder %s132, %s133
    %p142 = scmp.eq.s32.totalorder %s17, 0
    %p143 = por %p141, %p142
    %p144 = scmp.ne.s32.totalorder %s132, %s133
    %p145 = scmp.eq.s32.totalorder %s18, 1
    %p146 = por %p144, %p145
    %p148 = scmp.ne.s32.totalorder %s133, %s147
    %p149 = scmp.eq.s32.totalorder %s18, 0
    %p150 = por %p148, %p149
    %s151 = ssub.s32 %s12, %s19
    %p152 = scmp.eq.s32.totalorder %s151, 0
    %s154 = sadd.s32 %s153, 1
    %s155 = scalar_select %p152, %s153, %s154
    %p158 = pneg %p152
    %p159 = scmp.eq.s32.totalorder %s12, 1
    %p160 = por %p158, %p159
    %p161 = scmp.ne.s32.totalorder %s153, %s156
    %p162 = scmp.eq.s32.totalorder %s12, 0
    %p163 = por %p161, %p162
    %p164 = scmp.ne.s32.totalorder %s153, %s156
    %p165 = scmp.eq.s32.totalorder %s17, 1
    %p166 = por %p164, %p165
    %p167 = scmp.ne.s32.totalorder %s156, %s157
    %p168 = scmp.eq.s32.totalorder %s17, 0
    %p169 = por %p167, %p168
    %p170 = scmp.ne.s32.totalorder %s156, %s157
    %p171 = scmp.eq.s32.totalorder %s18, 1
    %p172 = por %p170, %p171
    %p174 = scmp.ne.s32.totalorder %s157, %s173
    %p175 = scmp.eq.s32.totalorder %s18, 0
    %p176 = por %p174, %p175
    %p177 = scmp.le.s32.totalorder 1, %s12
    %p178 = scmp.lt.s32.totalorder %s12, 3
    %p179 = pnand %p177, %p178
    %p180 = pneg %p179
    // Predicated region
    $region9: #{localization_forward.7} parent=5 // pred_check
      _
    $region10: #{localization_forward.7} parent=5 // pred_check_branch
      %182 = sbr.rel (%p179) target = $region12
    $region11: #{localization_forward.7} parent=5 // pred_region
      %s183 = ssub.s32 %s12, 1
      // Predicated region
      $region13: #{localization_forward.7} parent=11 // pred_check
        %p184 = pneg %p59
      $region14: #{localization_forward.7} parent=11 // pred_check_branch
        %186 = sbr.rel (%p184) target = $region16
      $region15: #{localization_forward.7} parent=11 // pred_region
        _
      $region16: #{localization_forward.7} parent=11 // pred_fallthru
        _
      // Predicated region
      $region17: #{localization_forward.7} parent=11 // pred_check
        %p187 = pneg %p80
      $region18: #{localization_forward.7} parent=11 // pred_check_branch
        %189 = sbr.rel (%p187) target = $region20
      $region19: #{localization_forward.7} parent=11 // pred_region
        _
      $region20: #{localization_forward.7} parent=11 // pred_fallthru
        _
      // Predicated region
      $region21: #{localization_forward.7} parent=11 // pred_check
        %p190 = pneg %p101
      $region22: #{localization_forward.7} parent=11 // pred_check_branch
        %192 = sbr.rel (%p190) target = $region24
      $region23: #{localization_forward.7} parent=11 // pred_region
        _
      $region24: #{localization_forward.7} parent=11 // pred_fallthru
        _
      // Predicated region
      $region25: #{localization_forward.7} parent=11 // pred_check
        %p193 = pneg %p122
      $region26: #{localization_forward.7} parent=11 // pred_check_branch
        %195 = sbr.rel (%p193) target = $region28
      $region27: #{localization_forward.7} parent=11 // pred_region
        _
      $region28: #{localization_forward.7} parent=11 // pred_fallthru
        _
      // Predicated region
      $region29: #{localization_forward.7} parent=11 // pred_check
        %p196 = pneg %p143
      $region30: #{localization_forward.7} parent=11 // pred_check_branch
        %198 = sbr.rel (%p196) target = $region32
      $region31: #{localization_forward.7} parent=11 // pred_region
        _
      $region32: #{localization_forward.7} parent=11 // pred_fallthru
        _
    $region12: #{localization_forward.7} parent=5 // pred_fallthru
      _
    %p199 = scmp.lt.s32.totalorder %s12, 2
    // Predicated region
    $region33: #{localization_forward.7} parent=5 // pred_check
      %p200 = pneg %p199
    $region34: #{localization_forward.7} parent=5 // pred_check_branch
      %202 = sbr.rel (%p200) target = $region36
    $region35: #{localization_forward.7} parent=5 // pred_region
      // Predicated region
      $region37: #{localization_forward.7} parent=35 // pred_check
        %p203 = pneg %p32
      $region38: #{localization_forward.7} parent=35 // pred_check_branch
        %205 = sbr.rel (%p203) target = $region40
      $region39: #{localization_forward.7} parent=35 // pred_region
        %s206 = smul.u32 64, %s12
        %p207 = scmp.lt.s32.totalorder %s206, 127
        %s208 = scalar_select %p207, %s206, 127
        %s209 = smul.addr %s208, 4
        %s210 = scalar_lea.vmem %s0, %s209
        %s211 = smul.u32 64, %s12
      $region40: #{localization_forward.7} parent=35 // pred_fallthru
        _
    $region36: #{localization_forward.7} parent=5 // pred_fallthru
      _
    %p212 = scmp.le.s32.totalorder 1, %s12
    %p213 = scmp.lt.s32.totalorder %s12, 3
    %p214 = pnand %p212, %p213
    %p215 = pneg %p214
    // Predicated region
    $region41: #{localization_forward.7} parent=5 // pred_check
      _
    $region42: #{localization_forward.7} parent=5 // pred_check_branch
      %217 = sbr.rel (%p214) target = $region44
    $region43: #{localization_forward.7} parent=5 // pred_region
      %s218 = ssub.s32 %s12, 1
      %s219 = smul.u32 64, %s17
      %p220 = scmp.lt.s32.totalorder %s219, 127
      %s221 = scalar_select %p220, %s219, 127
      %s222 = smul.addr %s221, 4
      %s223 = scalar_lea.vmem %s0, %s222
      %p224 = pneg %p38
      %p225 = pneg %p35
      %p226 = pneg %p59
      %p227 = pneg %p56
      %p228 = pneg %p80
      %p229 = pneg %p77
      %p230 = pneg %p101
      %p231 = pneg %p98
      %p232 = pneg %p122
      %p233 = pneg %p119
      %p234 = pneg %p143
      %p235 = pneg %p140
      %p236 = pneg %p169
      %p237 = pneg %p166
      %s238 = smul.u32 64, %s17
      %p239 = scmp.lt.s32.totalorder %s238, 127
      %s240 = scalar_select %p239, %s238, 127
      %s241 = smul.addr %s240, 8
      %s242 = scalar_lea.vmem %s6, %s241
      %s243 = smul.u32 64, %s17
      %p244 = scmp.lt.s32.totalorder %s243, 127
      %s245 = scalar_select %p244, %s243, 127
      %s246 = smul.addr %s245, 4
      %s247 = scalar_lea.vmem %s0, %s246
      %s248 = smul.u32 64, %s17
      %s249 = smul.u32 64, %s17
      %p250 = scmp.lt.s32.totalorder %s249, 127
      %s251 = scalar_select %p250, %s249, 127
      %s252 = smul.addr %s251, 8
      %s253 = scalar_lea.vmem %s6, %s252
      %s254 = smul.u32 64, %s17
      %v256 = vld [vmem:[%s247] sm:$0xf]
      %v257 = vld [vmem:[%s247 + $0x4] sm:$0xf]
      %v258 = vld [vmem:[%s247 + $0x8] sm:$0xf]
      %v259 = vld [vmem:[%s247 + $0xc] sm:$0xf]
      %v260 = vld [vmem:[%s247 + $0x10] sm:$0xf]
      %v261 = vld [vmem:[%s247 + $0x14] sm:$0xf]
      %v262 = vld [vmem:[%s247 + $0x18] sm:$0xf]
      %v263 = vld [vmem:[%s247 + $0x1c] sm:$0xf]
      %v264 = vld [vmem:[%s247 + $0x20] sm:$0xf]
      %v265 = vld [vmem:[%s247 + $0x24] sm:$0xf]
      %v266 = vld [vmem:[%s247 + $0x28] sm:$0xf]
      %v267 = vld [vmem:[%s247 + $0x2c] sm:$0xf]
      %v268 = vld [vmem:[%s247 + $0x30] sm:$0xf]
      %v269 = vld [vmem:[%s247 + $0x34] sm:$0xf]
      %v270 = vld [vmem:[%s247 + $0x38] sm:$0xf]
      %v271 = vld [vmem:[%s247 + $0x3c] sm:$0xf]
      %v272 = vld [vmem:[%s247 + $0x40] sm:$0xf]
      %v273 = vld [vmem:[%s247 + $0x44] sm:$0xf]
      %v274 = vld [vmem:[%s247 + $0x48] sm:$0xf]
      %v275 = vld [vmem:[%s247 + $0x4c] sm:$0xf]
      %v276 = vld [vmem:[%s247 + $0x50] sm:$0xf]
      %v277 = vld [vmem:[%s247 + $0x54] sm:$0xf]
      %v278 = vld [vmem:[%s247 + $0x58] sm:$0xf]
      %v279 = vld [vmem:[%s247 + $0x5c] sm:$0xf]
      %v280 = vld [vmem:[%s247 + $0x60] sm:$0xf]
      %v281 = vld [vmem:[%s247 + $0x64] sm:$0xf]
      %v282 = vld [vmem:[%s247 + $0x68] sm:$0xf]
      %v283 = vld [vmem:[%s247 + $0x6c] sm:$0xf]
      %v284 = vld [vmem:[%s247 + $0x70] sm:$0xf]
      %v285 = vld [vmem:[%s247 + $0x74] sm:$0xf]
      %v286 = vld [vmem:[%s247 + $0x78] sm:$0xf]
      %v287 = vld [vmem:[%s247 + $0x7c] sm:$0xf]
      %v288 = vld [vmem:[%s247 + $0x80] sm:$0xf]
      %v289 = vld [vmem:[%s247 + $0x84] sm:$0xf]
      %v290 = vld [vmem:[%s247 + $0x88] sm:$0xf]
      %v291 = vld [vmem:[%s247 + $0x8c] sm:$0xf]
      %v292 = vld [vmem:[%s247 + $0x90] sm:$0xf]
      %v293 = vld [vmem:[%s247 + $0x94] sm:$0xf]
      %v294 = vld [vmem:[%s247 + $0x98] sm:$0xf]
      %v295 = vld [vmem:[%s247 + $0x9c] sm:$0xf]
      %v296 = vld [vmem:[%s247 + $0xa0] sm:$0xf]
      %v297 = vld [vmem:[%s247 + $0xa4] sm:$0xf]
      %v298 = vld [vmem:[%s247 + $0xa8] sm:$0xf]
      %v299 = vld [vmem:[%s247 + $0xac] sm:$0xf]
      %v300 = vld [vmem:[%s247 + $0xb0] sm:$0xf]
      %v301 = vld [vmem:[%s247 + $0xb4] sm:$0xf]
      %v302 = vld [vmem:[%s247 + $0xb8] sm:$0xf]
      %v303 = vld [vmem:[%s247 + $0xbc] sm:$0xf]
      %v304 = vld [vmem:[%s247 + $0xc0] sm:$0xf]
      %v305 = vld [vmem:[%s247 + $0xc4] sm:$0xf]
      %v306 = vld [vmem:[%s247 + $0xc8] sm:$0xf]
      %v307 = vld [vmem:[%s247 + $0xcc] sm:$0xf]
      %v308 = vld [vmem:[%s247 + $0xd0] sm:$0xf]
      %v309 = vld [vmem:[%s247 + $0xd4] sm:$0xf]
      %v310 = vld [vmem:[%s247 + $0xd8] sm:$0xf]
      %v311 = vld [vmem:[%s247 + $0xdc] sm:$0xf]
      %v312 = vld [vmem:[%s247 + $0xe0] sm:$0xf]
      %v313 = vld [vmem:[%s247 + $0xe4] sm:$0xf]
      %v314 = vld [vmem:[%s247 + $0xe8] sm:$0xf]
      %v315 = vld [vmem:[%s247 + $0xec] sm:$0xf]
      %v316 = vld [vmem:[%s247 + $0xf0] sm:$0xf]
      %v317 = vld [vmem:[%s247 + $0xf4] sm:$0xf]
      %v318 = vld [vmem:[%s247 + $0xf8] sm:$0xf]
      %v319 = vld [vmem:[%s247 + $0xfc] sm:$0xf]
      %v320 = vld [vmem:[%s1] sm:$0xf]
      %v321 = vld [vmem:[%s1 + $0x4] sm:$0xf]
      %v322 = vld [vmem:[%s1 + $0x8] sm:$0xf]
      %v323 = vld [vmem:[%s1 + $0xc] sm:$0xf]
      %v324 = vld [vmem:[%s1 + $0x10] sm:$0xf]
      %v325 = vld [vmem:[%s1 + $0x14] sm:$0xf]
      %v326 = vld [vmem:[%s1 + $0x18] sm:$0xf]
      %v327 = vld [vmem:[%s1 + $0x1c] sm:$0xf]
      %v328 = vld [vmem:[%s1 + $0x20] sm:$0xf]
      %v393 = vunpack.c.l.b16 %v256
      %v394 = vunpack.c.l.b16 %v257
      %v395 = vunpack.c.l.b16 %v258
      %v396 = vunpack.c.l.b16 %v259
      %v397 = vunpack.c.l.b16 %v260
      %v398 = vunpack.c.l.b16 %v261
      %v399 = vunpack.c.l.b16 %v262
      %v400 = vunpack.c.l.b16 %v263
      %v401 = vunpack.c.l.b16 %v264
      %v402 = vunpack.c.l.b16 %v265
      %v403 = vunpack.c.l.b16 %v266
      %v404 = vunpack.c.l.b16 %v267
      %v405 = vunpack.c.l.b16 %v268
      %v406 = vunpack.c.l.b16 %v269
      %v407 = vunpack.c.l.b16 %v270
      %v408 = vunpack.c.l.b16 %v271
      %v409 = vunpack.c.l.b16 %v272
      %v410 = vunpack.c.l.b16 %v273
      %v411 = vunpack.c.l.b16 %v274
      %v412 = vunpack.c.l.b16 %v275
      %v413 = vunpack.c.l.b16 %v276
      %v414 = vunpack.c.l.b16 %v277
      %v415 = vunpack.c.l.b16 %v278
      %v416 = vunpack.c.l.b16 %v279
      %v417 = vunpack.c.l.b16 %v280
      %v418 = vunpack.c.l.b16 %v281
      %v419 = vunpack.c.l.b16 %v282
      %v420 = vunpack.c.l.b16 %v283
      %v421 = vunpack.c.l.b16 %v284
      %v422 = vunpack.c.l.b16 %v285
      %v423 = vunpack.c.l.b16 %v286
      %v424 = vunpack.c.l.b16 %v287
      %v425 = vunpack.c.l.b16 %v288
      %v426 = vunpack.c.l.b16 %v289
      %v427 = vunpack.c.l.b16 %v290
      %v428 = vunpack.c.l.b16 %v291
      %v429 = vunpack.c.l.b16 %v292
      %v430 = vunpack.c.l.b16 %v293
      %v431 = vunpack.c.l.b16 %v294
      %v432 = vunpack.c.l.b16 %v295
      %v433 = vunpack.c.l.b16 %v296
      %v434 = vunpack.c.l.b16 %v297
      %v435 = vunpack.c.l.b16 %v298
      %v436 = vunpack.c.l.b16 %v299
      %v437 = vunpack.c.l.b16 %v300
      %v438 = vunpack.c.l.b16 %v301
      %v439 = vunpack.c.l.b16 %v302
      %v440 = vunpack.c.l.b16 %v303
      %v441 = vunpack.c.l.b16 %v304
      %v442 = vunpack.c.l.b16 %v305
      %v443 = vunpack.c.l.b16 %v306
      %v444 = vunpack.c.l.b16 %v307
      %v445 = vunpack.c.l.b16 %v308
      %v446 = vunpack.c.l.b16 %v309
      %v447 = vunpack.c.l.b16 %v310
      %v448 = vunpack.c.l.b16 %v311
      %v449 = vunpack.c.l.b16 %v312
      %v450 = vunpack.c.l.b16 %v313
      %v451 = vunpack.c.l.b16 %v314
      %v452 = vunpack.c.l.b16 %v315
      %v453 = vunpack.c.l.b16 %v316
      %v454 = vunpack.c.l.b16 %v317
      %v455 = vunpack.c.l.b16 %v318
      %v456 = vunpack.c.l.b16 %v319
      %v457 = vpack.c.b16 %v394, %v393
      %v458 = vpack.c.b16 %v396, %v395
      %v459 = vpack.c.b16 %v398, %v397
      %v460 = vpack.c.b16 %v400, %v399
      %v461 = vpack.c.b16 %v402, %v401
      %v462 = vpack.c.b16 %v404, %v403
      %v463 = vpack.c.b16 %v406, %v405
      %v464 = vpack.c.b16 %v408, %v407
      %v465 = vpack.c.b16 %v410, %v409
      %v466 = vpack.c.b16 %v412, %v411
      %v467 = vpack.c.b16 %v414, %v413
      %v468 = vpack.c.b16 %v416, %v415
      %v469 = vpack.c.b16 %v418, %v417
      %v470 = vpack.c.b16 %v420, %v419
      %v471 = vpack.c.b16 %v422, %v421
      %v472 = vpack.c.b16 %v424, %v423
      %v473 = vpack.c.b16 %v426, %v425
      %v474 = vpack.c.b16 %v428, %v427
      %v475 = vpack.c.b16 %v430, %v429
      %v476 = vpack.c.b16 %v432, %v431
      %v477 = vpack.c.b16 %v434, %v433
      %v478 = vpack.c.b16 %v436, %v435
      %v479 = vpack.c.b16 %v438, %v437
      %v480 = vpack.c.b16 %v440, %v439
      %v481 = vpack.c.b16 %v442, %v441
      %v482 = vpack.c.b16 %v444, %v443
      %v483 = vpack.c.b16 %v446, %v445
      %v484 = vpack.c.b16 %v448, %v447
      %v485 = vpack.c.b16 %v450, %v449
      %v486 = vpack.c.b16 %v452, %v451
      %v487 = vpack.c.b16 %v454, %v453
      %v488 = vpack.c.b16 %v456, %v455
      %v498 = vunpack.c.l.b16 %v320
      %v499 = vunpack.c.l.b16 %v321
      %v500 = vunpack.c.l.b16 %v322
      %v501 = vunpack.c.l.b16 %v323
      %v502 = vunpack.c.l.b16 %v324
      %v503 = vunpack.c.l.b16 %v325
      %v504 = vunpack.c.l.b16 %v326
      %v505 = vunpack.c.l.b16 %v327
      %v506 = vunpack.c.l.b16 %v328
      %v507 = vpack.c.b16 %v499, %v498
      %v508 = vpack.c.b16 %v501, %v500
      %v509 = vpack.c.b16 %v503, %v502
      %v510 = vpack.c.b16 %v505, %v504
      %v511 = vpack.c.b16 %v506, %v506
      %vm516 = vcmask 588800
      %v518 = vsel %vm516, %v457, 0
      %v521 = vsel %vm516, %v458, 0
      %v524 = vsel %vm516, %v459, 0
      %v527 = vsel %vm516, %v460, 0
      %v530 = vsel %vm516, %v461, 0
      %v533 = vsel %vm516, %v462, 0
      %v536 = vsel %vm516, %v463, 0
      %v539 = vsel %vm516, %v464, 0
      %v542 = vsel %vm516, %v465, 0
      %v545 = vsel %vm516, %v466, 0
      %v548 = vsel %vm516, %v467, 0
      %v551 = vsel %vm516, %v468, 0
      %v554 = vsel %vm516, %v469, 0
      %v557 = vsel %vm516, %v470, 0
      %v560 = vsel %vm516, %v471, 0
      %v563 = vsel %vm516, %v472, 0
      %v566 = vsel %vm516, %v473, 0
      %v569 = vsel %vm516, %v474, 0
      %v572 = vsel %vm516, %v475, 0
      %v575 = vsel %vm516, %v476, 0
      %v578 = vsel %vm516, %v477, 0
      %v581 = vsel %vm516, %v478, 0
      %v584 = vsel %vm516, %v479, 0
      %v587 = vsel %vm516, %v480, 0
      %v590 = vsel %vm516, %v481, 0
      %v593 = vsel %vm516, %v482, 0
      %v596 = vsel %vm516, %v483, 0
      %v599 = vsel %vm516, %v484, 0
      %v602 = vsel %vm516, %v485, 0
      %v605 = vsel %vm516, %v486, 0
      %v608 = vsel %vm516, %v487, 0
      %v611 = vsel %vm516, %v488, 0
      %vm613 = vcmask 1043456
      %v615 = vsel %vm613, %v511, 0
      %617 = vmatpush.bf16.msra.mxu0 0
      %618 = vmatpush.bf16.msra.mxu0 0
      %619 = vmatpush.bf16.msra.mxu0 0
      %620 = vmatpush.bf16.msra.mxu0 %v615
      %621 = vmatpush.bf16.msra.mxu0 %v510
      %622 = vmatpush.bf16.msra.mxu0 %v509
      %623 = vmatpush.bf16.msra.mxu0 %v508
      %624 = vmatpush.bf16.msra.mxu0 %v507
      %625 = vmatmul.bf16.gmra.mxu0 %v518
      %v626 = vpop.f32.mrf.mxu0
      %v627 = vadd.f32 0.0, %v626
      %v628 = vpop.f32.mrf.mxu0
      %v629 = vadd.f32 0.0, %v628
      %630 = vmatmul.bf16.gmra.mxu0 %v521
      %v631 = vpop.f32.mrf.mxu0
      %v632 = vadd.f32 0.0, %v631
      %v633 = vpop.f32.mrf.mxu0
      %v634 = vadd.f32 0.0, %v633
      %635 = vmatmul.bf16.gmra.mxu0 %v524
      %v636 = vpop.f32.mrf.mxu0
      %v637 = vadd.f32 0.0, %v636
      %v638 = vpop.f32.mrf.mxu0
      %v639 = vadd.f32 0.0, %v638
      %640 = vmatmul.bf16.gmra.mxu0 %v527
      %v641 = vpop.f32.mrf.mxu0
      %v642 = vadd.f32 0.0, %v641
      %v643 = vpop.f32.mrf.mxu0
      %v644 = vadd.f32 0.0, %v643
      %645 = vmatmul.bf16.gmra.mxu0 %v530
      %v646 = vpop.f32.mrf.mxu0
      %v647 = vadd.f32 0.0, %v646
      %v648 = vpop.f32.mrf.mxu0
      %v649 = vadd.f32 0.0, %v648
      %650 = vmatmul.bf16.gmra.mxu0 %v533
      %v651 = vpop.f32.mrf.mxu0
      %v652 = vadd.f32 0.0, %v651
      %v653 = vpop.f32.mrf.mxu0
      %v654 = vadd.f32 0.0, %v653
      %655 = vmatmul.bf16.gmra.mxu0 %v536
      %v656 = vpop.f32.mrf.mxu0
      %v657 = vadd.f32 0.0, %v656
      %v658 = vpop.f32.mrf.mxu0
      %v659 = vadd.f32 0.0, %v658
      %660 = vmatmul.bf16.gmra.mxu0 %v539
      %v661 = vpop.f32.mrf.mxu0
      %v662 = vadd.f32 0.0, %v661
      %v663 = vpop.f32.mrf.mxu0
      %v664 = vadd.f32 0.0, %v663
      %665 = vmatmul.bf16.gmra.mxu0 %v542
      %v666 = vpop.f32.mrf.mxu0
      %v667 = vadd.f32 0.0, %v666
      %v668 = vpop.f32.mrf.mxu0
      %v669 = vadd.f32 0.0, %v668
      %670 = vmatmul.bf16.gmra.mxu0 %v545
      %v671 = vpop.f32.mrf.mxu0
      %v672 = vadd.f32 0.0, %v671
      %v673 = vpop.f32.mrf.mxu0
      %v674 = vadd.f32 0.0, %v673
      %675 = vmatmul.bf16.gmra.mxu0 %v548
      %v676 = vpop.f32.mrf.mxu0
      %v677 = vadd.f32 0.0, %v676
      %v678 = vpop.f32.mrf.mxu0
      %v679 = vadd.f32 0.0, %v678
      %680 = vmatmul.bf16.gmra.mxu0 %v551
      %v681 = vpop.f32.mrf.mxu0
      %v682 = vadd.f32 0.0, %v681
      %v683 = vpop.f32.mrf.mxu0
      %v684 = vadd.f32 0.0, %v683
      %685 = vmatmul.bf16.gmra.mxu0 %v554
      %v686 = vpop.f32.mrf.mxu0
      %v687 = vadd.f32 0.0, %v686
      %v688 = vpop.f32.mrf.mxu0
      %v689 = vadd.f32 0.0, %v688
      %690 = vmatmul.bf16.gmra.mxu0 %v557
      %v691 = vpop.f32.mrf.mxu0
      %v692 = vadd.f32 0.0, %v691
      %v693 = vpop.f32.mrf.mxu0
      %v694 = vadd.f32 0.0, %v693
      %695 = vmatmul.bf16.gmra.mxu0 %v560
      %v696 = vpop.f32.mrf.mxu0
      %v697 = vadd.f32 0.0, %v696
      %v698 = vpop.f32.mrf.mxu0
      %v699 = vadd.f32 0.0, %v698
      %700 = vmatmul.bf16.gmra.mxu0 %v563
      %v701 = vpop.f32.mrf.mxu0
      %v702 = vadd.f32 0.0, %v701
      %v703 = vpop.f32.mrf.mxu0
      %v704 = vadd.f32 0.0, %v703
      %705 = vmatmul.bf16.gmra.mxu0 %v566
      %v706 = vpop.f32.mrf.mxu0
      %v707 = vadd.f32 0.0, %v706
      %v708 = vpop.f32.mrf.mxu0
      %v709 = vadd.f32 0.0, %v708
      %710 = vmatmul.bf16.gmra.mxu0 %v569
      %v711 = vpop.f32.mrf.mxu0
      %v712 = vadd.f32 0.0, %v711
      %v713 = vpop.f32.mrf.mxu0
      %v714 = vadd.f32 0.0, %v713
      %715 = vmatmul.bf16.gmra.mxu0 %v572
      %v716 = vpop.f32.mrf.mxu0
      %v717 = vadd.f32 0.0, %v716
      %v718 = vpop.f32.mrf.mxu0
      %v719 = vadd.f32 0.0, %v718
      %720 = vmatmul.bf16.gmra.mxu0 %v575
      %v721 = vpop.f32.mrf.mxu0
      %v722 = vadd.f32 0.0, %v721
      %v723 = vpop.f32.mrf.mxu0
      %v724 = vadd.f32 0.0, %v723
      %725 = vmatmul.bf16.gmra.mxu0 %v578
      %v726 = vpop.f32.mrf.mxu0
      %v727 = vadd.f32 0.0, %v726
      %v728 = vpop.f32.mrf.mxu0
      %v729 = vadd.f32 0.0, %v728
      %730 = vmatmul.bf16.gmra.mxu0 %v581
      %v731 = vpop.f32.mrf.mxu0
      %v732 = vadd.f32 0.0, %v731
      %v733 = vpop.f32.mrf.mxu0
      %v734 = vadd.f32 0.0, %v733
      %735 = vmatmul.bf16.gmra.mxu0 %v584
      %v736 = vpop.f32.mrf.mxu0
      %v737 = vadd.f32 0.0, %v736
      %v738 = vpop.f32.mrf.mxu0
      %v739 = vadd.f32 0.0, %v738
      %740 = vmatmul.bf16.gmra.mxu0 %v587
      %v741 = vpop.f32.mrf.mxu0
      %v742 = vadd.f32 0.0, %v741
      %v743 = vpop.f32.mrf.mxu0
      %v744 = vadd.f32 0.0, %v743
      %745 = vmatmul.bf16.gmra.mxu0 %v590
      %v746 = vpop.f32.mrf.mxu0
      %v747 = vadd.f32 0.0, %v746
      %v748 = vpop.f32.mrf.mxu0
      %v749 = vadd.f32 0.0, %v748
      %750 = vmatmul.bf16.gmra.mxu0 %v593
      %v751 = vpop.f32.mrf.mxu0
      %v752 = vadd.f32 0.0, %v751
      %v753 = vpop.f32.mrf.mxu0
      %v754 = vadd.f32 0.0, %v753
      %755 = vmatmul.bf16.gmra.mxu0 %v596
      %v756 = vpop.f32.mrf.mxu0
      %v757 = vadd.f32 0.0, %v756
      %v758 = vpop.f32.mrf.mxu0
      %v759 = vadd.f32 0.0, %v758
      %760 = vmatmul.bf16.gmra.mxu0 %v599
      %v761 = vpop.f32.mrf.mxu0
      %v762 = vadd.f32 0.0, %v761
      %v763 = vpop.f32.mrf.mxu0
      %v764 = vadd.f32 0.0, %v763
      %765 = vmatmul.bf16.gmra.mxu0 %v602
      %v766 = vpop.f32.mrf.mxu0
      %v767 = vadd.f32 0.0, %v766
      %v768 = vpop.f32.mrf.mxu0
      %v769 = vadd.f32 0.0, %v768
      %770 = vmatmul.bf16.gmra.mxu0 %v605
      %v771 = vpop.f32.mrf.mxu0
      %v772 = vadd.f32 0.0, %v771
      %v773 = vpop.f32.mrf.mxu0
      %v774 = vadd.f32 0.0, %v773
      %775 = vmatmul.bf16.gmra.mxu0 %v608
      %v776 = vpop.f32.mrf.mxu0
      %v777 = vadd.f32 0.0, %v776
      %v778 = vpop.f32.mrf.mxu0
      %v779 = vadd.f32 0.0, %v778
      %780 = vmatmul.bf16.gmra.mxu0 %v611
      %v781 = vpop.f32.mrf.mxu0
      %v782 = vadd.f32 0.0, %v781
      %v783 = vpop.f32.mrf.mxu0
      %v784 = vadd.f32 0.0, %v783
      %785 = vdwg.mxu0
      %v786 = vld [vmem:[%s2] sm:$0x1]
      %v788 = vperm.slane %v786, 0
      %v790 = vmul.f32 %v627, %v788
      %v791 = vmul.f32 %v629, %v788
      %v792 = vmul.f32 %v632, %v788
      %v793 = vmul.f32 %v634, %v788
      %v794 = vmul.f32 %v637, %v788
      %v795 = vmul.f32 %v639, %v788
      %v796 = vmul.f32 %v642, %v788
      %v797 = vmul.f32 %v644, %v788
      %v798 = vmul.f32 %v647, %v788
      %v799 = vmul.f32 %v649, %v788
      %v800 = vmul.f32 %v652, %v788
      %v801 = vmul.f32 %v654, %v788
      %v802 = vmul.f32 %v657, %v788
      %v803 = vmul.f32 %v659, %v788
      %v804 = vmul.f32 %v662, %v788
      %v805 = vmul.f32 %v664, %v788
      %v806 = vmul.f32 %v667, %v788
      %v807 = vmul.f32 %v669, %v788
      %v808 = vmul.f32 %v672, %v788
      %v809 = vmul.f32 %v674, %v788
      %v810 = vmul.f32 %v677, %v788
      %v811 = vmul.f32 %v679, %v788
      %v812 = vmul.f32 %v682, %v788
      %v813 = vmul.f32 %v684, %v788
      %v814 = vmul.f32 %v687, %v788
      %v815 = vmul.f32 %v689, %v788
      %v816 = vmul.f32 %v692, %v788
      %v817 = vmul.f32 %v694, %v788
      %v818 = vmul.f32 %v697, %v788
      %v819 = vmul.f32 %v699, %v788
      %v820 = vmul.f32 %v702, %v788
      %v821 = vmul.f32 %v704, %v788
      %v822 = vmul.f32 %v707, %v788
      %v823 = vmul.f32 %v709, %v788
      %v824 = vmul.f32 %v712, %v788
      %v825 = vmul.f32 %v714, %v788
      %v826 = vmul.f32 %v717, %v788
      %v827 = vmul.f32 %v719, %v788
      %v828 = vmul.f32 %v722, %v788
      %v829 = vmul.f32 %v724, %v788
      %v830 = vmul.f32 %v727, %v788
      %v831 = vmul.f32 %v729, %v788
      %v832 = vmul.f32 %v732, %v788
      %v833 = vmul.f32 %v734, %v788
      %v834 = vmul.f32 %v737, %v788
      %v835 = vmul.f32 %v739, %v788
      %v836 = vmul.f32 %v742, %v788
      %v837 = vmul.f32 %v744, %v788
      %v838 = vmul.f32 %v747, %v788
      %v839 = vmul.f32 %v749, %v788
      %v840 = vmul.f32 %v752, %v788
      %v841 = vmul.f32 %v754, %v788
      %v842 = vmul.f32 %v757, %v788
      %v843 = vmul.f32 %v759, %v788
      %v844 = vmul.f32 %v762, %v788
      %v845 = vmul.f32 %v764, %v788
      %v846 = vmul.f32 %v767, %v788
      %v847 = vmul.f32 %v769, %v788
      %v848 = vmul.f32 %v772, %v788
      %v849 = vmul.f32 %v774, %v788
      %v850 = vmul.f32 %v777, %v788
      %v851 = vmul.f32 %v779, %v788
      %v852 = vmul.f32 %v782, %v788
      %v853 = vmul.f32 %v784, %v788
      %v854 = vld [vmem:[%s3] sm:$0x1]
      %v856 = vperm.slane %v854, 0
      %v858 = vadd.f32 %v790, %v856
      %v859 = vadd.f32 %v791, %v856
      %v860 = vadd.f32 %v792, %v856
      %v861 = vadd.f32 %v793, %v856
      %v862 = vadd.f32 %v794, %v856
      %v863 = vadd.f32 %v795, %v856
      %v864 = vadd.f32 %v796, %v856
      %v865 = vadd.f32 %v797, %v856
      %v866 = vadd.f32 %v798, %v856
      %v867 = vadd.f32 %v799, %v856
      %v868 = vadd.f32 %v800, %v856
      %v869 = vadd.f32 %v801, %v856
      %v870 = vadd.f32 %v802, %v856
      %v871 = vadd.f32 %v803, %v856
      %v872 = vadd.f32 %v804, %v856
      %v873 = vadd.f32 %v805, %v856
      %v874 = vadd.f32 %v806, %v856
      %v875 = vadd.f32 %v807, %v856
      %v876 = vadd.f32 %v808, %v856
      %v877 = vadd.f32 %v809, %v856
      %v878 = vadd.f32 %v810, %v856
      %v879 = vadd.f32 %v811, %v856
      %v880 = vadd.f32 %v812, %v856
      %v881 = vadd.f32 %v813, %v856
      %v882 = vadd.f32 %v814, %v856
      %v883 = vadd.f32 %v815, %v856
      %v884 = vadd.f32 %v816, %v856
      %v885 = vadd.f32 %v817, %v856
      %v886 = vadd.f32 %v818, %v856
      %v887 = vadd.f32 %v819, %v856
      %v888 = vadd.f32 %v820, %v856
      %v889 = vadd.f32 %v821, %v856
      %v890 = vadd.f32 %v822, %v856
      %v891 = vadd.f32 %v823, %v856
      %v892 = vadd.f32 %v824, %v856
      %v893 = vadd.f32 %v825, %v856
      %v894 = vadd.f32 %v826, %v856
      %v895 = vadd.f32 %v827, %v856
      %v896 = vadd.f32 %v828, %v856
      %v897 = vadd.f32 %v829, %v856
      %v898 = vadd.f32 %v830, %v856
      %v899 = vadd.f32 %v831, %v856
      %v900 = vadd.f32 %v832, %v856
      %v901 = vadd.f32 %v833, %v856
      %v902 = vadd.f32 %v834, %v856
      %v903 = vadd.f32 %v835, %v856
      %v904 = vadd.f32 %v836, %v856
      %v905 = vadd.f32 %v837, %v856
      %v906 = vadd.f32 %v838, %v856
      %v907 = vadd.f32 %v839, %v856
      %v908 = vadd.f32 %v840, %v856
      %v909 = vadd.f32 %v841, %v856
      %v910 = vadd.f32 %v842, %v856
      %v911 = vadd.f32 %v843, %v856
      %v912 = vadd.f32 %v844, %v856
      %v913 = vadd.f32 %v845, %v856
      %v914 = vadd.f32 %v846, %v856
      %v915 = vadd.f32 %v847, %v856
      %v916 = vadd.f32 %v848, %v856
      %v917 = vadd.f32 %v849, %v856
      %v918 = vadd.f32 %v850, %v856
      %v919 = vadd.f32 %v851, %v856
      %v920 = vadd.f32 %v852, %v856
      %v921 = vadd.f32 %v853, %v856
      %v922 = vmax.f32 %v858, 0.0
      %v923 = vmax.f32 %v859, 0.0
      %v924 = vmax.f32 %v860, 0.0
      %v925 = vmax.f32 %v861, 0.0
      %v926 = vmax.f32 %v862, 0.0
      %v927 = vmax.f32 %v863, 0.0
      %v928 = vmax.f32 %v864, 0.0
      %v929 = vmax.f32 %v865, 0.0
      %v930 = vmax.f32 %v866, 0.0
      %v931 = vmax.f32 %v867, 0.0
      %v932 = vmax.f32 %v868, 0.0
      %v933 = vmax.f32 %v869, 0.0
      %v934 = vmax.f32 %v870, 0.0
      %v935 = vmax.f32 %v871, 0.0
      %v936 = vmax.f32 %v872, 0.0
      %v937 = vmax.f32 %v873, 0.0
      %v938 = vmax.f32 %v874, 0.0
      %v939 = vmax.f32 %v875, 0.0
      %v940 = vmax.f32 %v876, 0.0
      %v941 = vmax.f32 %v877, 0.0
      %v942 = vmax.f32 %v878, 0.0
      %v943 = vmax.f32 %v879, 0.0
      %v944 = vmax.f32 %v880, 0.0
      %v945 = vmax.f32 %v881, 0.0
      %v946 = vmax.f32 %v882, 0.0
      %v947 = vmax.f32 %v883, 0.0
      %v948 = vmax.f32 %v884, 0.0
      %v949 = vmax.f32 %v885, 0.0
      %v950 = vmax.f32 %v886, 0.0
      %v951 = vmax.f32 %v887, 0.0
      %v952 = vmax.f32 %v888, 0.0
      %v953 = vmax.f32 %v889, 0.0
      %v954 = vmax.f32 %v890, 0.0
      %v955 = vmax.f32 %v891, 0.0
      %v956 = vmax.f32 %v892, 0.0
      %v957 = vmax.f32 %v893, 0.0
      %v958 = vmax.f32 %v894, 0.0
      %v959 = vmax.f32 %v895, 0.0
      %v960 = vmax.f32 %v896, 0.0
      %v961 = vmax.f32 %v897, 0.0
      %v962 = vmax.f32 %v898, 0.0
      %v963 = vmax.f32 %v899, 0.0
      %v964 = vmax.f32 %v900, 0.0
      %v965 = vmax.f32 %v901, 0.0
      %v966 = vmax.f32 %v902, 0.0
      %v967 = vmax.f32 %v903, 0.0
      %v968 = vmax.f32 %v904, 0.0
      %v969 = vmax.f32 %v905, 0.0
      %v970 = vmax.f32 %v906, 0.0
      %v971 = vmax.f32 %v907, 0.0
      %v972 = vmax.f32 %v908, 0.0
      %v973 = vmax.f32 %v909, 0.0
      %v974 = vmax.f32 %v910, 0.0
      %v975 = vmax.f32 %v911, 0.0
      %v976 = vmax.f32 %v912, 0.0
      %v977 = vmax.f32 %v913, 0.0
      %v978 = vmax.f32 %v914, 0.0
      %v979 = vmax.f32 %v915, 0.0
      %v980 = vmax.f32 %v916, 0.0
      %v981 = vmax.f32 %v917, 0.0
      %v982 = vmax.f32 %v918, 0.0
      %v983 = vmax.f32 %v919, 0.0
      %v984 = vmax.f32 %v920, 0.0
      %v985 = vmax.f32 %v921, 0.0
      %v986 = vpack.c.bf16 %v923, %v922
      %v987 = vpack.c.bf16 %v925, %v924
      %v988 = vpack.c.bf16 %v927, %v926
      %v989 = vpack.c.bf16 %v929, %v928
      %v990 = vpack.c.bf16 %v931, %v930
      %v991 = vpack.c.bf16 %v933, %v932
      %v992 = vpack.c.bf16 %v935, %v934
      %v993 = vpack.c.bf16 %v937, %v936
      %v994 = vpack.c.bf16 %v939, %v938
      %v995 = vpack.c.bf16 %v941, %v940
      %v996 = vpack.c.bf16 %v943, %v942
      %v997 = vpack.c.bf16 %v945, %v944
      %v998 = vpack.c.bf16 %v947, %v946
      %v999 = vpack.c.bf16 %v949, %v948
      %v1000 = vpack.c.bf16 %v951, %v950
      %v1001 = vpack.c.bf16 %v953, %v952
      %v1002 = vpack.c.bf16 %v955, %v954
      %v1003 = vpack.c.bf16 %v957, %v956
      %v1004 = vpack.c.bf16 %v959, %v958
      %v1005 = vpack.c.bf16 %v961, %v960
      %v1006 = vpack.c.bf16 %v963, %v962
      %v1007 = vpack.c.bf16 %v965, %v964
      %v1008 = vpack.c.bf16 %v967, %v966
      %v1009 = vpack.c.bf16 %v969, %v968
      %v1010 = vpack.c.bf16 %v971, %v970
      %v1011 = vpack.c.bf16 %v973, %v972
      %v1012 = vpack.c.bf16 %v975, %v974
      %v1013 = vpack.c.bf16 %v977, %v976
      %v1014 = vpack.c.bf16 %v979, %v978
      %v1015 = vpack.c.bf16 %v981, %v980
      %v1016 = vpack.c.bf16 %v983, %v982
      %v1017 = vpack.c.bf16 %v985, %v984
      %v1018 = vld [vmem:[%s4] sm:$0xf]
      %v1019 = vld [vmem:[%s4 + $0x4] sm:$0xf]
      %v1020 = vld [vmem:[%s4 + $0x8] sm:$0xf]
      %v1021 = vld [vmem:[%s4 + $0xc] sm:$0xf]
      %v1022 = vld [vmem:[%s5] sm:$0x1]
      %v1024 = vperm.slane %v1022, 0
      %v1030 = vunpack.c.l.b16 %v1018
      %v1031 = vunpack.c.l.b16 %v1019
      %v1032 = vunpack.c.l.b16 %v1020
      %v1033 = vunpack.c.l.b16 %v1021
      %v1034 = vpack.c.b16 %v1031, %v1030
      %v1035 = vpack.c.b16 %v1033, %v1032
      %vm1038 = vcmask 261120
      %v1040 = vsel %vm1038, %v986, 0
      %v1043 = vsel %vm1038, %v987, 0
      %v1046 = vsel %vm1038, %v988, 0
      %v1049 = vsel %vm1038, %v989, 0
      %v1052 = vsel %vm1038, %v990, 0
      %v1055 = vsel %vm1038, %v991, 0
      %v1058 = vsel %vm1038, %v992, 0
      %v1061 = vsel %vm1038, %v993, 0
      %v1064 = vsel %vm1038, %v994, 0
      %v1067 = vsel %vm1038, %v995, 0
      %v1070 = vsel %vm1038, %v996, 0
      %v1073 = vsel %vm1038, %v997, 0
      %v1076 = vsel %vm1038, %v998, 0
      %v1079 = vsel %vm1038, %v999, 0
      %v1082 = vsel %vm1038, %v1000, 0
      %v1085 = vsel %vm1038, %v1001, 0
      %v1088 = vsel %vm1038, %v1002, 0
      %v1091 = vsel %vm1038, %v1003, 0
      %v1094 = vsel %vm1038, %v1004, 0
      %v1097 = vsel %vm1038, %v1005, 0
      %v1100 = vsel %vm1038, %v1006, 0
      %v1103 = vsel %vm1038, %v1007, 0
      %v1106 = vsel %vm1038, %v1008, 0
      %v1109 = vsel %vm1038, %v1009, 0
      %v1112 = vsel %vm1038, %v1010, 0
      %v1115 = vsel %vm1038, %v1011, 0
      %v1118 = vsel %vm1038, %v1012, 0
      %v1121 = vsel %vm1038, %v1013, 0
      %v1124 = vsel %vm1038, %v1014, 0
      %v1127 = vsel %vm1038, %v1015, 0
      %v1130 = vsel %vm1038, %v1016, 0
      %v1133 = vsel %vm1038, %v1017, 0
      %1135 = vmatpush.bf16.msra.mxu0 0
      %1136 = vmatpush.bf16.msra.mxu0 0
      %1137 = vmatpush.bf16.msra.mxu0 0
      %1138 = vmatpush.bf16.msra.mxu0 0
      %1139 = vmatpush.bf16.msra.mxu0 0
      %1140 = vmatpush.bf16.msra.mxu0 0
      %1141 = vmatpush.bf16.msra.mxu0 %v1035
      %1142 = vmatpush.bf16.msra.mxu0 %v1034
      %1143 = vmatmul.bf16.gmra.mxu0 %v1040
      %v1144 = vpop.f32.mrf.mxu0
      %v1145 = vadd.f32 %v1024, %v1144
      %v1146 = vpop.f32.mrf.mxu0
      %v1147 = vadd.f32 %v1024, %v1146
      %1148 = vmatmul.bf16.gmra.mxu0 %v1043
      %v1149 = vpop.f32.mrf.mxu0
      %v1150 = vadd.f32 %v1024, %v1149
      %v1151 = vpop.f32.mrf.mxu0
      %v1152 = vadd.f32 %v1024, %v1151
      %1153 = vmatmul.bf16.gmra.mxu0 %v1046
      %v1154 = vpop.f32.mrf.mxu0
      %v1155 = vadd.f32 %v1024, %v1154
      %v1156 = vpop.f32.mrf.mxu0
      %v1157 = vadd.f32 %v1024, %v1156
      %1158 = vmatmul.bf16.gmra.mxu0 %v1049
      %v1159 = vpop.f32.mrf.mxu0
      %v1160 = vadd.f32 %v1024, %v1159
      %v1161 = vpop.f32.mrf.mxu0
      %v1162 = vadd.f32 %v1024, %v1161
      %1163 = vmatmul.bf16.gmra.mxu0 %v1052
      %v1164 = vpop.f32.mrf.mxu0
      %v1165 = vadd.f32 %v1024, %v1164
      %v1166 = vpop.f32.mrf.mxu0
      %v1167 = vadd.f32 %v1024, %v1166
      %1168 = vmatmul.bf16.gmra.mxu0 %v1055
      %v1169 = vpop.f32.mrf.mxu0
      %v1170 = vadd.f32 %v1024, %v1169
      %v1171 = vpop.f32.mrf.mxu0
      %v1172 = vadd.f32 %v1024, %v1171
      %1173 = vmatmul.bf16.gmra.mxu0 %v1058
      %v1174 = vpop.f32.mrf.mxu0
      %v1175 = vadd.f32 %v1024, %v1174
      %v1176 = vpop.f32.mrf.mxu0
      %v1177 = vadd.f32 %v1024, %v1176
      %1178 = vmatmul.bf16.gmra.mxu0 %v1061
      %v1179 = vpop.f32.mrf.mxu0
      %v1180 = vadd.f32 %v1024, %v1179
      %v1181 = vpop.f32.mrf.mxu0
      %v1182 = vadd.f32 %v1024, %v1181
      %1183 = vmatmul.bf16.gmra.mxu0 %v1064
      %v1184 = vpop.f32.mrf.mxu0
      %v1185 = vadd.f32 %v1024, %v1184
      %v1186 = vpop.f32.mrf.mxu0
      %v1187 = vadd.f32 %v1024, %v1186
      %1188 = vmatmul.bf16.gmra.mxu0 %v1067
      %v1189 = vpop.f32.mrf.mxu0
      %v1190 = vadd.f32 %v1024, %v1189
      %v1191 = vpop.f32.mrf.mxu0
      %v1192 = vadd.f32 %v1024, %v1191
      %1193 = vmatmul.bf16.gmra.mxu0 %v1070
      %v1194 = vpop.f32.mrf.mxu0
      %v1195 = vadd.f32 %v1024, %v1194
      %v1196 = vpop.f32.mrf.mxu0
      %v1197 = vadd.f32 %v1024, %v1196
      %1198 = vmatmul.bf16.gmra.mxu0 %v1073
      %v1199 = vpop.f32.mrf.mxu0
      %v1200 = vadd.f32 %v1024, %v1199
      %v1201 = vpop.f32.mrf.mxu0
      %v1202 = vadd.f32 %v1024, %v1201
      %1203 = vmatmul.bf16.gmra.mxu0 %v1076
      %v1204 = vpop.f32.mrf.mxu0
      %v1205 = vadd.f32 %v1024, %v1204
      %v1206 = vpop.f32.mrf.mxu0
      %v1207 = vadd.f32 %v1024, %v1206
      %1208 = vmatmul.bf16.gmra.mxu0 %v1079
      %v1209 = vpop.f32.mrf.mxu0
      %v1210 = vadd.f32 %v1024, %v1209
      %v1211 = vpop.f32.mrf.mxu0
      %v1212 = vadd.f32 %v1024, %v1211
      %1213 = vmatmul.bf16.gmra.mxu0 %v1082
      %v1214 = vpop.f32.mrf.mxu0
      %v1215 = vadd.f32 %v1024, %v1214
      %v1216 = vpop.f32.mrf.mxu0
      %v1217 = vadd.f32 %v1024, %v1216
      %1218 = vmatmul.bf16.gmra.mxu0 %v1085
      %v1219 = vpop.f32.mrf.mxu0
      %v1220 = vadd.f32 %v1024, %v1219
      %v1221 = vpop.f32.mrf.mxu0
      %v1222 = vadd.f32 %v1024, %v1221
      %1223 = vmatmul.bf16.gmra.mxu0 %v1088
      %v1224 = vpop.f32.mrf.mxu0
      %v1225 = vadd.f32 %v1024, %v1224
      %v1226 = vpop.f32.mrf.mxu0
      %v1227 = vadd.f32 %v1024, %v1226
      %1228 = vmatmul.bf16.gmra.mxu0 %v1091
      %v1229 = vpop.f32.mrf.mxu0
      %v1230 = vadd.f32 %v1024, %v1229
      %v1231 = vpop.f32.mrf.mxu0
      %v1232 = vadd.f32 %v1024, %v1231
      %1233 = vmatmul.bf16.gmra.mxu0 %v1094
      %v1234 = vpop.f32.mrf.mxu0
      %v1235 = vadd.f32 %v1024, %v1234
      %v1236 = vpop.f32.mrf.mxu0
      %v1237 = vadd.f32 %v1024, %v1236
      %1238 = vmatmul.bf16.gmra.mxu0 %v1097
      %v1239 = vpop.f32.mrf.mxu0
      %v1240 = vadd.f32 %v1024, %v1239
      %v1241 = vpop.f32.mrf.mxu0
      %v1242 = vadd.f32 %v1024, %v1241
      %1243 = vmatmul.bf16.gmra.mxu0 %v1100
      %v1244 = vpop.f32.mrf.mxu0
      %v1245 = vadd.f32 %v1024, %v1244
      %v1246 = vpop.f32.mrf.mxu0
      %v1247 = vadd.f32 %v1024, %v1246
      %1248 = vmatmul.bf16.gmra.mxu0 %v1103
      %v1249 = vpop.f32.mrf.mxu0
      %v1250 = vadd.f32 %v1024, %v1249
      %v1251 = vpop.f32.mrf.mxu0
      %v1252 = vadd.f32 %v1024, %v1251
      %1253 = vmatmul.bf16.gmra.mxu0 %v1106
      %v1254 = vpop.f32.mrf.mxu0
      %v1255 = vadd.f32 %v1024, %v1254
      %v1256 = vpop.f32.mrf.mxu0
      %v1257 = vadd.f32 %v1024, %v1256
      %1258 = vmatmul.bf16.gmra.mxu0 %v1109
      %v1259 = vpop.f32.mrf.mxu0
      %v1260 = vadd.f32 %v1024, %v1259
      %v1261 = vpop.f32.mrf.mxu0
      %v1262 = vadd.f32 %v1024, %v1261
      %1263 = vmatmul.bf16.gmra.mxu0 %v1112
      %v1264 = vpop.f32.mrf.mxu0
      %v1265 = vadd.f32 %v1024, %v1264
      %v1266 = vpop.f32.mrf.mxu0
      %v1267 = vadd.f32 %v1024, %v1266
      %1268 = vmatmul.bf16.gmra.mxu0 %v1115
      %v1269 = vpop.f32.mrf.mxu0
      %v1270 = vadd.f32 %v1024, %v1269
      %v1271 = vpop.f32.mrf.mxu0
      %v1272 = vadd.f32 %v1024, %v1271
      %1273 = vmatmul.bf16.gmra.mxu0 %v1118
      %v1274 = vpop.f32.mrf.mxu0
      %v1275 = vadd.f32 %v1024, %v1274
      %v1276 = vpop.f32.mrf.mxu0
      %v1277 = vadd.f32 %v1024, %v1276
      %1278 = vmatmul.bf16.gmra.mxu0 %v1121
      %v1279 = vpop.f32.mrf.mxu0
      %v1280 = vadd.f32 %v1024, %v1279
      %v1281 = vpop.f32.mrf.mxu0
      %v1282 = vadd.f32 %v1024, %v1281
      %1283 = vmatmul.bf16.gmra.mxu0 %v1124
      %v1284 = vpop.f32.mrf.mxu0
      %v1285 = vadd.f32 %v1024, %v1284
      %v1286 = vpop.f32.mrf.mxu0
      %v1287 = vadd.f32 %v1024, %v1286
      %1288 = vmatmul.bf16.gmra.mxu0 %v1127
      %v1289 = vpop.f32.mrf.mxu0
      %v1290 = vadd.f32 %v1024, %v1289
      %v1291 = vpop.f32.mrf.mxu0
      %v1292 = vadd.f32 %v1024, %v1291
      %1293 = vmatmul.bf16.gmra.mxu0 %v1130
      %v1294 = vpop.f32.mrf.mxu0
      %v1295 = vadd.f32 %v1024, %v1294
      %v1296 = vpop.f32.mrf.mxu0
      %v1297 = vadd.f32 %v1024, %v1296
      %1298 = vmatmul.bf16.gmra.mxu0 %v1133
      %v1299 = vpop.f32.mrf.mxu0
      %v1300 = vadd.f32 %v1024, %v1299
      %v1301 = vpop.f32.mrf.mxu0
      %v1302 = vadd.f32 %v1024, %v1301
      %1303 = vdwg.mxu0
      %vm1304 = vcmask 48128
      %1305 = vst.msk [vmem:[%s253] sm:$0xff] %vm1304, %v1145
      %1306 = vst.msk [vmem:[%s253 + $0x8] sm:$0xff] %vm1304, %v1147
      %1307 = vst.msk [vmem:[%s253 + $0x10] sm:$0xff] %vm1304, %v1150
      %1308 = vst.msk [vmem:[%s253 + $0x18] sm:$0xff] %vm1304, %v1152
      %1309 = vst.msk [vmem:[%s253 + $0x20] sm:$0xff] %vm1304, %v1155
      %1310 = vst.msk [vmem:[%s253 + $0x28] sm:$0xff] %vm1304, %v1157
      %1311 = vst.msk [vmem:[%s253 + $0x30] sm:$0xff] %vm1304, %v1160
      %1312 = vst.msk [vmem:[%s253 + $0x38] sm:$0xff] %vm1304, %v1162
      %1313 = vst.msk [vmem:[%s253 + $0x40] sm:$0xff] %vm1304, %v1165
      %1314 = vst.msk [vmem:[%s253 + $0x48] sm:$0xff] %vm1304, %v1167
      %1315 = vst.msk [vmem:[%s253 + $0x50] sm:$0xff] %vm1304, %v1170
      %1316 = vst.msk [vmem:[%s253 + $0x58] sm:$0xff] %vm1304, %v1172
      %1317 = vst.msk [vmem:[%s253 + $0x60] sm:$0xff] %vm1304, %v1175
      %1318 = vst.msk [vmem:[%s253 + $0x68] sm:$0xff] %vm1304, %v1177
      %1319 = vst.msk [vmem:[%s253 + $0x70] sm:$0xff] %vm1304, %v1180
      %1320 = vst.msk [vmem:[%s253 + $0x78] sm:$0xff] %vm1304, %v1182
      %1321 = vst.msk [vmem:[%s253 + $0x80] sm:$0xff] %vm1304, %v1185
      %1322 = vst.msk [vmem:[%s253 + $0x88] sm:$0xff] %vm1304, %v1187
      %1323 = vst.msk [vmem:[%s253 + $0x90] sm:$0xff] %vm1304, %v1190
      %1324 = vst.msk [vmem:[%s253 + $0x98] sm:$0xff] %vm1304, %v1192
      %1325 = vst.msk [vmem:[%s253 + $0xa0] sm:$0xff] %vm1304, %v1195
      %1326 = vst.msk [vmem:[%s253 + $0xa8] sm:$0xff] %vm1304, %v1197
      %1327 = vst.msk [vmem:[%s253 + $0xb0] sm:$0xff] %vm1304, %v1200
      %1328 = vst.msk [vmem:[%s253 + $0xb8] sm:$0xff] %vm1304, %v1202
      %1329 = vst.msk [vmem:[%s253 + $0xc0] sm:$0xff] %vm1304, %v1205
      %1330 = vst.msk [vmem:[%s253 + $0xc8] sm:$0xff] %vm1304, %v1207
      %1331 = vst.msk [vmem:[%s253 + $0xd0] sm:$0xff] %vm1304, %v1210
      %1332 = vst.msk [vmem:[%s253 + $0xd8] sm:$0xff] %vm1304, %v1212
      %1333 = vst.msk [vmem:[%s253 + $0xe0] sm:$0xff] %vm1304, %v1215
      %1334 = vst.msk [vmem:[%s253 + $0xe8] sm:$0xff] %vm1304, %v1217
      %1335 = vst.msk [vmem:[%s253 + $0xf0] sm:$0xff] %vm1304, %v1220
      %1336 = vst.msk [vmem:[%s253 + $0xf8] sm:$0xff] %vm1304, %v1222
      %1337 = vst.msk [vmem:[%s253 + $0x100] sm:$0xff] %vm1304, %v1225
      %1338 = vst.msk [vmem:[%s253 + $0x108] sm:$0xff] %vm1304, %v1227
      %1339 = vst.msk [vmem:[%s253 + $0x110] sm:$0xff] %vm1304, %v1230
      %1340 = vst.msk [vmem:[%s253 + $0x118] sm:$0xff] %vm1304, %v1232
      %1341 = vst.msk [vmem:[%s253 + $0x120] sm:$0xff] %vm1304, %v1235
      %1342 = vst.msk [vmem:[%s253 + $0x128] sm:$0xff] %vm1304, %v1237
      %1343 = vst.msk [vmem:[%s253 + $0x130] sm:$0xff] %vm1304, %v1240
      %1344 = vst.msk [vmem:[%s253 + $0x138] sm:$0xff] %vm1304, %v1242
      %1345 = vst.msk [vmem:[%s253 + $0x140] sm:$0xff] %vm1304, %v1245
      %1346 = vst.msk [vmem:[%s253 + $0x148] sm:$0xff] %vm1304, %v1247
      %1347 = vst.msk [vmem:[%s253 + $0x150] sm:$0xff] %vm1304, %v1250
      %1348 = vst.msk [vmem:[%s253 + $0x158] sm:$0xff] %vm1304, %v1252
      %1349 = vst.msk [vmem:[%s253 + $0x160] sm:$0xff] %vm1304, %v1255
      %1350 = vst.msk [vmem:[%s253 + $0x168] sm:$0xff] %vm1304, %v1257
      %1351 = vst.msk [vmem:[%s253 + $0x170] sm:$0xff] %vm1304, %v1260
      %1352 = vst.msk [vmem:[%s253 + $0x178] sm:$0xff] %vm1304, %v1262
      %1353 = vst.msk [vmem:[%s253 + $0x180] sm:$0xff] %vm1304, %v1265
      %1354 = vst.msk [vmem:[%s253 + $0x188] sm:$0xff] %vm1304, %v1267
      %1355 = vst.msk [vmem:[%s253 + $0x190] sm:$0xff] %vm1304, %v1270
      %1356 = vst.msk [vmem:[%s253 + $0x198] sm:$0xff] %vm1304, %v1272
      %1357 = vst.msk [vmem:[%s253 + $0x1a0] sm:$0xff] %vm1304, %v1275
      %1358 = vst.msk [vmem:[%s253 + $0x1a8] sm:$0xff] %vm1304, %v1277
      %1359 = vst.msk [vmem:[%s253 + $0x1b0] sm:$0xff] %vm1304, %v1280
      %1360 = vst.msk [vmem:[%s253 + $0x1b8] sm:$0xff] %vm1304, %v1282
      %1361 = vst.msk [vmem:[%s253 + $0x1c0] sm:$0xff] %vm1304, %v1285
      %1362 = vst.msk [vmem:[%s253 + $0x1c8] sm:$0xff] %vm1304, %v1287
      %1363 = vst.msk [vmem:[%s253 + $0x1d0] sm:$0xff] %vm1304, %v1290
      %1364 = vst.msk [vmem:[%s253 + $0x1d8] sm:$0xff] %vm1304, %v1292
      %1365 = vst.msk [vmem:[%s253 + $0x1e0] sm:$0xff] %vm1304, %v1295
      %1366 = vst.msk [vmem:[%s253 + $0x1e8] sm:$0xff] %vm1304, %v1297
      %1367 = vst.msk [vmem:[%s253 + $0x1f0] sm:$0xff] %vm1304, %v1300
      %1368 = vst.msk [vmem:[%s253 + $0x1f8] sm:$0xff] %vm1304, %v1302
      %s1369 = smul.u32 64, %s17
      %p1370 = scmp.lt.s32.totalorder %s1369, 127
      %s1371 = scalar_select %p1370, %s1369, 127
      %s1372 = smul.addr %s1371, 8
      %s1373 = scalar_lea.vmem %s6, %s1372
      // Predicated region
      $region45: #{localization_forward.7} parent=43 // pred_check
        %p1374 = pneg %p166
      $region46: #{localization_forward.7} parent=43 // pred_check_branch
        %1376 = sbr.rel (%p1374) target = $region48
      $region47: #{localization_forward.7} parent=43 // pred_region
        %s1377 = smul.u32 64, %s17
      $region48: #{localization_forward.7} parent=43 // pred_fallthru
        _
    $region44: #{localization_forward.7} parent=5 // pred_fallthru
      _
    %p1378 = scmp.le.s32.totalorder 2, %s12
    // Predicated region
    $region49: #{localization_forward.7} parent=5 // pred_check
      %p1379 = pneg %p1378
    $region50: #{localization_forward.7} parent=5 // pred_check_branch
      %1381 = sbr.rel (%p1379) target = $region52
    $region51: #{localization_forward.7} parent=5 // pred_region
      %s1382 = ssub.s32 %s12, 2
      // Predicated region
      $region53: #{localization_forward.7} parent=51 // pred_check
        %p1383 = pneg %p172
      $region54: #{localization_forward.7} parent=51 // pred_check_branch
        %1385 = sbr.rel (%p1383) target = $region56
      $region55: #{localization_forward.7} parent=51 // pred_region
        %s1386 = smul.u32 64, %s18
        %p1387 = scmp.lt.s32.totalorder %s1386, 127
        %s1388 = scalar_select %p1387, %s1386, 127
        %s1389 = smul.addr %s1388, 8
        %s1390 = scalar_lea.vmem %s6, %s1389
      $region56: #{localization_forward.7} parent=51 // pred_fallthru
        _
    $region52: #{localization_forward.7} parent=5 // pred_fallthru
      _
  $region6: #{localization_forward.7} parent=0 // loop_footer
    %s16 = sadd.s32 1, %s12
  $region7: #{localization_forward.7} parent=0 // loop_footer_branch
    %11 = sbr.rel target = $region3
  $region8: #{localization_forward.7} parent=0 // loop_exit
    _

// kernel: localization_forward.8
$region0: #{localization_forward.8}
  #allocation0 [shape = 'u32[]', space=smem, size = 0x4, offset = 0x4, fixed_abs, tag = 'smem constant byte address 0x4 - core index']
  #allocation1 [shape = 'u32[72,128]{1,0:T(1,128)}', space=vmem, size = 0x9000, scoped, tag = 'internal scratch']
  %s0 = inlined_call_operand.vmem [shape: f32[4,4,16,16], index: 0, kind: input, shape index: {}]
  %s1 = inlined_call_operand.vmem [shape: f32[128,16], index: 1, kind: input, shape index: {}]
  %s2 = inlined_call_operand.vmem [shape: f32[16,128], index: 2, kind: input, shape index: {}]
  %s3 = inlined_call_operand.hbm [shape: f32[4,4,128,128], index: 3, kind: output, shape index: {}]
  %s4 = sld [smem:[#allocation0]]
  $region45: #{localization_forward.8} parent=0
    _
  %s6 = ssub.s32 1, %s4
  %s7 = scalar_select 0, %s6, %s4
  $region1: #{localization_forward.8} parent=0
    #allocation2 [shape = 'u8[131072]{0}', space=vmem, size = 0x20000, scoped, tag = 'output window, operand 0']
    #allocation3 [shape = 's32[2]{0}', space=sflag, size = 0x8, scoped, tag = 'scoped memory for localization_forward.8']
    %8 = vsyncpa [#allocation3], 0
    %s9 = scalar_lea.sflag [#allocation3], 1
    %10 = vsyncpa %s9, 0
    loop: start=0, step=1, limit=18
    $region2: #{localization_forward.8} parent=1 // loop_pre_header
      _
    $region3: #{localization_forward.8} parent=1 // loop_header
      %s12 = sphi 0, %s16
      %p13 = scmp.ge.s32.totalorder %s12, 18
      %s19 = sphi 0, %s31
      %s20 = sphi 0, %s27
      %s21 = sphi 0, %s19
      %s22 = sphi 0, %s20
      %s23 = sphi 0, %s21
      %s24 = sphi 0, %s22
      %s36 = sphi 0, %s38
      %s39 = sphi 0, %s36
      %s40 = sphi 0, %s39
      %s56 = sphi 0, %s40
      %s60 = sphi 0, %s60
      %s62 = sphi 0, %s60
      %s63 = sphi 0, %s62
      %s77 = sphi 0, %s63
      %s81 = sphi 0, %s81
      %s83 = sphi 0, %s81
      %s84 = sphi 0, %s83
      %s98 = sphi 0, %s84
      %s106 = sphi 0, %s108
      %s109 = sphi 0, %s106
      %s110 = sphi 0, %s109
      %s126 = sphi 0, %s110
    $region4: #{localization_forward.8} parent=1 // loop_header_branch
      %15 = sbr.rel (%p13) target = $region8
    $region5: #{localization_forward.8} parent=1 // loop_body
      %s17 = ssub.s32 %s12, 1
      %s18 = ssub.s32 %s12, 2
      %s25 = sadd.s32 1, %s20
      %p26 = scmp.ge.s32.totalorder %s25, 4
      %s27 = scalar_select %p26, 0, %s25
      %s28 = sadd.s32 1, %s19
      %s29 = scalar_select %p26, %s28, %s19
      %p30 = scmp.ge.s32.totalorder %s29, 4
      %s31 = scalar_select %p30, 0, %s29
      %s32 = ssub.s32 %s19, %s31
      %s33 = ssub.s32 %s20, %s27
      %s34 = sor.u32 %s32, %s33
      %p35 = scmp.eq.s32.totalorder %s34, 0
      %s37 = sadd.s32 %s36, 1
      %s38 = scalar_select %p35, %s36, %s37
      %p41 = pneg %p35
      %p42 = scmp.eq.s32.totalorder %s12, 15
      %p43 = por %p41, %p42
      %p44 = scmp.ne.s32.totalorder %s36, %s39
      %p45 = scmp.eq.s32.totalorder %s12, 0
      %p46 = por %p44, %p45
      %p47 = scmp.ne.s32.totalorder %s36, %s39
      %p48 = scmp.eq.s32.totalorder %s17, 15
      %p49 = por %p47, %p48
      %p50 = scmp.ne.s32.totalorder %s39, %s40
      %p51 = scmp.eq.s32.totalorder %s17, 0
      %p52 = por %p50, %p51
      %p53 = scmp.ne.s32.totalorder %s39, %s40
      %p54 = scmp.eq.s32.totalorder %s18, 15
      %p55 = por %p53, %p54
      %p57 = scmp.ne.s32.totalorder %s40, %s56
      %p58 = scmp.eq.s32.totalorder %s18, 0
      %p59 = por %p57, %p58
      %s61 = sadd.s32 %s60, 1
      %p64 = scmp.eq.s32.totalorder %s12, 15
      %p65 = scmp.ne.s32.totalorder %s60, %s62
      %p66 = scmp.eq.s32.totalorder %s12, 0
      %p67 = por %p65, %p66
      %p68 = scmp.ne.s32.totalorder %s60, %s62
      %p69 = scmp.eq.s32.totalorder %s17, 15
      %p70 = por %p68, %p69
      %p71 = scmp.ne.s32.totalorder %s62, %s63
      %p72 = scmp.eq.s32.totalorder %s17, 0
      %p73 = por %p71, %p72
      %p74 = scmp.ne.s32.totalorder %s62, %s63
      %p75 = scmp.eq.s32.totalorder %s18, 15
      %p76 = por %p74, %p75
      %p78 = scmp.ne.s32.totalorder %s63, %s77
      %p79 = scmp.eq.s32.totalorder %s18, 0
      %p80 = por %p78, %p79
      %s82 = sadd.s32 %s81, 1
      %p85 = scmp.eq.s32.totalorder %s12, 15
      %p86 = scmp.ne.s32.totalorder %s81, %s83
      %p87 = scmp.eq.s32.totalorder %s12, 0
      %p88 = por %p86, %p87
      %p89 = scmp.ne.s32.totalorder %s81, %s83
      %p90 = scmp.eq.s32.totalorder %s17, 15
      %p91 = por %p89, %p90
      %p92 = scmp.ne.s32.totalorder %s83, %s84
      %p93 = scmp.eq.s32.totalorder %s17, 0
      %p94 = por %p92, %p93
      %p95 = scmp.ne.s32.totalorder %s83, %s84
      %p96 = scmp.eq.s32.totalorder %s18, 15
      %p97 = por %p95, %p96
      %p99 = scmp.ne.s32.totalorder %s84, %s98
      %p100 = scmp.eq.s32.totalorder %s18, 0
      %p101 = por %p99, %p100
      %s102 = ssub.s32 %s19, %s31
      %s103 = ssub.s32 %s20, %s27
      %s104 = sor.u32 %s102, %s103
      %p105 = scmp.eq.s32.totalorder %s104, 0
      %s107 = sadd.s32 %s106, 1
      %s108 = scalar_select %p105, %s106, %s107
      %p111 = pneg %p105
      %p112 = scmp.eq.s32.totalorder %s12, 15
      %p113 = por %p111, %p112
      %p114 = scmp.ne.s32.totalorder %s106, %s109
      %p115 = scmp.eq.s32.totalorder %s12, 0
      %p116 = por %p114, %p115
      %p117 = scmp.ne.s32.totalorder %s106, %s109
      %p118 = scmp.eq.s32.totalorder %s17, 15
      %p119 = por %p117, %p118
      %p120 = scmp.ne.s32.totalorder %s109, %s110
      %p121 = scmp.eq.s32.totalorder %s17, 0
      %p122 = por %p120, %p121
      %p123 = scmp.ne.s32.totalorder %s109, %s110
      %p124 = scmp.eq.s32.totalorder %s18, 15
      %p125 = por %p123, %p124
      %p127 = scmp.ne.s32.totalorder %s110, %s126
      %p128 = scmp.eq.s32.totalorder %s18, 0
      %p129 = por %p127, %p128
      %p130 = scmp.le.s32.totalorder 1, %s12
      %p131 = scmp.lt.s32.totalorder %s12, 17
      %p132 = pnand %p130, %p131
      %p133 = pneg %p132
      // Predicated region
      $region9: #{localization_forward.8} parent=5 // pred_check
        _
      $region10: #{localization_forward.8} parent=5 // pred_check_branch
        %135 = sbr.rel (%p132) target = $region12
      $region11: #{localization_forward.8} parent=5 // pred_region
        %s136 = ssub.s32 %s12, 1
        // Predicated region
        $region13: #{localization_forward.8} parent=11 // pred_check
          %p137 = pneg %p73
        $region14: #{localization_forward.8} parent=11 // pred_check_branch
          %139 = sbr.rel (%p137) target = $region16
        $region15: #{localization_forward.8} parent=11 // pred_region
          _
        $region16: #{localization_forward.8} parent=11 // pred_fallthru
          _
        // Predicated region
        $region17: #{localization_forward.8} parent=11 // pred_check
          %p140 = pneg %p94
        $region18: #{localization_forward.8} parent=11 // pred_check_branch
          %142 = sbr.rel (%p140) target = $region20
        $region19: #{localization_forward.8} parent=11 // pred_region
          _
        $region20: #{localization_forward.8} parent=11 // pred_fallthru
          _
      $region12: #{localization_forward.8} parent=5 // pred_fallthru
        _
      %p143 = scmp.lt.s32.totalorder %s12, 16
      // Predicated region
      $region21: #{localization_forward.8} parent=5 // pred_check
        %p144 = pneg %p143
      $region22: #{localization_forward.8} parent=5 // pred_check_branch
        %146 = sbr.rel (%p144) target = $region24
      $region23: #{localization_forward.8} parent=5 // pred_region
        // Predicated region
        $region25: #{localization_forward.8} parent=23 // pred_check
          %p147 = pneg %p46
        $region26: #{localization_forward.8} parent=23 // pred_check_branch
          %149 = sbr.rel (%p147) target = $region28
        $region27: #{localization_forward.8} parent=23 // pred_region
          %p150 = scmp.lt.s32.totalorder %s19, 3
          %s151 = scalar_select %p150, %s19, 3
          %p152 = scmp.lt.s32.totalorder %s20, 3
          %s153 = scalar_select %p152, %s20, 3
          %s154 = smul.addr %s153, 2
          %s155 = smul.addr %s151, 8
          %s156 = sadd.s32 %s154, %s155
          %s157 = smul.addr %s156, 8
          %s158 = scalar_lea.vmem %s0, %s157
        $region28: #{localization_forward.8} parent=23 // pred_fallthru
          _
      $region24: #{localization_forward.8} parent=5 // pred_fallthru
        _
      %p159 = scmp.le.s32.totalorder 1, %s12
      %p160 = scmp.lt.s32.totalorder %s12, 17
      %p161 = pnand %p159, %p160
      %p162 = pneg %p161
      // Predicated region
      $region29: #{localization_forward.8} parent=5 // pred_check
        _
      $region30: #{localization_forward.8} parent=5 // pred_check_branch
        %164 = sbr.rel (%p161) target = $region32
      $region31: #{localization_forward.8} parent=5 // pred_region
        %s165 = ssub.s32 %s12, 1
        %p166 = scmp.lt.s32.totalorder %s21, 3
        %s167 = scalar_select %p166, %s21, 3
        %p168 = scmp.lt.s32.totalorder %s22, 3
        %s169 = scalar_select %p168, %s22, 3
        %s170 = smul.addr %s169, 2
        %s171 = smul.addr %s167, 8
        %s172 = sadd.s32 %s170, %s171
        %s173 = smul.addr %s172, 8
        %s174 = scalar_lea.vmem %s0, %s173
        %p175 = pneg %p52
        %p176 = pneg %p49
        %p177 = pneg %p73
        %p178 = pneg %p70
        %p179 = pneg %p94
        %p180 = pneg %p91
        %p181 = pneg %p122
        %p182 = pneg %p119
        %s183 = sand.u32 %s109, 1
        %s184 = scalar_lea.sflag [#allocation3], %s183
        %s185 = sand.u32 %s109, 1
        %s186 = smul.addr %s185, 128
        %s187 = scalar_lea.vmem [#allocation2], %s186
        %p188 = scmp.lt.s32.totalorder %s21, 3
        %s189 = scalar_select %p188, %s21, 3
        %p190 = scmp.lt.s32.totalorder %s22, 3
        %s191 = scalar_select %p190, %s22, 3
        %s192 = smul.addr %s191, 2
        %s193 = smul.addr %s189, 8
        %s194 = sadd.s32 %s192, %s193
        %s195 = smul.addr %s194, 8
        %s196 = scalar_lea.vmem %s0, %s195
        %v197 = vld [vmem:[%s196] sm:$0xff]
        %v198 = vld [vmem:[%s196 + $0x8] sm:$0xff]
        %v199 = vld [vmem:[%s1] sm:$0xff]
        %v200 = vld [vmem:[%s1 + $0x8] sm:$0xff]
        %v201 = vld [vmem:[%s1 + $0x10] sm:$0xff]
        %v202 = vld [vmem:[%s1 + $0x18] sm:$0xff]
        %v203 = vld [vmem:[%s1 + $0x20] sm:$0xff]
        %v204 = vld [vmem:[%s1 + $0x28] sm:$0xff]
        %v205 = vld [vmem:[%s1 + $0x30] sm:$0xff]
        %v206 = vld [vmem:[%s1 + $0x38] sm:$0xff]
        %v207 = vld [vmem:[%s1 + $0x40] sm:$0xff]
        %v208 = vld [vmem:[%s1 + $0x48] sm:$0xff]
        %v209 = vld [vmem:[%s1 + $0x50] sm:$0xff]
        %v210 = vld [vmem:[%s1 + $0x58] sm:$0xff]
        %v211 = vld [vmem:[%s1 + $0x60] sm:$0xff]
        %v212 = vld [vmem:[%s1 + $0x68] sm:$0xff]
        %v213 = vld [vmem:[%s1 + $0x70] sm:$0xff]
        %v214 = vld [vmem:[%s1 + $0x78] sm:$0xff]
        %vm215 = vcmask 130048
        %v217 = vsel %vm215, %v199, 0
        %v220 = vsel %vm215, %v200, 0
        %v223 = vsel %vm215, %v201, 0
        %v226 = vsel %vm215, %v202, 0
        %v229 = vsel %vm215, %v203, 0
        %v232 = vsel %vm215, %v204, 0
        %v235 = vsel %vm215, %v205, 0
        %v238 = vsel %vm215, %v206, 0
        %v241 = vsel %vm215, %v207, 0
        %v244 = vsel %vm215, %v208, 0
        %v247 = vsel %vm215, %v209, 0
        %v250 = vsel %vm215, %v210, 0
        %v253 = vsel %vm215, %v211, 0
        %v256 = vsel %vm215, %v212, 0
        %v259 = vsel %vm215, %v213, 0
        %v262 = vsel %vm215, %v214, 0
        %264 = vmatpush.msra.mxu0 0.0
        %265 = vmatpush.msra.mxu0 0.0
        %266 = vmatpush.msra.mxu0 0.0
        %267 = vmatpush.msra.mxu0 0.0
        %268 = vmatpush.msra.mxu0 0.0
        %269 = vmatpush.msra.mxu0 0.0
        %270 = vmatpush.msra.mxu0 0.0
        %271 = vmatpush.msra.mxu0 0.0
        %272 = vmatpush.msra.mxu0 0.0
        %273 = vmatpush.msra.mxu0 0.0
        %274 = vmatpush.msra.mxu0 0.0
        %275 = vmatpush.msra.mxu0 0.0
        %276 = vmatpush.msra.mxu0 0.0
        %277 = vmatpush.msra.mxu0 0.0
        %278 = vmatpush.msra.mxu0 %v198
        %279 = vmatpush.msra.mxu0 %v197
        %280 = vmatmul.f32.gmra.mxu0 %v217
        %v281 = vpop.f32.mrf.mxu0
        %v282 = vadd.f32 0.0, %v281
        %283 = vmatmul.f32.gmra.mxu0 %v220
        %v284 = vpop.f32.mrf.mxu0
        %v285 = vadd.f32 0.0, %v284
        %286 = vmatmul.f32.gmra.mxu0 %v223
        %v287 = vpop.f32.mrf.mxu0
        %v288 = vadd.f32 0.0, %v287
        %289 = vmatmul.f32.gmra.mxu0 %v226
        %v290 = vpop.f32.mrf.mxu0
        %v291 = vadd.f32 0.0, %v290
        %292 = vmatmul.f32.gmra.mxu0 %v229
        %v293 = vpop.f32.mrf.mxu0
        %v294 = vadd.f32 0.0, %v293
        %295 = vmatmul.f32.gmra.mxu0 %v232
        %v296 = vpop.f32.mrf.mxu0
        %v297 = vadd.f32 0.0, %v296
        %298 = vmatmul.f32.gmra.mxu0 %v235
        %v299 = vpop.f32.mrf.mxu0
        %v300 = vadd.f32 0.0, %v299
        %301 = vmatmul.f32.gmra.mxu0 %v238
        %v302 = vpop.f32.mrf.mxu0
        %v303 = vadd.f32 0.0, %v302
        %304 = vmatmul.f32.gmra.mxu0 %v241
        %v305 = vpop.f32.mrf.mxu0
        %v306 = vadd.f32 0.0, %v305
        %307 = vmatmul.f32.gmra.mxu0 %v244
        %v308 = vpop.f32.mrf.mxu0
        %v309 = vadd.f32 0.0, %v308
        %310 = vmatmul.f32.gmra.mxu0 %v247
        %v311 = vpop.f32.mrf.mxu0
        %v312 = vadd.f32 0.0, %v311
        %313 = vmatmul.f32.gmra.mxu0 %v250
        %v314 = vpop.f32.mrf.mxu0
        %v315 = vadd.f32 0.0, %v314
        %316 = vmatmul.f32.gmra.mxu0 %v253
        %v317 = vpop.f32.mrf.mxu0
        %v318 = vadd.f32 0.0, %v317
        %319 = vmatmul.f32.gmra.mxu0 %v256
        %v320 = vpop.f32.mrf.mxu0
        %v321 = vadd.f32 0.0, %v320
        %322 = vmatmul.f32.gmra.mxu0 %v259
        %v323 = vpop.f32.mrf.mxu0
        %v324 = vadd.f32 0.0, %v323
        %325 = vmatmul.f32.gmra.mxu0 %v262
        %v326 = vpop.f32.mrf.mxu0
        %v327 = vadd.f32 0.0, %v326
        %328 = vdwg.mxu0
        %v329 = vld [vmem:[%s2] sm:$0xff]
        %v330 = vld [vmem:[%s2 + $0x8] sm:$0xff]
        %v332 = vsel %vm215, %v282, 0
        %v335 = vsel %vm215, %v285, 0
        %v338 = vsel %vm215, %v288, 0
        %v341 = vsel %vm215, %v291, 0
        %v344 = vsel %vm215, %v294, 0
        %v347 = vsel %vm215, %v297, 0
        %v350 = vsel %vm215, %v300, 0
        %v353 = vsel %vm215, %v303, 0
        %v356 = vsel %vm215, %v306, 0
        %v359 = vsel %vm215, %v309, 0
        %v362 = vsel %vm215, %v312, 0
        %v365 = vsel %vm215, %v315, 0
        %v368 = vsel %vm215, %v318, 0
        %v371 = vsel %vm215, %v321, 0
        %v374 = vsel %vm215, %v324, 0
        %v377 = vsel %vm215, %v327, 0
        %379 = vmatpush.msra.mxu0 0.0
        %380 = vmatpush.msra.mxu0 0.0
        %381 = vmatpush.msra.mxu0 0.0
        %382 = vmatpush.msra.mxu0 0.0
        %383 = vmatpush.msra.mxu0 0.0
        %384 = vmatpush.msra.mxu0 0.0
        %385 = vmatpush.msra.mxu0 0.0
        %386 = vmatpush.msra.mxu0 0.0
        %387 = vmatpush.msra.mxu0 0.0
        %388 = vmatpush.msra.mxu0 0.0
        %389 = vmatpush.msra.mxu0 0.0
        %390 = vmatpush.msra.mxu0 0.0
        %391 = vmatpush.msra.mxu0 0.0
        %392 = vmatpush.msra.mxu0 0.0
        %393 = vmatpush.msra.mxu0 %v330
        %394 = vmatpush.msra.mxu0 %v329
        %395 = vmatmul.f32.gmra.mxu0 %v332
        %v396 = vpop.f32.mrf.mxu0
        %v397 = vadd.f32 0.0, %v396
        %398 = vmatmul.f32.gmra.mxu0 %v335
        %v399 = vpop.f32.mrf.mxu0
        %v400 = vadd.f32 0.0, %v399
        %401 = vmatmul.f32.gmra.mxu0 %v338
        %v402 = vpop.f32.mrf.mxu0
        %v403 = vadd.f32 0.0, %v402
        %404 = vmatmul.f32.gmra.mxu0 %v341
        %v405 = vpop.f32.mrf.mxu0
        %v406 = vadd.f32 0.0, %v405
        %407 = vmatmul.f32.gmra.mxu0 %v344
        %v408 = vpop.f32.mrf.mxu0
        %v409 = vadd.f32 0.0, %v408
        %410 = vmatmul.f32.gmra.mxu0 %v347
        %v411 = vpop.f32.mrf.mxu0
        %v412 = vadd.f32 0.0, %v411
        %413 = vmatmul.f32.gmra.mxu0 %v350
        %v414 = vpop.f32.mrf.mxu0
        %v415 = vadd.f32 0.0, %v414
        %416 = vmatmul.f32.gmra.mxu0 %v353
        %v417 = vpop.f32.mrf.mxu0
        %v418 = vadd.f32 0.0, %v417
        %419 = vmatmul.f32.gmra.mxu0 %v356
        %v420 = vpop.f32.mrf.mxu0
        %v421 = vadd.f32 0.0, %v420
        %422 = vmatmul.f32.gmra.mxu0 %v359
        %v423 = vpop.f32.mrf.mxu0
        %v424 = vadd.f32 0.0, %v423
        %425 = vmatmul.f32.gmra.mxu0 %v362
        %v426 = vpop.f32.mrf.mxu0
        %v427 = vadd.f32 0.0, %v426
        %428 = vmatmul.f32.gmra.mxu0 %v365
        %v429 = vpop.f32.mrf.mxu0
        %v430 = vadd.f32 0.0, %v429
        %431 = vmatmul.f32.gmra.mxu0 %v368
        %v432 = vpop.f32.mrf.mxu0
        %v433 = vadd.f32 0.0, %v432
        %434 = vmatmul.f32.gmra.mxu0 %v371
        %v435 = vpop.f32.mrf.mxu0
        %v436 = vadd.f32 0.0, %v435
        %437 = vmatmul.f32.gmra.mxu0 %v374
        %v438 = vpop.f32.mrf.mxu0
        %v439 = vadd.f32 0.0, %v438
        %440 = vmatmul.f32.gmra.mxu0 %v377
        %v441 = vpop.f32.mrf.mxu0
        %v442 = vadd.f32 0.0, %v441
        %443 = vdwg.mxu0
        %v444 = vxor.u32 %v397, 2147483648
        %v445 = vxor.u32 %v400, 2147483648
        %v446 = vxor.u32 %v403, 2147483648
        %v447 = vxor.u32 %v406, 2147483648
        %v448 = vxor.u32 %v409, 2147483648
        %v449 = vxor.u32 %v412, 2147483648
        %v450 = vxor.u32 %v415, 2147483648
        %v451 = vxor.u32 %v418, 2147483648
        %v452 = vxor.u32 %v421, 2147483648
        %v453 = vxor.u32 %v424, 2147483648
        %v454 = vxor.u32 %v427, 2147483648
        %v455 = vxor.u32 %v430, 2147483648
        %v456 = vxor.u32 %v433, 2147483648
        %v457 = vxor.u32 %v436, 2147483648
        %v458 = vxor.u32 %v439, 2147483648
        %v459 = vxor.u32 %v442, 2147483648
        %v460 = vmul.f32 %v444, 1.442695
        %v461 = vpow.pop %v460
        %v462 = vmul.f32 %v445, 1.442695
        %v463 = vpow.pop %v462
        %v464 = vmul.f32 %v446, 1.442695
        %v465 = vpow.pop %v464
        %v466 = vmul.f32 %v447, 1.442695
        %v467 = vpow.pop %v466
        %v468 = vmul.f32 %v448, 1.442695
        %v469 = vpow.pop %v468
        %v470 = vmul.f32 %v449, 1.442695
        %v471 = vpow.pop %v470
        %v472 = vmul.f32 %v450, 1.442695
        %v473 = vpow.pop %v472
        %v474 = vmul.f32 %v451, 1.442695
        %v475 = vpow.pop %v474
        %v476 = vmul.f32 %v452, 1.442695
        %v477 = vpow.pop %v476
        %v478 = vmul.f32 %v453, 1.442695
        %v479 = vpow.pop %v478
        %v480 = vmul.f32 %v454, 1.442695
        %v481 = vpow.pop %v480
        %v482 = vmul.f32 %v455, 1.442695
        %v483 = vpow.pop %v482
        %v484 = vmul.f32 %v456, 1.442695
        %v485 = vpow.pop %v484
        %v486 = vmul.f32 %v457, 1.442695
        %v487 = vpow.pop %v486
        %v488 = vmul.f32 %v458, 1.442695
        %v489 = vpow.pop %v488
        %v490 = vmul.f32 %v459, 1.442695
        %v491 = vpow.pop %v490
        %v492 = vadd.f32 %v461, 1.0
        %v493 = vadd.f32 %v463, 1.0
        %v494 = vadd.f32 %v465, 1.0
        %v495 = vadd.f32 %v467, 1.0
        %v496 = vadd.f32 %v469, 1.0
        %v497 = vadd.f32 %v471, 1.0
        %v498 = vadd.f32 %v473, 1.0
        %v499 = vadd.f32 %v475, 1.0
        %v500 = vadd.f32 %v477, 1.0
        %v501 = vadd.f32 %v479, 1.0
        %v502 = vadd.f32 %v481, 1.0
        %v503 = vadd.f32 %v483, 1.0
        %v504 = vadd.f32 %v485, 1.0
        %v505 = vadd.f32 %v487, 1.0
        %v506 = vadd.f32 %v489, 1.0
        %v507 = vadd.f32 %v491, 1.0
        %v508 = vrcp.pop %v492
        %v509 = vmul.f32 %v492, %v508
        %v510 = vsub.f32 1.0, %v509
        %v511 = vmul.f32 %v508, %v510
        %v512 = vadd.f32 %v508, %v511
        %vm513 = vweird.f32 %v492
        %vm514 = vweird.f32 %v508
        %vm515 = vmor %vm513, %vm514
        %v516 = vsel %vm515, %v508, %v512
        %v517 = vand.u32 2147483647, %v492
        %vm518 = vcmp.eq.f32.partialorder %v517, 8.507059e+37
        %v519 = vand.u32 %v492, 2147483648
        %v520 = vor.u32 1.1754944e-38, %v519
        %v521 = vsel %vm518, %v520, %v516
        %v522 = vmul.f32 1.0, %v521
        %v523 = vrcp.pop %v493
        %v524 = vmul.f32 %v493, %v523
        %v525 = vsub.f32 1.0, %v524
        %v526 = vmul.f32 %v523, %v525
        %v527 = vadd.f32 %v523, %v526
        %vm528 = vweird.f32 %v493
        %vm529 = vweird.f32 %v523
        %vm530 = vmor %vm528, %vm529
        %v531 = vsel %vm530, %v523, %v527
        %v532 = vand.u32 2147483647, %v493
        %vm533 = vcmp.eq.f32.partialorder %v532, 8.507059e+37
        %v534 = vand.u32 %v493, 2147483648
        %v535 = vor.u32 1.1754944e-38, %v534
        %v536 = vsel %vm533, %v535, %v531
        %v537 = vmul.f32 1.0, %v536
        %v538 = vrcp.pop %v494
        %v539 = vmul.f32 %v494, %v538
        %v540 = vsub.f32 1.0, %v539
        %v541 = vmul.f32 %v538, %v540
        %v542 = vadd.f32 %v538, %v541
        %vm543 = vweird.f32 %v494
        %vm544 = vweird.f32 %v538
        %vm545 = vmor %vm543, %vm544
        %v546 = vsel %vm545, %v538, %v542
        %v547 = vand.u32 2147483647, %v494
        %vm548 = vcmp.eq.f32.partialorder %v547, 8.507059e+37
        %v549 = vand.u32 %v494, 2147483648
        %v550 = vor.u32 1.1754944e-38, %v549
        %v551 = vsel %vm548, %v550, %v546
        %v552 = vmul.f32 1.0, %v551
        %v553 = vrcp.pop %v495
        %v554 = vmul.f32 %v495, %v553
        %v555 = vsub.f32 1.0, %v554
        %v556 = vmul.f32 %v553, %v555
        %v557 = vadd.f32 %v553, %v556
        %vm558 = vweird.f32 %v495
        %vm559 = vweird.f32 %v553
        %vm560 = vmor %vm558, %vm559
        %v561 = vsel %vm560, %v553, %v557
        %v562 = vand.u32 2147483647, %v495
        %vm563 = vcmp.eq.f32.partialorder %v562, 8.507059e+37
        %v564 = vand.u32 %v495, 2147483648
        %v565 = vor.u32 1.1754944e-38, %v564
        %v566 = vsel %vm563, %v565, %v561
        %v567 = vmul.f32 1.0, %v566
        %v568 = vrcp.pop %v496
        %v569 = vmul.f32 %v496, %v568
        %v570 = vsub.f32 1.0, %v569
        %v571 = vmul.f32 %v568, %v570
        %v572 = vadd.f32 %v568, %v571
        %vm573 = vweird.f32 %v496
        %vm574 = vweird.f32 %v568
        %vm575 = vmor %vm573, %vm574
        %v576 = vsel %vm575, %v568, %v572
        %v577 = vand.u32 2147483647, %v496
        %vm578 = vcmp.eq.f32.partialorder %v577, 8.507059e+37
        %v579 = vand.u32 %v496, 2147483648
        %v580 = vor.u32 1.1754944e-38, %v579
        %v581 = vsel %vm578, %v580, %v576
        %v582 = vmul.f32 1.0, %v581
        %v583 = vrcp.pop %v497
        %v584 = vmul.f32 %v497, %v583
        %v585 = vsub.f32 1.0, %v584
        %v586 = vmul.f32 %v583, %v585
        %v587 = vadd.f32 %v583, %v586
        %vm588 = vweird.f32 %v497
        %vm589 = vweird.f32 %v583
        %vm590 = vmor %vm588, %vm589
        %v591 = vsel %vm590, %v583, %v587
        %v592 = vand.u32 2147483647, %v497
        %vm593 = vcmp.eq.f32.partialorder %v592, 8.507059e+37
        %v594 = vand.u32 %v497, 2147483648
        %v595 = vor.u32 1.1754944e-38, %v594
        %v596 = vsel %vm593, %v595, %v591
        %v597 = vmul.f32 1.0, %v596
        %v598 = vrcp.pop %v498
        %v599 = vmul.f32 %v498, %v598
        %v600 = vsub.f32 1.0, %v599
        %v601 = vmul.f32 %v598, %v600
        %v602 = vadd.f32 %v598, %v601
        %vm603 = vweird.f32 %v498
        %vm604 = vweird.f32 %v598
        %vm605 = vmor %vm603, %vm604
        %v606 = vsel %vm605, %v598, %v602
        %v607 = vand.u32 2147483647, %v498
        %vm608 = vcmp.eq.f32.partialorder %v607, 8.507059e+37
        %v609 = vand.u32 %v498, 2147483648
        %v610 = vor.u32 1.1754944e-38, %v609
        %v611 = vsel %vm608, %v610, %v606
        %v612 = vmul.f32 1.0, %v611
        %v613 = vrcp.pop %v499
        %v614 = vmul.f32 %v499, %v613
        %v615 = vsub.f32 1.0, %v614
        %v616 = vmul.f32 %v613, %v615
        %v617 = vadd.f32 %v613, %v616
        %vm618 = vweird.f32 %v499
        %vm619 = vweird.f32 %v613
        %vm620 = vmor %vm618, %vm619
        %v621 = vsel %vm620, %v613, %v617
        %v622 = vand.u32 2147483647, %v499
        %vm623 = vcmp.eq.f32.partialorder %v622, 8.507059e+37
        %v624 = vand.u32 %v499, 2147483648
        %v625 = vor.u32 1.1754944e-38, %v624
        %v626 = vsel %vm623, %v625, %v621
        %v627 = vmul.f32 1.0, %v626
        %v628 = vrcp.pop %v500
        %v629 = vmul.f32 %v500, %v628
        %v630 = vsub.f32 1.0, %v629
        %v631 = vmul.f32 %v628, %v630
        %v632 = vadd.f32 %v628, %v631
        %vm633 = vweird.f32 %v500
        %vm634 = vweird.f32 %v628
        %vm635 = vmor %vm633, %vm634
        %v636 = vsel %vm635, %v628, %v632
        %v637 = vand.u32 2147483647, %v500
        %vm638 = vcmp.eq.f32.partialorder %v637, 8.507059e+37
        %v639 = vand.u32 %v500, 2147483648
        %v640 = vor.u32 1.1754944e-38, %v639
        %v641 = vsel %vm638, %v640, %v636
        %v642 = vmul.f32 1.0, %v641
        %v643 = vrcp.pop %v501
        %v644 = vmul.f32 %v501, %v643
        %v645 = vsub.f32 1.0, %v644
        %v646 = vmul.f32 %v643, %v645
        %v647 = vadd.f32 %v643, %v646
        %vm648 = vweird.f32 %v501
        %vm649 = vweird.f32 %v643
        %vm650 = vmor %vm648, %vm649
        %v651 = vsel %vm650, %v643, %v647
        %v652 = vand.u32 2147483647, %v501
        %vm653 = vcmp.eq.f32.partialorder %v652, 8.507059e+37
        %v654 = vand.u32 %v501, 2147483648
        %v655 = vor.u32 1.1754944e-38, %v654
        %v656 = vsel %vm653, %v655, %v651
        %v657 = vmul.f32 1.0, %v656
        %v658 = vrcp.pop %v502
        %v659 = vmul.f32 %v502, %v658
        %v660 = vsub.f32 1.0, %v659
        %v661 = vmul.f32 %v658, %v660
        %v662 = vadd.f32 %v658, %v661
        %vm663 = vweird.f32 %v502
        %vm664 = vweird.f32 %v658
        %vm665 = vmor %vm663, %vm664
        %v666 = vsel %vm665, %v658, %v662
        %v667 = vand.u32 2147483647, %v502
        %vm668 = vcmp.eq.f32.partialorder %v667, 8.507059e+37
        %v669 = vand.u32 %v502, 2147483648
        %v670 = vor.u32 1.1754944e-38, %v669
        %v671 = vsel %vm668, %v670, %v666
        %v672 = vmul.f32 1.0, %v671
        %v673 = vrcp.pop %v503
        %v674 = vmul.f32 %v503, %v673
        %v675 = vsub.f32 1.0, %v674
        %v676 = vmul.f32 %v673, %v675
        %v677 = vadd.f32 %v673, %v676
        %vm678 = vweird.f32 %v503
        %vm679 = vweird.f32 %v673
        %vm680 = vmor %vm678, %vm679
        %v681 = vsel %vm680, %v673, %v677
        %v682 = vand.u32 2147483647, %v503
        %vm683 = vcmp.eq.f32.partialorder %v682, 8.507059e+37
        %v684 = vand.u32 %v503, 2147483648
        %v685 = vor.u32 1.1754944e-38, %v684
        %v686 = vsel %vm683, %v685, %v681
        %v687 = vmul.f32 1.0, %v686
        %v688 = vrcp.pop %v504
        %v689 = vmul.f32 %v504, %v688
        %v690 = vsub.f32 1.0, %v689
        %v691 = vmul.f32 %v688, %v690
        %v692 = vadd.f32 %v688, %v691
        %vm693 = vweird.f32 %v504
        %vm694 = vweird.f32 %v688
        %vm695 = vmor %vm693, %vm694
        %v696 = vsel %vm695, %v688, %v692
        %v697 = vand.u32 2147483647, %v504
        %vm698 = vcmp.eq.f32.partialorder %v697, 8.507059e+37
        %v699 = vand.u32 %v504, 2147483648
        %v700 = vor.u32 1.1754944e-38, %v699
        %v701 = vsel %vm698, %v700, %v696
        %v702 = vmul.f32 1.0, %v701
        %v703 = vrcp.pop %v505
        %v704 = vmul.f32 %v505, %v703
        %v705 = vsub.f32 1.0, %v704
        %v706 = vmul.f32 %v703, %v705
        %v707 = vadd.f32 %v703, %v706
        %vm708 = vweird.f32 %v505
        %vm709 = vweird.f32 %v703
        %vm710 = vmor %vm708, %vm709
        %v711 = vsel %vm710, %v703, %v707
        %v712 = vand.u32 2147483647, %v505
        %vm713 = vcmp.eq.f32.partialorder %v712, 8.507059e+37
        %v714 = vand.u32 %v505, 2147483648
        %v715 = vor.u32 1.1754944e-38, %v714
        %v716 = vsel %vm713, %v715, %v711
        %v717 = vmul.f32 1.0, %v716
        %v718 = vrcp.pop %v506
        %v719 = vmul.f32 %v506, %v718
        %v720 = vsub.f32 1.0, %v719
        %v721 = vmul.f32 %v718, %v720
        %v722 = vadd.f32 %v718, %v721
        %vm723 = vweird.f32 %v506
        %vm724 = vweird.f32 %v718
        %vm725 = vmor %vm723, %vm724
        %v726 = vsel %vm725, %v718, %v722
        %v727 = vand.u32 2147483647, %v506
        %vm728 = vcmp.eq.f32.partialorder %v727, 8.507059e+37
        %v729 = vand.u32 %v506, 2147483648
        %v730 = vor.u32 1.1754944e-38, %v729
        %v731 = vsel %vm728, %v730, %v726
        %v732 = vmul.f32 1.0, %v731
        %v733 = vrcp.pop %v507
        %v734 = vmul.f32 %v507, %v733
        %v735 = vsub.f32 1.0, %v734
        %v736 = vmul.f32 %v733, %v735
        %v737 = vadd.f32 %v733, %v736
        %vm738 = vweird.f32 %v507
        %vm739 = vweird.f32 %v733
        %vm740 = vmor %vm738, %vm739
        %v741 = vsel %vm740, %v733, %v737
        %v742 = vand.u32 2147483647, %v507
        %vm743 = vcmp.eq.f32.partialorder %v742, 8.507059e+37
        %v744 = vand.u32 %v507, 2147483648
        %v745 = vor.u32 1.1754944e-38, %v744
        %v746 = vsel %vm743, %v745, %v741
        %v747 = vmul.f32 1.0, %v746
        %748 = vst [vmem:[%s187] sm:$0xff] %v522
        %749 = vst [vmem:[%s187 + $0x8] sm:$0xff] %v537
        %750 = vst [vmem:[%s187 + $0x10] sm:$0xff] %v552
        %751 = vst [vmem:[%s187 + $0x18] sm:$0xff] %v567
        %752 = vst [vmem:[%s187 + $0x20] sm:$0xff] %v582
        %753 = vst [vmem:[%s187 + $0x28] sm:$0xff] %v597
        %754 = vst [vmem:[%s187 + $0x30] sm:$0xff] %v612
        %755 = vst [vmem:[%s187 + $0x38] sm:$0xff] %v627
        %756 = vst [vmem:[%s187 + $0x40] sm:$0xff] %v642
        %757 = vst [vmem:[%s187 + $0x48] sm:$0xff] %v657
        %758 = vst [vmem:[%s187 + $0x50] sm:$0xff] %v672
        %759 = vst [vmem:[%s187 + $0x58] sm:$0xff] %v687
        %760 = vst [vmem:[%s187 + $0x60] sm:$0xff] %v702
        %761 = vst [vmem:[%s187 + $0x68] sm:$0xff] %v717
        %762 = vst [vmem:[%s187 + $0x70] sm:$0xff] %v732
        %763 = vst [vmem:[%s187 + $0x78] sm:$0xff] %v747
        %s764 = sand.u32 %s109, 1
        %s765 = scalar_lea.sflag [#allocation3], %s764
        %s766 = sand.u32 %s109, 1
        %s767 = smul.addr %s766, 128
        %s768 = scalar_lea.vmem [#allocation2], %s767
        // Predicated region
        $region33: #{localization_forward.8} parent=31 // pred_check
          %p769 = pneg %p119
        $region34: #{localization_forward.8} parent=31 // pred_check_branch
          %771 = sbr.rel (%p769) target = $region36
        $region35: #{localization_forward.8} parent=31 // pred_region
          %773 = vsyncadd %s765, 0
          %s774 = smul.addr %s22, 16
          %s775 = smul.addr %s21, 64
          %s776 = sadd.s32 %s774, %s775
          %s777 = smul.addr %s776, 8
          %s778 = scalar_lea.hbm %s3, %s777
          %s779 = sshll.u32 %s768, 4
          %s780 = int_to_ptr.vmem [resolvable:$true] %s779
          %s781 = sshll.u32 %s778, 4
          %s782 = int_to_ptr.hbm [resolvable:$true] %s781
          %787 = dma.vmem_to_hbm [thread:$0]  %s780, 2048, %s782, %s765, 128, 128, 8
        $region36: #{localization_forward.8} parent=31 // pred_fallthru
          _
      $region32: #{localization_forward.8} parent=5 // pred_fallthru
        _
      %p788 = scmp.le.s32.totalorder 2, %s12
      // Predicated region
      $region37: #{localization_forward.8} parent=5 // pred_check
        %p789 = pneg %p788
      $region38: #{localization_forward.8} parent=5 // pred_check_branch
        %791 = sbr.rel (%p789) target = $region40
      $region39: #{localization_forward.8} parent=5 // pred_region
        %s792 = ssub.s32 %s12, 2
        // Predicated region
        $region41: #{localization_forward.8} parent=39 // pred_check
          %p793 = pneg %p125
        $region42: #{localization_forward.8} parent=39 // pred_check_branch
          %795 = sbr.rel (%p793) target = $region44
        $region43: #{localization_forward.8} parent=39 // pred_region
          %s796 = sand.u32 %s110, 1
          %s797 = scalar_lea.sflag [#allocation3], %s796
          %s798 = sand.u32 %s110, 1
          %s799 = smul.addr %s798, 128
          %s800 = scalar_lea.vmem [#allocation2], %s799
          %802 = dma.done %s797, 2048
        $region44: #{localization_forward.8} parent=39 // pred_fallthru
          _
      $region40: #{localization_forward.8} parent=5 // pred_fallthru
        _
    $region6: #{localization_forward.8} parent=1 // loop_footer
      %s16 = sadd.s32 1, %s12
    $region7: #{localization_forward.8} parent=1 // loop_footer_branch
      %11 = sbr.rel target = $region3
    $region8: #{localization_forward.8} parent=1 // loop_exit
      _
    %803 = vsyncpa [#allocation3], 1
    %s804 = scalar_lea.sflag [#allocation3], 1
    %805 = vsyncpa %s804, 1

// kernel: localization_forward.9
$region0: #{localization_forward.9}
  #allocation0 [shape = 'u32[]', space=smem, size = 0x4, offset = 0x4, fixed_abs, tag = 'smem constant byte address 0x4 - core index']
  #allocation1 [shape = 'u32[72,128]{1,0:T(1,128)}', space=vmem, size = 0x9000, scoped, tag = 'internal scratch']
  %s0 = inlined_call_operand.vmem [shape: f32[4,2,16,16], index: 0, kind: input, shape index: {}]
  %s1 = inlined_call_operand.vmem [shape: f32[128,16], index: 1, kind: input, shape index: {}]
  %s2 = inlined_call_operand.vmem [shape: f32[16,128], index: 2, kind: input, shape index: {}]
  %s3 = inlined_call_operand.hbm [shape: f32[4,2,128,128], index: 3, kind: output, shape index: {}]
  %s4 = sld [smem:[#allocation0]]
  $region45: #{localization_forward.9} parent=0
    _
  %s6 = ssub.s32 1, %s4
  %s7 = scalar_select 0, %s6, %s4
  $region1: #{localization_forward.9} parent=0
    #allocation2 [shape = 'u8[131072]{0}', space=vmem, size = 0x20000, scoped, tag = 'output window, operand 0']
    #allocation3 [shape = 's32[2]{0}', space=sflag, size = 0x8, scoped, tag = 'scoped memory for localization_forward.9']
    %8 = vsyncpa [#allocation3], 0
    %s9 = scalar_lea.sflag [#allocation3], 1
    %10 = vsyncpa %s9, 0
    loop: start=0, step=1, limit=10
    $region2: #{localization_forward.9} parent=1 // loop_pre_header
      _
    $region3: #{localization_forward.9} parent=1 // loop_header
      %s12 = sphi 0, %s16
      %p13 = scmp.ge.s32.totalorder %s12, 10
      %s19 = sphi 0, %s31
      %s20 = sphi 0, %s27
      %s21 = sphi 0, %s19
      %s22 = sphi 0, %s20
      %s23 = sphi 0, %s21
      %s24 = sphi 0, %s22
      %s36 = sphi 0, %s38
      %s39 = sphi 0, %s36
      %s40 = sphi 0, %s39
      %s56 = sphi 0, %s40
      %s60 = sphi 0, %s60
      %s62 = sphi 0, %s60
      %s63 = sphi 0, %s62
      %s77 = sphi 0, %s63
      %s81 = sphi 0, %s81
      %s83 = sphi 0, %s81
      %s84 = sphi 0, %s83
      %s98 = sphi 0, %s84
      %s106 = sphi 0, %s108
      %s109 = sphi 0, %s106
      %s110 = sphi 0, %s109
      %s126 = sphi 0, %s110
    $region4: #{localization_forward.9} parent=1 // loop_header_branch
      %15 = sbr.rel (%p13) target = $region8
    $region5: #{localization_forward.9} parent=1 // loop_body
      %s17 = ssub.s32 %s12, 1
      %s18 = ssub.s32 %s12, 2
      %s25 = sadd.s32 1, %s20
      %p26 = scmp.ge.s32.totalorder %s25, 2
      %s27 = scalar_select %p26, 0, %s25
      %s28 = sadd.s32 1, %s19
      %s29 = scalar_select %p26, %s28, %s19
      %p30 = scmp.ge.s32.totalorder %s29, 4
      %s31 = scalar_select %p30, 0, %s29
      %s32 = ssub.s32 %s19, %s31
      %s33 = ssub.s32 %s20, %s27
      %s34 = sor.u32 %s32, %s33
      %p35 = scmp.eq.s32.totalorder %s34, 0
      %s37 = sadd.s32 %s36, 1
      %s38 = scalar_select %p35, %s36, %s37
      %p41 = pneg %p35
      %p42 = scmp.eq.s32.totalorder %s12, 7
      %p43 = por %p41, %p42
      %p44 = scmp.ne.s32.totalorder %s36, %s39
      %p45 = scmp.eq.s32.totalorder %s12, 0
      %p46 = por %p44, %p45
      %p47 = scmp.ne.s32.totalorder %s36, %s39
      %p48 = scmp.eq.s32.totalorder %s17, 7
      %p49 = por %p47, %p48
      %p50 = scmp.ne.s32.totalorder %s39, %s40
      %p51 = scmp.eq.s32.totalorder %s17, 0
      %p52 = por %p50, %p51
      %p53 = scmp.ne.s32.totalorder %s39, %s40
      %p54 = scmp.eq.s32.totalorder %s18, 7
      %p55 = por %p53, %p54
      %p57 = scmp.ne.s32.totalorder %s40, %s56
      %p58 = scmp.eq.s32.totalorder %s18, 0
      %p59 = por %p57, %p58
      %s61 = sadd.s32 %s60, 1
      %p64 = scmp.eq.s32.totalorder %s12, 7
      %p65 = scmp.ne.s32.totalorder %s60, %s62
      %p66 = scmp.eq.s32.totalorder %s12, 0
      %p67 = por %p65, %p66
      %p68 = scmp.ne.s32.totalorder %s60, %s62
      %p69 = scmp.eq.s32.totalorder %s17, 7
      %p70 = por %p68, %p69
      %p71 = scmp.ne.s32.totalorder %s62, %s63
      %p72 = scmp.eq.s32.totalorder %s17, 0
      %p73 = por %p71, %p72
      %p74 = scmp.ne.s32.totalorder %s62, %s63
      %p75 = scmp.eq.s32.totalorder %s18, 7
      %p76 = por %p74, %p75
      %p78 = scmp.ne.s32.totalorder %s63, %s77
      %p79 = scmp.eq.s32.totalorder %s18, 0
      %p80 = por %p78, %p79
      %s82 = sadd.s32 %s81, 1
      %p85 = scmp.eq.s32.totalorder %s12, 7
      %p86 = scmp.ne.s32.totalorder %s81, %s83
      %p87 = scmp.eq.s32.totalorder %s12, 0
      %p88 = por %p86, %p87
      %p89 = scmp.ne.s32.totalorder %s81, %s83
      %p90 = scmp.eq.s32.totalorder %s17, 7
      %p91 = por %p89, %p90
      %p92 = scmp.ne.s32.totalorder %s83, %s84
      %p93 = scmp.eq.s32.totalorder %s17, 0
      %p94 = por %p92, %p93
      %p95 = scmp.ne.s32.totalorder %s83, %s84
      %p96 = scmp.eq.s32.totalorder %s18, 7
      %p97 = por %p95, %p96
      %p99 = scmp.ne.s32.totalorder %s84, %s98
      %p100 = scmp.eq.s32.totalorder %s18, 0
      %p101 = por %p99, %p100
      %s102 = ssub.s32 %s19, %s31
      %s103 = ssub.s32 %s20, %s27
      %s104 = sor.u32 %s102, %s103
      %p105 = scmp.eq.s32.totalorder %s104, 0
      %s107 = sadd.s32 %s106, 1
      %s108 = scalar_select %p105, %s106, %s107
      %p111 = pneg %p105
      %p112 = scmp.eq.s32.totalorder %s12, 7
      %p113 = por %p111, %p112
      %p114 = scmp.ne.s32.totalorder %s106, %s109
      %p115 = scmp.eq.s32.totalorder %s12, 0
      %p116 = por %p114, %p115
      %p117 = scmp.ne.s32.totalorder %s106, %s109
      %p118 = scmp.eq.s32.totalorder %s17, 7
      %p119 = por %p117, %p118
      %p120 = scmp.ne.s32.totalorder %s109, %s110
      %p121 = scmp.eq.s32.totalorder %s17, 0
      %p122 = por %p120, %p121
      %p123 = scmp.ne.s32.totalorder %s109, %s110
      %p124 = scmp.eq.s32.totalorder %s18, 7
      %p125 = por %p123, %p124
      %p127 = scmp.ne.s32.totalorder %s110, %s126
      %p128 = scmp.eq.s32.totalorder %s18, 0
      %p129 = por %p127, %p128
      %p130 = scmp.le.s32.totalorder 1, %s12
      %p131 = scmp.lt.s32.totalorder %s12, 9
      %p132 = pnand %p130, %p131
      %p133 = pneg %p132
      // Predicated region
      $region9: #{localization_forward.9} parent=5 // pred_check
        _
      $region10: #{localization_forward.9} parent=5 // pred_check_branch
        %135 = sbr.rel (%p132) target = $region12
      $region11: #{localization_forward.9} parent=5 // pred_region
        %s136 = ssub.s32 %s12, 1
        // Predicated region
        $region13: #{localization_forward.9} parent=11 // pred_check
          %p137 = pneg %p73
        $region14: #{localization_forward.9} parent=11 // pred_check_branch
          %139 = sbr.rel (%p137) target = $region16
        $region15: #{localization_forward.9} parent=11 // pred_region
          _
        $region16: #{localization_forward.9} parent=11 // pred_fallthru
          _
        // Predicated region
        $region17: #{localization_forward.9} parent=11 // pred_check
          %p140 = pneg %p94
        $region18: #{localization_forward.9} parent=11 // pred_check_branch
          %142 = sbr.rel (%p140) target = $region20
        $region19: #{localization_forward.9} parent=11 // pred_region
          _
        $region20: #{localization_forward.9} parent=11 // pred_fallthru
          _
      $region12: #{localization_forward.9} parent=5 // pred_fallthru
        _
      %p143 = scmp.lt.s32.totalorder %s12, 8
      // Predicated region
      $region21: #{localization_forward.9} parent=5 // pred_check
        %p144 = pneg %p143
      $region22: #{localization_forward.9} parent=5 // pred_check_branch
        %146 = sbr.rel (%p144) target = $region24
      $region23: #{localization_forward.9} parent=5 // pred_region
        // Predicated region
        $region25: #{localization_forward.9} parent=23 // pred_check
          %p147 = pneg %p46
        $region26: #{localization_forward.9} parent=23 // pred_check_branch
          %149 = sbr.rel (%p147) target = $region28
        $region27: #{localization_forward.9} parent=23 // pred_region
          %p150 = scmp.lt.s32.totalorder %s19, 3
          %s151 = scalar_select %p150, %s19, 3
          %p152 = scmp.lt.s32.totalorder %s20, 1
          %s153 = scalar_select %p152, %s20, 1
          %s154 = smul.addr %s153, 2
          %s155 = smul.addr %s151, 4
          %s156 = sadd.s32 %s154, %s155
          %s157 = smul.addr %s156, 8
          %s158 = scalar_lea.vmem %s0, %s157
        $region28: #{localization_forward.9} parent=23 // pred_fallthru
          _
      $region24: #{localization_forward.9} parent=5 // pred_fallthru
        _
      %p159 = scmp.le.s32.totalorder 1, %s12
      %p160 = scmp.lt.s32.totalorder %s12, 9
      %p161 = pnand %p159, %p160
      %p162 = pneg %p161
      // Predicated region
      $region29: #{localization_forward.9} parent=5 // pred_check
        _
      $region30: #{localization_forward.9} parent=5 // pred_check_branch
        %164 = sbr.rel (%p161) target = $region32
      $region31: #{localization_forward.9} parent=5 // pred_region
        %s165 = ssub.s32 %s12, 1
        %p166 = scmp.lt.s32.totalorder %s21, 3
        %s167 = scalar_select %p166, %s21, 3
        %p168 = scmp.lt.s32.totalorder %s22, 1
        %s169 = scalar_select %p168, %s22, 1
        %s170 = smul.addr %s169, 2
        %s171 = smul.addr %s167, 4
        %s172 = sadd.s32 %s170, %s171
        %s173 = smul.addr %s172, 8
        %s174 = scalar_lea.vmem %s0, %s173
        %p175 = pneg %p52
        %p176 = pneg %p49
        %p177 = pneg %p73
        %p178 = pneg %p70
        %p179 = pneg %p94
        %p180 = pneg %p91
        %p181 = pneg %p122
        %p182 = pneg %p119
        %s183 = sand.u32 %s109, 1
        %s184 = scalar_lea.sflag [#allocation3], %s183
        %s185 = sand.u32 %s109, 1
        %s186 = smul.addr %s185, 128
        %s187 = scalar_lea.vmem [#allocation2], %s186
        %p188 = scmp.lt.s32.totalorder %s21, 3
        %s189 = scalar_select %p188, %s21, 3
        %p190 = scmp.lt.s32.totalorder %s22, 1
        %s191 = scalar_select %p190, %s22, 1
        %s192 = smul.addr %s191, 2
        %s193 = smul.addr %s189, 4
        %s194 = sadd.s32 %s192, %s193
        %s195 = smul.addr %s194, 8
        %s196 = scalar_lea.vmem %s0, %s195
        %v197 = vld [vmem:[%s196] sm:$0xff]
        %v198 = vld [vmem:[%s196 + $0x8] sm:$0xff]
        %v199 = vld [vmem:[%s1] sm:$0xff]
        %v200 = vld [vmem:[%s1 + $0x8] sm:$0xff]
        %v201 = vld [vmem:[%s1 + $0x10] sm:$0xff]
        %v202 = vld [vmem:[%s1 + $0x18] sm:$0xff]
        %v203 = vld [vmem:[%s1 + $0x20] sm:$0xff]
        %v204 = vld [vmem:[%s1 + $0x28] sm:$0xff]
        %v205 = vld [vmem:[%s1 + $0x30] sm:$0xff]
        %v206 = vld [vmem:[%s1 + $0x38] sm:$0xff]
        %v207 = vld [vmem:[%s1 + $0x40] sm:$0xff]
        %v208 = vld [vmem:[%s1 + $0x48] sm:$0xff]
        %v209 = vld [vmem:[%s1 + $0x50] sm:$0xff]
        %v210 = vld [vmem:[%s1 + $0x58] sm:$0xff]
        %v211 = vld [vmem:[%s1 + $0x60] sm:$0xff]
        %v212 = vld [vmem:[%s1 + $0x68] sm:$0xff]
        %v213 = vld [vmem:[%s1 + $0x70] sm:$0xff]
        %v214 = vld [vmem:[%s1 + $0x78] sm:$0xff]
        %vm215 = vcmask 130048
        %v217 = vsel %vm215, %v199, 0
        %v220 = vsel %vm215, %v200, 0
        %v223 = vsel %vm215, %v201, 0
        %v226 = vsel %vm215, %v202, 0
        %v229 = vsel %vm215, %v203, 0
        %v232 = vsel %vm215, %v204, 0
        %v235 = vsel %vm215, %v205, 0
        %v238 = vsel %vm215, %v206, 0
        %v241 = vsel %vm215, %v207, 0
        %v244 = vsel %vm215, %v208, 0
        %v247 = vsel %vm215, %v209, 0
        %v250 = vsel %vm215, %v210, 0
        %v253 = vsel %vm215, %v211, 0
        %v256 = vsel %vm215, %v212, 0
        %v259 = vsel %vm215, %v213, 0
        %v262 = vsel %vm215, %v214, 0
        %264 = vmatpush.msra.mxu0 0.0
        %265 = vmatpush.msra.mxu0 0.0
        %266 = vmatpush.msra.mxu0 0.0
        %267 = vmatpush.msra.mxu0 0.0
        %268 = vmatpush.msra.mxu0 0.0
        %269 = vmatpush.msra.mxu0 0.0
        %270 = vmatpush.msra.mxu0 0.0
        %271 = vmatpush.msra.mxu0 0.0
        %272 = vmatpush.msra.mxu0 0.0
        %273 = vmatpush.msra.mxu0 0.0
        %274 = vmatpush.msra.mxu0 0.0
        %275 = vmatpush.msra.mxu0 0.0
        %276 = vmatpush.msra.mxu0 0.0
        %277 = vmatpush.msra.mxu0 0.0
        %278 = vmatpush.msra.mxu0 %v198
        %279 = vmatpush.msra.mxu0 %v197
        %280 = vmatmul.f32.gmra.mxu0 %v217
        %v281 = vpop.f32.mrf.mxu0
        %v282 = vadd.f32 0.0, %v281
        %283 = vmatmul.f32.gmra.mxu0 %v220
        %v284 = vpop.f32.mrf.mxu0
        %v285 = vadd.f32 0.0, %v284
        %286 = vmatmul.f32.gmra.mxu0 %v223
        %v287 = vpop.f32.mrf.mxu0
        %v288 = vadd.f32 0.0, %v287
        %289 = vmatmul.f32.gmra.mxu0 %v226
        %v290 = vpop.f32.mrf.mxu0
        %v291 = vadd.f32 0.0, %v290
        %292 = vmatmul.f32.gmra.mxu0 %v229
        %v293 = vpop.f32.mrf.mxu0
        %v294 = vadd.f32 0.0, %v293
        %295 = vmatmul.f32.gmra.mxu0 %v232
        %v296 = vpop.f32.mrf.mxu0
        %v297 = vadd.f32 0.0, %v296
        %298 = vmatmul.f32.gmra.mxu0 %v235
        %v299 = vpop.f32.mrf.mxu0
        %v300 = vadd.f32 0.0, %v299
        %301 = vmatmul.f32.gmra.mxu0 %v238
        %v302 = vpop.f32.mrf.mxu0
        %v303 = vadd.f32 0.0, %v302
        %304 = vmatmul.f32.gmra.mxu0 %v241
        %v305 = vpop.f32.mrf.mxu0
        %v306 = vadd.f32 0.0, %v305
        %307 = vmatmul.f32.gmra.mxu0 %v244
        %v308 = vpop.f32.mrf.mxu0
        %v309 = vadd.f32 0.0, %v308
        %310 = vmatmul.f32.gmra.mxu0 %v247
        %v311 = vpop.f32.mrf.mxu0
        %v312 = vadd.f32 0.0, %v311
        %313 = vmatmul.f32.gmra.mxu0 %v250
        %v314 = vpop.f32.mrf.mxu0
        %v315 = vadd.f32 0.0, %v314
        %316 = vmatmul.f32.gmra.mxu0 %v253
        %v317 = vpop.f32.mrf.mxu0
        %v318 = vadd.f32 0.0, %v317
        %319 = vmatmul.f32.gmra.mxu0 %v256
        %v320 = vpop.f32.mrf.mxu0
        %v321 = vadd.f32 0.0, %v320
        %322 = vmatmul.f32.gmra.mxu0 %v259
        %v323 = vpop.f32.mrf.mxu0
        %v324 = vadd.f32 0.0, %v323
        %325 = vmatmul.f32.gmra.mxu0 %v262
        %v326 = vpop.f32.mrf.mxu0
        %v327 = vadd.f32 0.0, %v326
        %328 = vdwg.mxu0
        %v329 = vld [vmem:[%s2] sm:$0xff]
        %v330 = vld [vmem:[%s2 + $0x8] sm:$0xff]
        %v332 = vsel %vm215, %v282, 0
        %v335 = vsel %vm215, %v285, 0
        %v338 = vsel %vm215, %v288, 0
        %v341 = vsel %vm215, %v291, 0
        %v344 = vsel %vm215, %v294, 0
        %v347 = vsel %vm215, %v297, 0
        %v350 = vsel %vm215, %v300, 0
        %v353 = vsel %vm215, %v303, 0
        %v356 = vsel %vm215, %v306, 0
        %v359 = vsel %vm215, %v309, 0
        %v362 = vsel %vm215, %v312, 0
        %v365 = vsel %vm215, %v315, 0
        %v368 = vsel %vm215, %v318, 0
        %v371 = vsel %vm215, %v321, 0
        %v374 = vsel %vm215, %v324, 0
        %v377 = vsel %vm215, %v327, 0
        %379 = vmatpush.msra.mxu0 0.0
        %380 = vmatpush.msra.mxu0 0.0
        %381 = vmatpush.msra.mxu0 0.0
        %382 = vmatpush.msra.mxu0 0.0
        %383 = vmatpush.msra.mxu0 0.0
        %384 = vmatpush.msra.mxu0 0.0
        %385 = vmatpush.msra.mxu0 0.0
        %386 = vmatpush.msra.mxu0 0.0
        %387 = vmatpush.msra.mxu0 0.0
        %388 = vmatpush.msra.mxu0 0.0
        %389 = vmatpush.msra.mxu0 0.0
        %390 = vmatpush.msra.mxu0 0.0
        %391 = vmatpush.msra.mxu0 0.0
        %392 = vmatpush.msra.mxu0 0.0
        %393 = vmatpush.msra.mxu0 %v330
        %394 = vmatpush.msra.mxu0 %v329
        %395 = vmatmul.f32.gmra.mxu0 %v332
        %v396 = vpop.f32.mrf.mxu0
        %v397 = vadd.f32 0.0, %v396
        %398 = vmatmul.f32.gmra.mxu0 %v335
        %v399 = vpop.f32.mrf.mxu0
        %v400 = vadd.f32 0.0, %v399
        %401 = vmatmul.f32.gmra.mxu0 %v338
        %v402 = vpop.f32.mrf.mxu0
        %v403 = vadd.f32 0.0, %v402
        %404 = vmatmul.f32.gmra.mxu0 %v341
        %v405 = vpop.f32.mrf.mxu0
        %v406 = vadd.f32 0.0, %v405
        %407 = vmatmul.f32.gmra.mxu0 %v344
        %v408 = vpop.f32.mrf.mxu0
        %v409 = vadd.f32 0.0, %v408
        %410 = vmatmul.f32.gmra.mxu0 %v347
        %v411 = vpop.f32.mrf.mxu0
        %v412 = vadd.f32 0.0, %v411
        %413 = vmatmul.f32.gmra.mxu0 %v350
        %v414 = vpop.f32.mrf.mxu0
        %v415 = vadd.f32 0.0, %v414
        %416 = vmatmul.f32.gmra.mxu0 %v353
        %v417 = vpop.f32.mrf.mxu0
        %v418 = vadd.f32 0.0, %v417
        %419 = vmatmul.f32.gmra.mxu0 %v356
        %v420 = vpop.f32.mrf.mxu0
        %v421 = vadd.f32 0.0, %v420
        %422 = vmatmul.f32.gmra.mxu0 %v359
        %v423 = vpop.f32.mrf.mxu0
        %v424 = vadd.f32 0.0, %v423
        %425 = vmatmul.f32.gmra.mxu0 %v362
        %v426 = vpop.f32.mrf.mxu0
        %v427 = vadd.f32 0.0, %v426
        %428 = vmatmul.f32.gmra.mxu0 %v365
        %v429 = vpop.f32.mrf.mxu0
        %v430 = vadd.f32 0.0, %v429
        %431 = vmatmul.f32.gmra.mxu0 %v368
        %v432 = vpop.f32.mrf.mxu0
        %v433 = vadd.f32 0.0, %v432
        %434 = vmatmul.f32.gmra.mxu0 %v371
        %v435 = vpop.f32.mrf.mxu0
        %v436 = vadd.f32 0.0, %v435
        %437 = vmatmul.f32.gmra.mxu0 %v374
        %v438 = vpop.f32.mrf.mxu0
        %v439 = vadd.f32 0.0, %v438
        %440 = vmatmul.f32.gmra.mxu0 %v377
        %v441 = vpop.f32.mrf.mxu0
        %v442 = vadd.f32 0.0, %v441
        %443 = vdwg.mxu0
        %444 = vst [vmem:[%s187] sm:$0xff] %v397
        %445 = vst [vmem:[%s187 + $0x8] sm:$0xff] %v400
        %446 = vst [vmem:[%s187 + $0x10] sm:$0xff] %v403
        %447 = vst [vmem:[%s187 + $0x18] sm:$0xff] %v406
        %448 = vst [vmem:[%s187 + $0x20] sm:$0xff] %v409
        %449 = vst [vmem:[%s187 + $0x28] sm:$0xff] %v412
        %450 = vst [vmem:[%s187 + $0x30] sm:$0xff] %v415
        %451 = vst [vmem:[%s187 + $0x38] sm:$0xff] %v418
        %452 = vst [vmem:[%s187 + $0x40] sm:$0xff] %v421
        %453 = vst [vmem:[%s187 + $0x48] sm:$0xff] %v424
        %454 = vst [vmem:[%s187 + $0x50] sm:$0xff] %v427
        %455 = vst [vmem:[%s187 + $0x58] sm:$0xff] %v430
        %456 = vst [vmem:[%s187 + $0x60] sm:$0xff] %v433
        %457 = vst [vmem:[%s187 + $0x68] sm:$0xff] %v436
        %458 = vst [vmem:[%s187 + $0x70] sm:$0xff] %v439
        %459 = vst [vmem:[%s187 + $0x78] sm:$0xff] %v442
        %s460 = sand.u32 %s109, 1
        %s461 = scalar_lea.sflag [#allocation3], %s460
        %s462 = sand.u32 %s109, 1
        %s463 = smul.addr %s462, 128
        %s464 = scalar_lea.vmem [#allocation2], %s463
        // Predicated region
        $region33: #{localization_forward.9} parent=31 // pred_check
          %p465 = pneg %p119
        $region34: #{localization_forward.9} parent=31 // pred_check_branch
          %467 = sbr.rel (%p465) target = $region36
        $region35: #{localization_forward.9} parent=31 // pred_region
          %469 = vsyncadd %s461, 0
          %s470 = smul.addr %s22, 16
          %s471 = smul.addr %s21, 32
          %s472 = sadd.s32 %s470, %s471
          %s473 = smul.addr %s472, 8
          %s474 = scalar_lea.hbm %s3, %s473
          %s475 = sshll.u32 %s464, 4
          %s476 = int_to_ptr.vmem [resolvable:$true] %s475
          %s477 = sshll.u32 %s474, 4
          %s478 = int_to_ptr.hbm [resolvable:$true] %s477
          %483 = dma.vmem_to_hbm [thread:$0]  %s476, 2048, %s478, %s461, 128, 128, 8
        $region36: #{localization_forward.9} parent=31 // pred_fallthru
          _
      $region32: #{localization_forward.9} parent=5 // pred_fallthru
        _
      %p484 = scmp.le.s32.totalorder 2, %s12
      // Predicated region
      $region37: #{localization_forward.9} parent=5 // pred_check
        %p485 = pneg %p484
      $region38: #{localization_forward.9} parent=5 // pred_check_branch
        %487 = sbr.rel (%p485) target = $region40
      $region39: #{localization_forward.9} parent=5 // pred_region
        %s488 = ssub.s32 %s12, 2
        // Predicated region
        $region41: #{localization_forward.9} parent=39 // pred_check
          %p489 = pneg %p125
        $region42: #{localization_forward.9} parent=39 // pred_check_branch
          %491 = sbr.rel (%p489) target = $region44
        $region43: #{localization_forward.9} parent=39 // pred_region
          %s492 = sand.u32 %s110, 1
          %s493 = scalar_lea.sflag [#allocation3], %s492
          %s494 = sand.u32 %s110, 1
          %s495 = smul.addr %s494, 128
          %s496 = scalar_lea.vmem [#allocation2], %s495
          %498 = dma.done %s493, 2048
        $region44: #{localization_forward.9} parent=39 // pred_fallthru
          _
      $region40: #{localization_forward.9} parent=5 // pred_fallthru
        _
    $region6: #{localization_forward.9} parent=1 // loop_footer
      %s16 = sadd.s32 1, %s12
    $region7: #{localization_forward.9} parent=1 // loop_footer_branch
      %11 = sbr.rel target = $region3
    $region8: #{localization_forward.9} parent=1 // loop_exit
      _
    %499 = vsyncpa [#allocation3], 1
    %s500 = scalar_lea.sflag [#allocation3], 1
    %501 = vsyncpa %s500, 1

</llo_original>
